<compile_context>
chip_gen: v7x
topology: tpu7x:2x2x1
jax: 0.10.0
libtpu: 0.0.40
codegen_flags: <defaults>
</compile_context>

<pallas_src>
import functools
import math

import jax
import jax.numpy as jnp
from jax.experimental import pallas as pl
from jax.experimental.pallas import tpu as pltpu


# ---------------------------------------------------------------------------
# In-kernel helpers
# ---------------------------------------------------------------------------

def _layer_norm(v, g, b):
    # v: (S, D) f32; g/b: (1, D). torch.nn.LayerNorm defaults (biased var, eps=1e-5).
    mean = jnp.mean(v, axis=-1, keepdims=True)
    var = jnp.mean((v - mean) ** 2, axis=-1, keepdims=True)
    return (v - mean) * jax.lax.rsqrt(var + 1e-5) * g + b


def _mha_proj(q, k, v, wo, valid, num_heads):
    """Multi-head attention with the output projection folded into the head loop.

    q: (S_q, D) f32, k/v: (S_k, D) f32, wo: (D, D) bf16, valid: (S_q, S_k) bool.
    Returns the projected attention output (S_q, D) f32 — no concatenate.
    """
    s_q, d_model = q.shape
    dk = d_model // num_heads
    scale = 1.0 / math.sqrt(dk)
    dn = (((1,), (1,)), ((), ()))  # contract feature dims of q and k (trans_b feed)
    qb = q.astype(jnp.bfloat16)
    kb = k.astype(jnp.bfloat16)
    vb = v.astype(jnp.bfloat16)
    acc = jnp.zeros((s_q, d_model), jnp.float32)
    for h in range(num_heads):
        sl = slice(h * dk, (h + 1) * dk)
        s = jax.lax.dot_general(qb[:, sl], kb[:, sl], dn,
                                preferred_element_type=jnp.float32) * scale
        s = jnp.where(valid, s, jnp.float32(-1e9))       # masked_fill(mask == 0, -1e9)
        s = s - jnp.max(s, axis=-1, keepdims=True)
        p = jnp.exp(s)
        p = p * pl.reciprocal(jnp.sum(p, axis=-1, keepdims=True), approx=True)
        head = jnp.dot(p.astype(jnp.bfloat16), vb[:, sl],
                       preferred_element_type=jnp.float32)          # (S_q, dk)
        # Accumulate the output projection per head (MXU accumulate, no concat).
        acc = acc + jnp.dot(head.astype(jnp.bfloat16), wo[sl, :],
                            preferred_element_type=jnp.float32)
    return acc


# ---------------------------------------------------------------------------
# Fully fused decoder stack kernel: grid = (batch, layer); x kept in VMEM scratch
# ---------------------------------------------------------------------------

def _decoder_stack_kernel(
    x_ref, mem_ref, tpad_ref, spad_ref,
    vec_ref, w_in_ref, w2_ref, fln_ref,
    o_ref, x_acc,
    *, num_heads, d_model, d_ff, n_layers):

    D = d_model
    l = pl.program_id(1)

    # Residual stream lives in VMEM scratch across the layer ("arbitrary") axis.
    @pl.when(l == 0)
    def _():
        x_acc[...] = x_ref[0].astype(jnp.float32)

    x = x_acc[...]                          # (S_t, D) f32
    mem = mem_ref[0].astype(jnp.bfloat16)   # (S_s, D)
    s_t = x.shape[0]
    s_s = mem.shape[0]

    # Rebuild attention masks in-kernel from compact key-padding vectors.
    tpad = tpad_ref[0] > 0                  # (1, S_t)
    spad = spad_ref[0] > 0                  # (1, S_s)
    rows = jax.lax.broadcasted_iota(jnp.int32, (s_t, s_t), 0)
    cols = jax.lax.broadcasted_iota(jnp.int32, (s_t, s_t), 1)
    valid_self = (cols <= rows) & tpad                    # causal & tgt padding
    valid_cross = jnp.broadcast_to(spad, (s_t, s_s))      # src padding

    # -- static offsets into the packed per-layer vector operand (f32) --------
    voff, cur = {}, 0
    for name, w in (("ln1_g", D), ("ln1_b", D), ("ln2_g", D), ("ln2_b", D),
                    ("ln3_g", D), ("ln3_b", D), ("b_qkv", 3 * D), ("bo1", D),
                    ("bq2", D), ("b_kv", 2 * D), ("bo2", D), ("b1", d_ff),
                    ("b2", D)):
        voff[name] = (cur, cur + w)
        cur += w

    def vec(name):
        a, b = voff[name]
        return vec_ref[:, a:b]              # (1, width) f32, lane-aligned slice

    # -- static offsets into the packed per-layer [in, out] weight slab (bf16) --
    woff, cur = {}, 0
    for name, w in (("w_qkv", 3 * D), ("wo1", D), ("wq2", D), ("w_kv", 2 * D),
                    ("wo2", D), ("w1", d_ff)):
        woff[name] = (cur, cur + w)
        cur += w

    def wmat(name):
        a, b = woff[name]
        return w_in_ref[:, a:b]              # (D, width) bf16, lane-aligned slice

    # ---- sublayer 1: x + SelfAttn(LN1(x), tgt_mask) -------------------------
    xn = _layer_norm(x, vec("ln1_g"), vec("ln1_b")).astype(jnp.bfloat16)
    qkv = jnp.dot(xn, wmat("w_qkv"),
                  preferred_element_type=jnp.float32) + vec("b_qkv")
    x = x + _mha_proj(qkv[:, :D], qkv[:, D:2 * D], qkv[:, 2 * D:],
                      wmat("wo1"), valid_self, num_heads) + vec("bo1")

    # ---- sublayer 2: x + CrossAttn(LN2(x), memory, src_mask) ----------------
    xn = _layer_norm(x, vec("ln2_g"), vec("ln2_b")).astype(jnp.bfloat16)
    q2 = jnp.dot(xn, wmat("wq2"), preferred_element_type=jnp.float32) + vec("bq2")
    kv = jnp.dot(mem, wmat("w_kv"), preferred_element_type=jnp.float32) + vec("b_kv")
    x = x + _mha_proj(q2, kv[:, :D], kv[:, D:],
                      wmat("wo2"), valid_cross, num_heads) + vec("bo2")

    # ---- sublayer 3: x + FFN(LN3(x)) -----------------------------------------
    xn = _layer_norm(x, vec("ln3_g"), vec("ln3_b")).astype(jnp.bfloat16)
    h = jnp.maximum(jnp.dot(xn, wmat("w1"),
                            preferred_element_type=jnp.float32) + vec("b1"), 0.0)
    ffn = jnp.dot(h.astype(jnp.bfloat16), w2_ref[...],
                  preferred_element_type=jnp.float32) + vec("b2")
    x = x + ffn

    x_acc[...] = x                           # carry residual to the next layer step

    # Final LayerNorm + single lane-dense output write at the last layer.
    @pl.when(l == n_layers - 1)
    def _():
        o_ref[0] = _layer_norm(x, fln_ref[0:1, :], fln_ref[1:2, :]).astype(o_ref.dtype)


# ---------------------------------------------------------------------------
# Wrapper: one pallas_call for the entire decoder (all layers + final LN)
# ---------------------------------------------------------------------------

def decoder_forward(x, memory, tgt_pad, src_pad, packed, num_heads):
    layer_vecs, layer_w_in, layer_w2, final_ln = packed
    B, S_t, D = x.shape
    S_s = memory.shape[1]
    L = layer_w_in.shape[0]
    d_ff = layer_w2.shape[1]
    VK = layer_vecs.shape[-1]
    WK = layer_w_in.shape[-1]

    flops_layer = (2 * S_t * D * 3 * D          # fused QKV projection
                   + 4 * S_t * S_t * D          # self-attn scores + p@v
                   + 2 * S_t * D * D            # self-attn out projection
                   + 2 * S_t * D * D            # cross-attn Q projection
                   + 4 * S_s * D * D            # fused K|V projection on memory
                   + 4 * S_t * S_s * D          # cross-attn scores + p@v
                   + 2 * S_t * D * D            # cross-attn out projection
                   + 4 * S_t * D * d_ff)        # FFN
    cost = pl.CostEstimate(
        flops=int(B * L * flops_layer),
        transcendentals=int(B * L * (S_t * S_t + S_t * S_s)),
        bytes_accessed=int(2 * x.size * 4 + memory.size * 4
                           + tgt_pad.size * 4 + src_pad.size * 4
                           + B * (layer_vecs.size * 4 + layer_w_in.size * 2
                                  + layer_w2.size * 2) + final_ln.size * 4))

    kernel = functools.partial(_decoder_stack_kernel, num_heads=num_heads,
                               d_model=D, d_ff=d_ff, n_layers=L)

    return pl.pallas_call(
        kernel,
        grid=(B, L),
        in_specs=[
            pl.BlockSpec((1, S_t, D), lambda b, l: (b, 0, 0)),     # x
            pl.BlockSpec((1, S_s, D), lambda b, l: (b, 0, 0)),     # memory
            pl.BlockSpec((1, 1, S_t), lambda b, l: (b, 0, 0)),     # tgt key-padding
            pl.BlockSpec((1, 1, S_s), lambda b, l: (b, 0, 0)),     # src key-padding
            pl.BlockSpec((None, 1, VK), lambda b, l: (l, 0, 0)),   # packed LN/bias vecs
            pl.BlockSpec((None, D, WK), lambda b, l: (l, 0, 0)),   # packed D-row weights
            pl.BlockSpec((None, d_ff, D), lambda b, l: (l, 0, 0)),  # FFN W2
            pl.BlockSpec((2, D), lambda b, l: (0, 0)),             # final LN g|b
        ],
        out_specs=pl.BlockSpec((1, S_t, D), lambda b, l: (b, 0, 0)),
        out_shape=jax.ShapeDtypeStruct(x.shape, x.dtype),
        scratch_shapes=[pltpu.VMEM((S_t, D), jnp.float32)],        # resident residual
        compiler_params=pltpu.CompilerParams(
            dimension_semantics=("parallel", "arbitrary"),         # B over v7x's 2 TCs
            vmem_limit_bytes=32 * 1024 * 1024),
        cost_estimate=cost,
    )(x, memory, tgt_pad, src_pad, layer_vecs, layer_w_in, layer_w2, final_ln)


# ---------------------------------------------------------------------------
# Deterministic parameter init (synthetic; shapes follow the module __init__)
# ---------------------------------------------------------------------------

def init_params(key, n_layers, d_model, d_ff):
    def w(k, shape, scale=0.02):
        return scale * jax.random.normal(k, shape, dtype=jnp.float32)

    layers = []
    for i in range(n_layers):
        ks = jax.random.split(jax.random.fold_in(key, i), 7)
        layers.append({
            "ln1_g": jnp.ones((1, d_model), jnp.float32),
            "ln1_b": jnp.zeros((1, d_model), jnp.float32),
            "w_qkv": w(ks[0], (d_model, 3 * d_model)),      # fused Q|K|V (self-attn)
            "b_qkv": jnp.zeros((1, 3 * d_model), jnp.float32),
            "wo1": w(ks[1], (d_model, d_model)),
            "bo1": jnp.zeros((1, d_model), jnp.float32),
            "ln2_g": jnp.ones((1, d_model), jnp.float32),
            "ln2_b": jnp.zeros((1, d_model), jnp.float32),
            "wq2": w(ks[2], (d_model, d_model)),
            "bq2": jnp.zeros((1, d_model), jnp.float32),
            "w_kv": w(ks[3], (d_model, 2 * d_model)),       # fused K|V on memory
            "b_kv": jnp.zeros((1, 2 * d_model), jnp.float32),
            "wo2": w(ks[4], (d_model, d_model)),
            "bo2": jnp.zeros((1, d_model), jnp.float32),
            "ln3_g": jnp.ones((1, d_model), jnp.float32),
            "ln3_b": jnp.zeros((1, d_model), jnp.float32),
            "w1": w(ks[5], (d_model, d_ff)),
            "b1": jnp.zeros((1, d_ff), jnp.float32),
            "w2": w(ks[6], (d_ff, d_model)),
            "b2": jnp.zeros((1, d_model), jnp.float32),
        })
    return {
        "layers": layers,
        "ln_g": jnp.ones((1, d_model), jnp.float32),
        "ln_b": jnp.zeros((1, d_model), jnp.float32),
    }


def pack_params(params):
    """Stack per-layer params along a layer axis and pack operands for the kernel."""
    vec_rows, w_in_rows, w2_rows = [], [], []
    for p in params["layers"]:
        vec_rows.append(jnp.concatenate(
            [p["ln1_g"], p["ln1_b"], p["ln2_g"], p["ln2_b"], p["ln3_g"], p["ln3_b"],
             p["b_qkv"], p["bo1"], p["bq2"], p["b_kv"], p["bo2"], p["b1"], p["b2"]],
            axis=-1))                                             # (1, 6D + 9D + d_ff)
        w_in_rows.append(jnp.concatenate(
            [p["w_qkv"], p["wo1"], p["wq2"], p["w_kv"], p["wo2"], p["w1"]], axis=-1))
        w2_rows.append(p["w2"])
    layer_vecs = jnp.stack(vec_rows)                              # (L, 1, VK) f32
    layer_w_in = jnp.stack(w_in_rows).astype(jnp.bfloat16)        # (L, D, 8D + d_ff)
    layer_w2 = jnp.stack(w2_rows).astype(jnp.bfloat16)            # (L, d_ff, D)
    final_ln = jnp.concatenate([params["ln_g"], params["ln_b"]], axis=0)   # (2, D)
    return layer_vecs, layer_w_in, layer_w2, final_ln


# ---------------------------------------------------------------------------
# Pure-JAX reference (same math; weights quantized to bf16 exactly as the kernel
# stores them, activations kept f32) for a correctness check
# ---------------------------------------------------------------------------

def _reference_decoder(x, memory, tgt_pad, src_pad, params, num_heads):
    def qw(w):  # mirror the kernel's bf16 weight storage
        return w.astype(jnp.bfloat16).astype(jnp.float32)

    def ln(v, g, b):
        m = v.mean(-1, keepdims=True)
        var = ((v - m) ** 2).mean(-1, keepdims=True)
        return (v - m) * jax.lax.rsqrt(var + 1e-5) * g + b

    def mha(q, k, v, mask):
        B, Sq, D = q.shape
        Sk = k.shape[1]
        dk = D // num_heads
        qh = q.reshape(B, Sq, num_heads, dk).transpose(0, 2, 1, 3)
        kh = k.reshape(B, Sk, num_heads, dk).transpose(0, 2, 1, 3)
        vh = v.reshape(B, Sk, num_heads, dk).transpose(0, 2, 1, 3)
        s = jnp.einsum("bhqd,bhkd->bhqk", qh, kh) / math.sqrt(dk)
        s = jnp.where(mask[:, None], s, -1e9)
        p = jax.nn.softmax(s, axis=-1)
        o = jnp.einsum("bhqk,bhkd->bhqd", p, vh)
        return o.transpose(0, 2, 1, 3).reshape(B, Sq, D)

    B, S_t, D = x.shape
    S_s = memory.shape[1]
    causal = jnp.tril(jnp.ones((S_t, S_t), dtype=bool))
    self_mask = causal[None] & (tgt_pad[:, 0, :] > 0)[:, None, :]
    cross_mask = jnp.broadcast_to((src_pad[:, 0, :] > 0)[:, None, :], (B, S_t, S_s))

    for p_ in params["layers"]:
        xn = ln(x, p_["ln1_g"], p_["ln1_b"])
        qkv = xn @ qw(p_["w_qkv"]) + p_["b_qkv"]
        x = x + mha(qkv[..., :D], qkv[..., D:2 * D], qkv[..., 2 * D:],
                    self_mask) @ qw(p_["wo1"]) + p_["bo1"]
        xn = ln(x, p_["ln2_g"], p_["ln2_b"])
        q2 = xn @ qw(p_["wq2"]) + p_["bq2"]
        kv = memory @ qw(p_["w_kv"]) + p_["b_kv"]
        x = x + mha(q2, kv[..., :D], kv[..., D:],
                    cross_mask) @ qw(p_["wo2"]) + p_["bo2"]
        xn = ln(x, p_["ln3_g"], p_["ln3_b"])
        h = jax.nn.relu(xn @ qw(p_["w1"]) + p_["b1"])
        x = x + h @ qw(p_["w2"]) + p_["b2"]
    return ln(x, params["ln_g"], params["ln_b"])


# ---------------------------------------------------------------------------

if __name__ == "__main__":
    B, S_T, S_S = 2, 16, 24       # batch, tgt seq, src (memory) seq
    D, H, D_FF = 128, 4, 256      # d_model (lane-friendly), heads, feed-forward width
    N_LAYERS = 2

    key = jax.random.PRNGKey(0)
    k_x, k_m, k_p = jax.random.split(key, 3)

    x = jax.random.normal(k_x, (B, S_T, D), dtype=jnp.float32)
    memory = jax.random.normal(k_m, (B, S_S, D), dtype=jnp.float32)

    # Compact key-padding masks (1 = valid token); full (S,S) masks built in-kernel.
    tgt_len = jnp.array([S_T, 11], dtype=jnp.int32)
    src_len = jnp.array([S_S, 17], dtype=jnp.int32)
    tgt_pad = (jnp.arange(S_T)[None, :] < tgt_len[:, None]).astype(jnp.int32).reshape(B, 1, S_T)
    src_pad = (jnp.arange(S_S)[None, :] < src_len[:, None]).astype(jnp.int32).reshape(B, 1, S_S)

    params = init_params(k_p, N_LAYERS, D, D_FF)
    packed = pack_params(params)

    fwd = jax.jit(decoder_forward, static_argnums=(5,))
    out = jax.block_until_ready(fwd(x, memory, tgt_pad, src_pad, packed, H))

    assert out.shape == (B, S_T, D)
    assert bool(jnp.all(jnp.isfinite(out)))

    ref = _reference_decoder(x, memory, tgt_pad, src_pad, params, H)
    max_err = float(jnp.max(jnp.abs(out - ref)))
    # Kernel uses bf16 matmul inputs (f32 accumulation) + approx softmax reciprocal;
    # reference uses the same bf16-rounded weights with f32 activations.
    assert max_err < 2e-2, f"mismatch vs reference: max abs err {max_err}"

    print("KERNEL_OK")
</pallas_src>

<mosaic_0001>
module attributes {stable_mosaic.version = 11 : i64} {
  func.func @_decoder_stack_kernel(%arg0: i32, %arg1: i32, %arg2: memref<1x16x128xf32, #tpu.memory_space<vmem>>, %arg3: memref<1x24x128xf32, #tpu.memory_space<vmem>>, %arg4: memref<1x1x16xi32, #tpu.memory_space<vmem>>, %arg5: memref<1x1x24xi32, #tpu.memory_space<vmem>>, %arg6: memref<1x1x2176xf32, #tpu.memory_space<vmem>>, %arg7: memref<1x128x1280xbf16, #tpu.memory_space<vmem>>, %arg8: memref<1x256x128xbf16, #tpu.memory_space<vmem>>, %arg9: memref<2x128xf32, #tpu.memory_space<vmem>>, %arg10: memref<1x16x128xf32, #tpu.memory_space<vmem>>, %arg11: memref<16x128xf32, #tpu.memory_space<vmem>>) attributes {dimension_semantics = [#tpu.dimension_semantics<parallel>, #tpu.dimension_semantics<arbitrary>], iteration_bounds = array<i64: 2, 2>, scalar_prefetch = 0 : i64, scratch_operands = 1 : i64, tpu.core_type = #tpu.core_type<tc>, window_params = [{transform_indices = @transform_0, window_bounds = array<i64: 1, 16, 128>}, {transform_indices = @transform_1, window_bounds = array<i64: 1, 24, 128>}, {transform_indices = @transform_2, window_bounds = array<i64: 1, 1, 16>}, {transform_indices = @transform_3, window_bounds = array<i64: 1, 1, 24>}, {transform_indices = @transform_4, window_bounds = array<i64: 1, 1, 2176>}, {transform_indices = @transform_5, window_bounds = array<i64: 1, 128, 1280>}, {transform_indices = @transform_6, window_bounds = array<i64: 1, 256, 128>}, {pipeline_mode = #tpu.pipeline_mode<synchronous>, transform_indices = @transform_7, window_bounds = array<i64: 2, 128>}, {transform_indices = @transform_8, window_bounds = array<i64: 1, 16, 128>}]} {
    %c0_i32 = arith.constant 0 : i32
    %0 = arith.cmpi eq, %arg1, %c0_i32 : i32
    %1 = arith.extui %0 : i1 to i32
    %c0_i32_0 = arith.constant 0 : i32
    %2 = arith.cmpi ne, %1, %c0_i32_0 : i32
    scf.if %2 {
      %c0_140 = arith.constant 0 : index
      %c0_141 = arith.constant 0 : index
      %c0_142 = arith.constant 0 : index
      %365 = vector.load %arg2[%c0_140, %c0_141, %c0_142] : memref<1x16x128xf32, #tpu.memory_space<vmem>>, vector<1x16x128xf32>
      %366 = vector.shape_cast %365 : vector<1x16x128xf32> to vector<16x128xf32>
      %c0_143 = arith.constant 0 : index
      %c0_144 = arith.constant 0 : index
      %367 = vector.load %arg11[%c0_143, %c0_144] : memref<16x128xf32, #tpu.memory_space<vmem>>, vector<16x128xf32>
      tpu.vector_store %arg11[%c0_143, %c0_144], %366 {strides = array<i32>} : memref<16x128xf32, #tpu.memory_space<vmem>>, vector<16x128xf32>,
    } else {
    }
    %c0 = arith.constant 0 : index
    %c0_1 = arith.constant 0 : index
    %3 = vector.load %arg11[%c0, %c0_1] : memref<16x128xf32, #tpu.memory_space<vmem>>, vector<16x128xf32>
    %c0_2 = arith.constant 0 : index
    %c0_3 = arith.constant 0 : index
    %c0_4 = arith.constant 0 : index
    %4 = vector.load %arg3[%c0_2, %c0_3, %c0_4] : memref<1x24x128xf32, #tpu.memory_space<vmem>>, vector<1x24x128xf32>
    %5 = vector.shape_cast %4 : vector<1x24x128xf32> to vector<24x128xf32>
    %6 = arith.truncf %5 : vector<24x128xf32> to vector<24x128xbf16>
    %c0_5 = arith.constant 0 : index
    %c0_6 = arith.constant 0 : index
    %c0_7 = arith.constant 0 : index
    %7 = vector.load %arg4[%c0_5, %c0_6, %c0_7] : memref<1x1x16xi32, #tpu.memory_space<vmem>>, vector<1x1x16xi32>
    %8 = vector.shape_cast %7 : vector<1x1x16xi32> to vector<1x16xi32>
    %c0_i32_8 = arith.constant 0 : i32
    %9 = vector.broadcast %c0_i32_8 : i32 to vector<1x16xi32>
    %10 = arith.cmpi sgt, %8, %9 : vector<1x16xi32>
    %c0_9 = arith.constant 0 : index
    %c0_10 = arith.constant 0 : index
    %c0_11 = arith.constant 0 : index
    %11 = vector.load %arg5[%c0_9, %c0_10, %c0_11] : memref<1x1x24xi32, #tpu.memory_space<vmem>>, vector<1x1x24xi32>
    %12 = vector.shape_cast %11 : vector<1x1x24xi32> to vector<1x24xi32>
    %c0_i32_12 = arith.constant 0 : i32
    %13 = vector.broadcast %c0_i32_12 : i32 to vector<1x24xi32>
    %14 = arith.cmpi sgt, %12, %13 : vector<1x24xi32>
    %15 = tpu.iota {dimensions = array<i32: 0>} : vector<16x16xi32>
    %16 = tpu.iota {dimensions = array<i32: 1>} : vector<16x16xi32>
    %17 = arith.cmpi sle, %16, %15 : vector<16x16xi32>
    %18 = vector.broadcast %10 : vector<1x16xi1> to vector<16x16xi1>
    %19 = arith.andi %17, %18 : vector<16x16xi1>
    %20 = vector.shape_cast %14 : vector<1x24xi1> to vector<1x24xi1>
    %21 = vector.broadcast %20 : vector<1x24xi1> to vector<16x24xi1>
    %c0_13 = arith.constant 0 : index
    %c0_14 = arith.constant 0 : index
    %c0_15 = arith.constant 0 : index
    %22 = vector.load %arg6[%c0_13, %c0_14, %c0_15] : memref<1x1x2176xf32, #tpu.memory_space<vmem>>, vector<1x1x128xf32>
    %23 = vector.shape_cast %22 : vector<1x1x128xf32> to vector<1x128xf32>
    %c0_16 = arith.constant 0 : index
    %c0_17 = arith.constant 0 : index
    %c128 = arith.constant 128 : index
    %24 = vector.load %arg6[%c0_16, %c0_17, %c128] : memref<1x1x2176xf32, #tpu.memory_space<vmem>>, vector<1x1x128xf32>
    %25 = vector.shape_cast %24 : vector<1x1x128xf32> to vector<1x128xf32>
    %cst = arith.constant dense<0.000000e+00> : vector<16xf32>
    %26 = vector.multi_reduction <add>, %3, %cst [1] : vector<16x128xf32> to vector<16xf32>
    %27 = vector.shape_cast %26 : vector<16xf32> to vector<16x1xf32>
    %cst_18 = arith.constant 1.280000e+02 : f32
    %28 = vector.broadcast %cst_18 : f32 to vector<16x1xf32>
    %29 = arith.divf %27, %28 : vector<16x1xf32>
    %30 = vector.broadcast %29 : vector<16x1xf32> to vector<16x128xf32>
    %31 = arith.subf %3, %30 : vector<16x128xf32>
    %32 = arith.mulf %31, %31 : vector<16x128xf32>
    %cst_19 = arith.constant dense<0.000000e+00> : vector<16xf32>
    %33 = vector.multi_reduction <add>, %32, %cst_19 [1] : vector<16x128xf32> to vector<16xf32>
    %34 = vector.shape_cast %33 : vector<16xf32> to vector<16x1xf32>
    %cst_20 = arith.constant 1.280000e+02 : f32
    %35 = vector.broadcast %cst_20 : f32 to vector<16x1xf32>
    %36 = arith.divf %34, %35 : vector<16x1xf32>
    %37 = vector.broadcast %29 : vector<16x1xf32> to vector<16x128xf32>
    %38 = arith.subf %3, %37 : vector<16x128xf32>
    %cst_21 = arith.constant 9.99999974E-6 : f32
    %39 = vector.broadcast %cst_21 : f32 to vector<16x1xf32>
    %40 = arith.addf %36, %39 : vector<16x1xf32>
    %41 = math.rsqrt %40 : vector<16x1xf32>
    %42 = vector.broadcast %41 : vector<16x1xf32> to vector<16x128xf32>
    %43 = arith.mulf %38, %42 : vector<16x128xf32>
    %44 = vector.broadcast %23 : vector<1x128xf32> to vector<16x128xf32>
    %45 = arith.mulf %43, %44 : vector<16x128xf32>
    %46 = vector.broadcast %25 : vector<1x128xf32> to vector<16x128xf32>
    %47 = arith.addf %45, %46 : vector<16x128xf32>
    %48 = arith.truncf %47 : vector<16x128xf32> to vector<16x128xbf16>
    %c0_22 = arith.constant 0 : index
    %c0_23 = arith.constant 0 : index
    %c0_24 = arith.constant 0 : index
    %49 = vector.load %arg7[%c0_22, %c0_23, %c0_24] : memref<1x128x1280xbf16, #tpu.memory_space<vmem>>, vector<1x128x384xbf16>
    %50 = vector.shape_cast %49 : vector<1x128x384xbf16> to vector<128x384xbf16>
    %cst_25 = arith.constant dense<0.000000e+00> : vector<16x384xf32>
    %51 = tpu.matmul %48, %50, %cst_25 {dimension_numbers = #tpu.dot_dimension_numbers<[1], [0], [0], [1], [0, 0, 1, 1], [], []>} : vector<16x128xbf16>, vector<128x384xbf16>, vector<16x384xf32> -> vector<16x384xf32>
    %c0_26 = arith.constant 0 : index
    %c0_27 = arith.constant 0 : index
    %c768 = arith.constant 768 : index
    %52 = vector.load %arg6[%c0_26, %c0_27, %c768] : memref<1x1x2176xf32, #tpu.memory_space<vmem>>, vector<1x1x384xf32>
    %53 = vector.shape_cast %52 : vector<1x1x384xf32> to vector<1x384xf32>
    %54 = vector.broadcast %53 : vector<1x384xf32> to vector<16x384xf32>
    %55 = arith.addf %51, %54 : vector<16x384xf32>
    %56 = vector.extract_strided_slice %55 {offsets = [0, 0], sizes = [16, 128], strides = [1, 1]} : vector<16x384xf32> to vector<16x128xf32>
    %57 = vector.extract_strided_slice %55 {offsets = [0, 128], sizes = [16, 128], strides = [1, 1]} : vector<16x384xf32> to vector<16x128xf32>
    %58 = vector.extract_strided_slice %55 {offsets = [0, 256], sizes = [16, 128], strides = [1, 1]} : vector<16x384xf32> to vector<16x128xf32>
    %c0_28 = arith.constant 0 : index
    %c0_29 = arith.constant 0 : index
    %c384 = arith.constant 384 : index
    %59 = vector.load %arg7[%c0_28, %c0_29, %c384] : memref<1x128x1280xbf16, #tpu.memory_space<vmem>>, vector<1x128x128xbf16>
    %60 = vector.shape_cast %59 : vector<1x128x128xbf16> to vector<128x128xbf16>
    %61 = arith.truncf %56 : vector<16x128xf32> to vector<16x128xbf16>
    %62 = arith.truncf %57 : vector<16x128xf32> to vector<16x128xbf16>
    %63 = arith.truncf %58 : vector<16x128xf32> to vector<16x128xbf16>
    %cst_30 = arith.constant 0.000000e+00 : f32
    %64 = vector.broadcast %cst_30 : f32 to vector<16x128xf32>
    %65 = vector.extract_strided_slice %61 {offsets = [0, 0], sizes = [16, 32], strides = [1, 1]} : vector<16x128xbf16> to vector<16x32xbf16>
    %66 = vector.extract_strided_slice %62 {offsets = [0, 0], sizes = [16, 32], strides = [1, 1]} : vector<16x128xbf16> to vector<16x32xbf16>
    %cst_31 = arith.constant dense<0.000000e+00> : vector<16x16xf32>
    %67 = tpu.matmul %65, %66, %cst_31 {dimension_numbers = #tpu.dot_dimension_numbers<[1], [1], [0], [0], [0, 0, 1, 0], [], []>} : vector<16x32xbf16>, vector<16x32xbf16>, vector<16x16xf32> -> vector<16x16xf32>
    %cst_32 = arith.constant 0.176776692 : f32
    %68 = vector.broadcast %cst_32 : f32 to vector<16x16xf32>
    %69 = arith.mulf %67, %68 : vector<16x16xf32>
    %cst_33 = arith.constant -1.000000e+09 : f32
    %70 = vector.broadcast %cst_33 : f32 to vector<16x16xf32>
    %71 = arith.select %19, %69, %70 : vector<16x16xi1>, vector<16x16xf32>
    %cst_34 = arith.constant dense<0xFF800000> : vector<16xf32>
    %72 = vector.multi_reduction <maximumf>, %71, %cst_34 [1] : vector<16x16xf32> to vector<16xf32>
    %73 = vector.shape_cast %72 : vector<16xf32> to vector<16x1xf32>
    %74 = vector.broadcast %73 : vector<16x1xf32> to vector<16x16xf32>
    %75 = arith.subf %71, %74 : vector<16x16xf32>
    %76 = math.exp %75 : vector<16x16xf32>
    %cst_35 = arith.constant dense<0.000000e+00> : vector<16xf32>
    %77 = vector.multi_reduction <add>, %76, %cst_35 [1] : vector<16x16xf32> to vector<16xf32>
    %78 = vector.shape_cast %77 : vector<16xf32> to vector<16x1xf32>
    %79 = tpu.reciprocal %78 {approx = true} : vector<16x1xf32> -> vector<16x1xf32>
    %80 = vector.broadcast %79 : vector<16x1xf32> to vector<16x16xf32>
    %81 = arith.mulf %76, %80 : vector<16x16xf32>
    %82 = arith.truncf %81 : vector<16x16xf32> to vector<16x16xbf16>
    %83 = vector.extract_strided_slice %63 {offsets = [0, 0], sizes = [16, 32], strides = [1, 1]} : vector<16x128xbf16> to vector<16x32xbf16>
    %cst_36 = arith.constant dense<0.000000e+00> : vector<16x32xf32>
    %84 = tpu.matmul %82, %83, %cst_36 {dimension_numbers = #tpu.dot_dimension_numbers<[1], [0], [0], [1], [0, 0, 1, 1], [], []>} : vector<16x16xbf16>, vector<16x32xbf16>, vector<16x32xf32> -> vector<16x32xf32>
    %85 = arith.truncf %84 : vector<16x32xf32> to vector<16x32xbf16>
    %86 = vector.extract_strided_slice %60 {offsets = [0, 0], sizes = [32, 128], strides = [1, 1]} : vector<128x128xbf16> to vector<32x128xbf16>
    %cst_37 = arith.constant dense<0.000000e+00> : vector<16x128xf32>
    %87 = tpu.matmul %85, %86, %cst_37 {dimension_numbers = #tpu.dot_dimension_numbers<[1], [0], [0], [1], [0, 0, 1, 1], [], []>} : vector<16x32xbf16>, vector<32x128xbf16>, vector<16x128xf32> -> vector<16x128xf32>
    %88 = arith.addf %64, %87 : vector<16x128xf32>
    %89 = vector.extract_strided_slice %61 {offsets = [0, 32], sizes = [16, 32], strides = [1, 1]} : vector<16x128xbf16> to vector<16x32xbf16>
    %90 = vector.extract_strided_slice %62 {offsets = [0, 32], sizes = [16, 32], strides = [1, 1]} : vector<16x128xbf16> to vector<16x32xbf16>
    %cst_38 = arith.constant dense<0.000000e+00> : vector<16x16xf32>
    %91 = tpu.matmul %89, %90, %cst_38 {dimension_numbers = #tpu.dot_dimension_numbers<[1], [1], [0], [0], [0, 0, 1, 0], [], []>} : vector<16x32xbf16>, vector<16x32xbf16>, vector<16x16xf32> -> vector<16x16xf32>
    %cst_39 = arith.constant 0.176776692 : f32
    %92 = vector.broadcast %cst_39 : f32 to vector<16x16xf32>
    %93 = arith.mulf %91, %92 : vector<16x16xf32>
    %cst_40 = arith.constant -1.000000e+09 : f32
    %94 = vector.broadcast %cst_40 : f32 to vector<16x16xf32>
    %95 = arith.select %19, %93, %94 : vector<16x16xi1>, vector<16x16xf32>
    %cst_41 = arith.constant dense<0xFF800000> : vector<16xf32>
    %96 = vector.multi_reduction <maximumf>, %95, %cst_41 [1] : vector<16x16xf32> to vector<16xf32>
    %97 = vector.shape_cast %96 : vector<16xf32> to vector<16x1xf32>
    %98 = vector.broadcast %97 : vector<16x1xf32> to vector<16x16xf32>
    %99 = arith.subf %95, %98 : vector<16x16xf32>
    %100 = math.exp %99 : vector<16x16xf32>
    %cst_42 = arith.constant dense<0.000000e+00> : vector<16xf32>
    %101 = vector.multi_reduction <add>, %100, %cst_42 [1] : vector<16x16xf32> to vector<16xf32>
    %102 = vector.shape_cast %101 : vector<16xf32> to vector<16x1xf32>
    %103 = tpu.reciprocal %102 {approx = true} : vector<16x1xf32> -> vector<16x1xf32>
    %104 = vector.broadcast %103 : vector<16x1xf32> to vector<16x16xf32>
    %105 = arith.mulf %100, %104 : vector<16x16xf32>
    %106 = arith.truncf %105 : vector<16x16xf32> to vector<16x16xbf16>
    %107 = vector.extract_strided_slice %63 {offsets = [0, 32], sizes = [16, 32], strides = [1, 1]} : vector<16x128xbf16> to vector<16x32xbf16>
    %cst_43 = arith.constant dense<0.000000e+00> : vector<16x32xf32>
    %108 = tpu.matmul %106, %107, %cst_43 {dimension_numbers = #tpu.dot_dimension_numbers<[1], [0], [0], [1], [0, 0, 1, 1], [], []>} : vector<16x16xbf16>, vector<16x32xbf16>, vector<16x32xf32> -> vector<16x32xf32>
    %109 = arith.truncf %108 : vector<16x32xf32> to vector<16x32xbf16>
    %110 = vector.extract_strided_slice %60 {offsets = [32, 0], sizes = [32, 128], strides = [1, 1]} : vector<128x128xbf16> to vector<32x128xbf16>
    %cst_44 = arith.constant dense<0.000000e+00> : vector<16x128xf32>
    %111 = tpu.matmul %109, %110, %cst_44 {dimension_numbers = #tpu.dot_dimension_numbers<[1], [0], [0], [1], [0, 0, 1, 1], [], []>} : vector<16x32xbf16>, vector<32x128xbf16>, vector<16x128xf32> -> vector<16x128xf32>
    %112 = arith.addf %88, %111 : vector<16x128xf32>
    %113 = vector.extract_strided_slice %61 {offsets = [0, 64], sizes = [16, 32], strides = [1, 1]} : vector<16x128xbf16> to vector<16x32xbf16>
    %114 = vector.extract_strided_slice %62 {offsets = [0, 64], sizes = [16, 32], strides = [1, 1]} : vector<16x128xbf16> to vector<16x32xbf16>
    %cst_45 = arith.constant dense<0.000000e+00> : vector<16x16xf32>
    %115 = tpu.matmul %113, %114, %cst_45 {dimension_numbers = #tpu.dot_dimension_numbers<[1], [1], [0], [0], [0, 0, 1, 0], [], []>} : vector<16x32xbf16>, vector<16x32xbf16>, vector<16x16xf32> -> vector<16x16xf32>
    %cst_46 = arith.constant 0.176776692 : f32
    %116 = vector.broadcast %cst_46 : f32 to vector<16x16xf32>
    %117 = arith.mulf %115, %116 : vector<16x16xf32>
    %cst_47 = arith.constant -1.000000e+09 : f32
    %118 = vector.broadcast %cst_47 : f32 to vector<16x16xf32>
    %119 = arith.select %19, %117, %118 : vector<16x16xi1>, vector<16x16xf32>
    %cst_48 = arith.constant dense<0xFF800000> : vector<16xf32>
    %120 = vector.multi_reduction <maximumf>, %119, %cst_48 [1] : vector<16x16xf32> to vector<16xf32>
    %121 = vector.shape_cast %120 : vector<16xf32> to vector<16x1xf32>
    %122 = vector.broadcast %121 : vector<16x1xf32> to vector<16x16xf32>
    %123 = arith.subf %119, %122 : vector<16x16xf32>
    %124 = math.exp %123 : vector<16x16xf32>
    %cst_49 = arith.constant dense<0.000000e+00> : vector<16xf32>
    %125 = vector.multi_reduction <add>, %124, %cst_49 [1] : vector<16x16xf32> to vector<16xf32>
    %126 = vector.shape_cast %125 : vector<16xf32> to vector<16x1xf32>
    %127 = tpu.reciprocal %126 {approx = true} : vector<16x1xf32> -> vector<16x1xf32>
    %128 = vector.broadcast %127 : vector<16x1xf32> to vector<16x16xf32>
    %129 = arith.mulf %124, %128 : vector<16x16xf32>
    %130 = arith.truncf %129 : vector<16x16xf32> to vector<16x16xbf16>
    %131 = vector.extract_strided_slice %63 {offsets = [0, 64], sizes = [16, 32], strides = [1, 1]} : vector<16x128xbf16> to vector<16x32xbf16>
    %cst_50 = arith.constant dense<0.000000e+00> : vector<16x32xf32>
    %132 = tpu.matmul %130, %131, %cst_50 {dimension_numbers = #tpu.dot_dimension_numbers<[1], [0], [0], [1], [0, 0, 1, 1], [], []>} : vector<16x16xbf16>, vector<16x32xbf16>, vector<16x32xf32> -> vector<16x32xf32>
    %133 = arith.truncf %132 : vector<16x32xf32> to vector<16x32xbf16>
    %134 = vector.extract_strided_slice %60 {offsets = [64, 0], sizes = [32, 128], strides = [1, 1]} : vector<128x128xbf16> to vector<32x128xbf16>
    %cst_51 = arith.constant dense<0.000000e+00> : vector<16x128xf32>
    %135 = tpu.matmul %133, %134, %cst_51 {dimension_numbers = #tpu.dot_dimension_numbers<[1], [0], [0], [1], [0, 0, 1, 1], [], []>} : vector<16x32xbf16>, vector<32x128xbf16>, vector<16x128xf32> -> vector<16x128xf32>
    %136 = arith.addf %112, %135 : vector<16x128xf32>
    %137 = vector.extract_strided_slice %61 {offsets = [0, 96], sizes = [16, 32], strides = [1, 1]} : vector<16x128xbf16> to vector<16x32xbf16>
    %138 = vector.extract_strided_slice %62 {offsets = [0, 96], sizes = [16, 32], strides = [1, 1]} : vector<16x128xbf16> to vector<16x32xbf16>
    %cst_52 = arith.constant dense<0.000000e+00> : vector<16x16xf32>
    %139 = tpu.matmul %137, %138, %cst_52 {dimension_numbers = #tpu.dot_dimension_numbers<[1], [1], [0], [0], [0, 0, 1, 0], [], []>} : vector<16x32xbf16>, vector<16x32xbf16>, vector<16x16xf32> -> vector<16x16xf32>
    %cst_53 = arith.constant 0.176776692 : f32
    %140 = vector.broadcast %cst_53 : f32 to vector<16x16xf32>
    %141 = arith.mulf %139, %140 : vector<16x16xf32>
    %cst_54 = arith.constant -1.000000e+09 : f32
    %142 = vector.broadcast %cst_54 : f32 to vector<16x16xf32>
    %143 = arith.select %19, %141, %142 : vector<16x16xi1>, vector<16x16xf32>
    %cst_55 = arith.constant dense<0xFF800000> : vector<16xf32>
    %144 = vector.multi_reduction <maximumf>, %143, %cst_55 [1] : vector<16x16xf32> to vector<16xf32>
    %145 = vector.shape_cast %144 : vector<16xf32> to vector<16x1xf32>
    %146 = vector.broadcast %145 : vector<16x1xf32> to vector<16x16xf32>
    %147 = arith.subf %143, %146 : vector<16x16xf32>
    %148 = math.exp %147 : vector<16x16xf32>
    %cst_56 = arith.constant dense<0.000000e+00> : vector<16xf32>
    %149 = vector.multi_reduction <add>, %148, %cst_56 [1] : vector<16x16xf32> to vector<16xf32>
    %150 = vector.shape_cast %149 : vector<16xf32> to vector<16x1xf32>
    %151 = tpu.reciprocal %150 {approx = true} : vector<16x1xf32> -> vector<16x1xf32>
    %152 = vector.broadcast %151 : vector<16x1xf32> to vector<16x16xf32>
    %153 = arith.mulf %148, %152 : vector<16x16xf32>
    %154 = arith.truncf %153 : vector<16x16xf32> to vector<16x16xbf16>
    %155 = vector.extract_strided_slice %63 {offsets = [0, 96], sizes = [16, 32], strides = [1, 1]} : vector<16x128xbf16> to vector<16x32xbf16>
    %cst_57 = arith.constant dense<0.000000e+00> : vector<16x32xf32>
    %156 = tpu.matmul %154, %155, %cst_57 {dimension_numbers = #tpu.dot_dimension_numbers<[1], [0], [0], [1], [0, 0, 1, 1], [], []>} : vector<16x16xbf16>, vector<16x32xbf16>, vector<16x32xf32> -> vector<16x32xf32>
    %157 = arith.truncf %156 : vector<16x32xf32> to vector<16x32xbf16>
    %158 = vector.extract_strided_slice %60 {offsets = [96, 0], sizes = [32, 128], strides = [1, 1]} : vector<128x128xbf16> to vector<32x128xbf16>
    %cst_58 = arith.constant dense<0.000000e+00> : vector<16x128xf32>
    %159 = tpu.matmul %157, %158, %cst_58 {dimension_numbers = #tpu.dot_dimension_numbers<[1], [0], [0], [1], [0, 0, 1, 1], [], []>} : vector<16x32xbf16>, vector<32x128xbf16>, vector<16x128xf32> -> vector<16x128xf32>
    %160 = arith.addf %136, %159 : vector<16x128xf32>
    %161 = arith.addf %3, %160 : vector<16x128xf32>
    %c0_59 = arith.constant 0 : index
    %c0_60 = arith.constant 0 : index
    %c1152 = arith.constant 1152 : index
    %162 = vector.load %arg6[%c0_59, %c0_60, %c1152] : memref<1x1x2176xf32, #tpu.memory_space<vmem>>, vector<1x1x128xf32>
    %163 = vector.shape_cast %162 : vector<1x1x128xf32> to vector<1x128xf32>
    %164 = vector.broadcast %163 : vector<1x128xf32> to vector<16x128xf32>
    %165 = arith.addf %161, %164 : vector<16x128xf32>
    %c0_61 = arith.constant 0 : index
    %c0_62 = arith.constant 0 : index
    %c256 = arith.constant 256 : index
    %166 = vector.load %arg6[%c0_61, %c0_62, %c256] : memref<1x1x2176xf32, #tpu.memory_space<vmem>>, vector<1x1x128xf32>
    %167 = vector.shape_cast %166 : vector<1x1x128xf32> to vector<1x128xf32>
    %c0_63 = arith.constant 0 : index
    %c0_64 = arith.constant 0 : index
    %c384_65 = arith.constant 384 : index
    %168 = vector.load %arg6[%c0_63, %c0_64, %c384_65] : memref<1x1x2176xf32, #tpu.memory_space<vmem>>, vector<1x1x128xf32>
    %169 = vector.shape_cast %168 : vector<1x1x128xf32> to vector<1x128xf32>
    %cst_66 = arith.constant dense<0.000000e+00> : vector<16xf32>
    %170 = vector.multi_reduction <add>, %165, %cst_66 [1] : vector<16x128xf32> to vector<16xf32>
    %171 = vector.shape_cast %170 : vector<16xf32> to vector<16x1xf32>
    %cst_67 = arith.constant 1.280000e+02 : f32
    %172 = vector.broadcast %cst_67 : f32 to vector<16x1xf32>
    %173 = arith.divf %171, %172 : vector<16x1xf32>
    %174 = vector.broadcast %173 : vector<16x1xf32> to vector<16x128xf32>
    %175 = arith.subf %165, %174 : vector<16x128xf32>
    %176 = arith.mulf %175, %175 : vector<16x128xf32>
    %cst_68 = arith.constant dense<0.000000e+00> : vector<16xf32>
    %177 = vector.multi_reduction <add>, %176, %cst_68 [1] : vector<16x128xf32> to vector<16xf32>
    %178 = vector.shape_cast %177 : vector<16xf32> to vector<16x1xf32>
    %cst_69 = arith.constant 1.280000e+02 : f32
    %179 = vector.broadcast %cst_69 : f32 to vector<16x1xf32>
    %180 = arith.divf %178, %179 : vector<16x1xf32>
    %181 = vector.broadcast %173 : vector<16x1xf32> to vector<16x128xf32>
    %182 = arith.subf %165, %181 : vector<16x128xf32>
    %cst_70 = arith.constant 9.99999974E-6 : f32
    %183 = vector.broadcast %cst_70 : f32 to vector<16x1xf32>
    %184 = arith.addf %180, %183 : vector<16x1xf32>
    %185 = math.rsqrt %184 : vector<16x1xf32>
    %186 = vector.broadcast %185 : vector<16x1xf32> to vector<16x128xf32>
    %187 = arith.mulf %182, %186 : vector<16x128xf32>
    %188 = vector.broadcast %167 : vector<1x128xf32> to vector<16x128xf32>
    %189 = arith.mulf %187, %188 : vector<16x128xf32>
    %190 = vector.broadcast %169 : vector<1x128xf32> to vector<16x128xf32>
    %191 = arith.addf %189, %190 : vector<16x128xf32>
    %192 = arith.truncf %191 : vector<16x128xf32> to vector<16x128xbf16>
    %c0_71 = arith.constant 0 : index
    %c0_72 = arith.constant 0 : index
    %c512 = arith.constant 512 : index
    %193 = vector.load %arg7[%c0_71, %c0_72, %c512] : memref<1x128x1280xbf16, #tpu.memory_space<vmem>>, vector<1x128x128xbf16>
    %194 = vector.shape_cast %193 : vector<1x128x128xbf16> to vector<128x128xbf16>
    %cst_73 = arith.constant dense<0.000000e+00> : vector<16x128xf32>
    %195 = tpu.matmul %192, %194, %cst_73 {dimension_numbers = #tpu.dot_dimension_numbers<[1], [0], [0], [1], [0, 0, 1, 1], [], []>} : vector<16x128xbf16>, vector<128x128xbf16>, vector<16x128xf32> -> vector<16x128xf32>
    %c0_74 = arith.constant 0 : index
    %c0_75 = arith.constant 0 : index
    %c1280 = arith.constant 1280 : index
    %196 = vector.load %arg6[%c0_74, %c0_75, %c1280] : memref<1x1x2176xf32, #tpu.memory_space<vmem>>, vector<1x1x128xf32>
    %197 = vector.shape_cast %196 : vector<1x1x128xf32> to vector<1x128xf32>
    %198 = vector.broadcast %197 : vector<1x128xf32> to vector<16x128xf32>
    %199 = arith.addf %195, %198 : vector<16x128xf32>
    %c0_76 = arith.constant 0 : index
    %c0_77 = arith.constant 0 : index
    %c640 = arith.constant 640 : index
    %200 = vector.load %arg7[%c0_76, %c0_77, %c640] : memref<1x128x1280xbf16, #tpu.memory_space<vmem>>, vector<1x128x256xbf16>
    %201 = vector.shape_cast %200 : vector<1x128x256xbf16> to vector<128x256xbf16>
    %cst_78 = arith.constant dense<0.000000e+00> : vector<24x256xf32>
    %202 = tpu.matmul %6, %201, %cst_78 {dimension_numbers = #tpu.dot_dimension_numbers<[1], [0], [0], [1], [0, 0, 1, 1], [], []>} : vector<24x128xbf16>, vector<128x256xbf16>, vector<24x256xf32> -> vector<24x256xf32>
    %c0_79 = arith.constant 0 : index
    %c0_80 = arith.constant 0 : index
    %c1408 = arith.constant 1408 : index
    %203 = vector.load %arg6[%c0_79, %c0_80, %c1408] : memref<1x1x2176xf32, #tpu.memory_space<vmem>>, vector<1x1x256xf32>
    %204 = vector.shape_cast %203 : vector<1x1x256xf32> to vector<1x256xf32>
    %205 = vector.broadcast %204 : vector<1x256xf32> to vector<24x256xf32>
    %206 = arith.addf %202, %205 : vector<24x256xf32>
    %207 = vector.extract_strided_slice %206 {offsets = [0, 0], sizes = [24, 128], strides = [1, 1]} : vector<24x256xf32> to vector<24x128xf32>
    %208 = vector.extract_strided_slice %206 {offsets = [0, 128], sizes = [24, 128], strides = [1, 1]} : vector<24x256xf32> to vector<24x128xf32>
    %c0_81 = arith.constant 0 : index
    %c0_82 = arith.constant 0 : index
    %c896 = arith.constant 896 : index
    %209 = vector.load %arg7[%c0_81, %c0_82, %c896] : memref<1x128x1280xbf16, #tpu.memory_space<vmem>>, vector<1x128x128xbf16>
    %210 = vector.shape_cast %209 : vector<1x128x128xbf16> to vector<128x128xbf16>
    %211 = arith.truncf %199 : vector<16x128xf32> to vector<16x128xbf16>
    %212 = arith.truncf %207 : vector<24x128xf32> to vector<24x128xbf16>
    %213 = arith.truncf %208 : vector<24x128xf32> to vector<24x128xbf16>
    %cst_83 = arith.constant 0.000000e+00 : f32
    %214 = vector.broadcast %cst_83 : f32 to vector<16x128xf32>
    %215 = vector.extract_strided_slice %211 {offsets = [0, 0], sizes = [16, 32], strides = [1, 1]} : vector<16x128xbf16> to vector<16x32xbf16>
    %216 = vector.extract_strided_slice %212 {offsets = [0, 0], sizes = [24, 32], strides = [1, 1]} : vector<24x128xbf16> to vector<24x32xbf16>
    %cst_84 = arith.constant dense<0.000000e+00> : vector<16x24xf32>
    %217 = tpu.matmul %215, %216, %cst_84 {dimension_numbers = #tpu.dot_dimension_numbers<[1], [1], [0], [0], [0, 0, 1, 0], [], []>} : vector<16x32xbf16>, vector<24x32xbf16>, vector<16x24xf32> -> vector<16x24xf32>
    %cst_85 = arith.constant 0.176776692 : f32
    %218 = vector.broadcast %cst_85 : f32 to vector<16x24xf32>
    %219 = arith.mulf %217, %218 : vector<16x24xf32>
    %cst_86 = arith.constant -1.000000e+09 : f32
    %220 = vector.broadcast %cst_86 : f32 to vector<16x24xf32>
    %221 = arith.select %21, %219, %220 : vector<16x24xi1>, vector<16x24xf32>
    %cst_87 = arith.constant dense<0xFF800000> : vector<16xf32>
    %222 = vector.multi_reduction <maximumf>, %221, %cst_87 [1] : vector<16x24xf32> to vector<16xf32>
    %223 = vector.shape_cast %222 : vector<16xf32> to vector<16x1xf32>
    %224 = vector.broadcast %223 : vector<16x1xf32> to vector<16x24xf32>
    %225 = arith.subf %221, %224 : vector<16x24xf32>
    %226 = math.exp %225 : vector<16x24xf32>
    %cst_88 = arith.constant dense<0.000000e+00> : vector<16xf32>
    %227 = vector.multi_reduction <add>, %226, %cst_88 [1] : vector<16x24xf32> to vector<16xf32>
    %228 = vector.shape_cast %227 : vector<16xf32> to vector<16x1xf32>
    %229 = tpu.reciprocal %228 {approx = true} : vector<16x1xf32> -> vector<16x1xf32>
    %230 = vector.broadcast %229 : vector<16x1xf32> to vector<16x24xf32>
    %231 = arith.mulf %226, %230 : vector<16x24xf32>
    %232 = arith.truncf %231 : vector<16x24xf32> to vector<16x24xbf16>
    %233 = vector.extract_strided_slice %213 {offsets = [0, 0], sizes = [24, 32], strides = [1, 1]} : vector<24x128xbf16> to vector<24x32xbf16>
    %cst_89 = arith.constant dense<0.000000e+00> : vector<16x32xf32>
    %234 = tpu.matmul %232, %233, %cst_89 {dimension_numbers = #tpu.dot_dimension_numbers<[1], [0], [0], [1], [0, 0, 1, 1], [], []>} : vector<16x24xbf16>, vector<24x32xbf16>, vector<16x32xf32> -> vector<16x32xf32>
    %235 = arith.truncf %234 : vector<16x32xf32> to vector<16x32xbf16>
    %236 = vector.extract_strided_slice %210 {offsets = [0, 0], sizes = [32, 128], strides = [1, 1]} : vector<128x128xbf16> to vector<32x128xbf16>
    %cst_90 = arith.constant dense<0.000000e+00> : vector<16x128xf32>
    %237 = tpu.matmul %235, %236, %cst_90 {dimension_numbers = #tpu.dot_dimension_numbers<[1], [0], [0], [1], [0, 0, 1, 1], [], []>} : vector<16x32xbf16>, vector<32x128xbf16>, vector<16x128xf32> -> vector<16x128xf32>
    %238 = arith.addf %214, %237 : vector<16x128xf32>
    %239 = vector.extract_strided_slice %211 {offsets = [0, 32], sizes = [16, 32], strides = [1, 1]} : vector<16x128xbf16> to vector<16x32xbf16>
    %240 = vector.extract_strided_slice %212 {offsets = [0, 32], sizes = [24, 32], strides = [1, 1]} : vector<24x128xbf16> to vector<24x32xbf16>
    %cst_91 = arith.constant dense<0.000000e+00> : vector<16x24xf32>
    %241 = tpu.matmul %239, %240, %cst_91 {dimension_numbers = #tpu.dot_dimension_numbers<[1], [1], [0], [0], [0, 0, 1, 0], [], []>} : vector<16x32xbf16>, vector<24x32xbf16>, vector<16x24xf32> -> vector<16x24xf32>
    %cst_92 = arith.constant 0.176776692 : f32
    %242 = vector.broadcast %cst_92 : f32 to vector<16x24xf32>
    %243 = arith.mulf %241, %242 : vector<16x24xf32>
    %cst_93 = arith.constant -1.000000e+09 : f32
    %244 = vector.broadcast %cst_93 : f32 to vector<16x24xf32>
    %245 = arith.select %21, %243, %244 : vector<16x24xi1>, vector<16x24xf32>
    %cst_94 = arith.constant dense<0xFF800000> : vector<16xf32>
    %246 = vector.multi_reduction <maximumf>, %245, %cst_94 [1] : vector<16x24xf32> to vector<16xf32>
    %247 = vector.shape_cast %246 : vector<16xf32> to vector<16x1xf32>
    %248 = vector.broadcast %247 : vector<16x1xf32> to vector<16x24xf32>
    %249 = arith.subf %245, %248 : vector<16x24xf32>
    %250 = math.exp %249 : vector<16x24xf32>
    %cst_95 = arith.constant dense<0.000000e+00> : vector<16xf32>
    %251 = vector.multi_reduction <add>, %250, %cst_95 [1] : vector<16x24xf32> to vector<16xf32>
    %252 = vector.shape_cast %251 : vector<16xf32> to vector<16x1xf32>
    %253 = tpu.reciprocal %252 {approx = true} : vector<16x1xf32> -> vector<16x1xf32>
    %254 = vector.broadcast %253 : vector<16x1xf32> to vector<16x24xf32>
    %255 = arith.mulf %250, %254 : vector<16x24xf32>
    %256 = arith.truncf %255 : vector<16x24xf32> to vector<16x24xbf16>
    %257 = vector.extract_strided_slice %213 {offsets = [0, 32], sizes = [24, 32], strides = [1, 1]} : vector<24x128xbf16> to vector<24x32xbf16>
    %cst_96 = arith.constant dense<0.000000e+00> : vector<16x32xf32>
    %258 = tpu.matmul %256, %257, %cst_96 {dimension_numbers = #tpu.dot_dimension_numbers<[1], [0], [0], [1], [0, 0, 1, 1], [], []>} : vector<16x24xbf16>, vector<24x32xbf16>, vector<16x32xf32> -> vector<16x32xf32>
    %259 = arith.truncf %258 : vector<16x32xf32> to vector<16x32xbf16>
    %260 = vector.extract_strided_slice %210 {offsets = [32, 0], sizes = [32, 128], strides = [1, 1]} : vector<128x128xbf16> to vector<32x128xbf16>
    %cst_97 = arith.constant dense<0.000000e+00> : vector<16x128xf32>
    %261 = tpu.matmul %259, %260, %cst_97 {dimension_numbers = #tpu.dot_dimension_numbers<[1], [0], [0], [1], [0, 0, 1, 1], [], []>} : vector<16x32xbf16>, vector<32x128xbf16>, vector<16x128xf32> -> vector<16x128xf32>
    %262 = arith.addf %238, %261 : vector<16x128xf32>
    %263 = vector.extract_strided_slice %211 {offsets = [0, 64], sizes = [16, 32], strides = [1, 1]} : vector<16x128xbf16> to vector<16x32xbf16>
    %264 = vector.extract_strided_slice %212 {offsets = [0, 64], sizes = [24, 32], strides = [1, 1]} : vector<24x128xbf16> to vector<24x32xbf16>
    %cst_98 = arith.constant dense<0.000000e+00> : vector<16x24xf32>
    %265 = tpu.matmul %263, %264, %cst_98 {dimension_numbers = #tpu.dot_dimension_numbers<[1], [1], [0], [0], [0, 0, 1, 0], [], []>} : vector<16x32xbf16>, vector<24x32xbf16>, vector<16x24xf32> -> vector<16x24xf32>
    %cst_99 = arith.constant 0.176776692 : f32
    %266 = vector.broadcast %cst_99 : f32 to vector<16x24xf32>
    %267 = arith.mulf %265, %266 : vector<16x24xf32>
    %cst_100 = arith.constant -1.000000e+09 : f32
    %268 = vector.broadcast %cst_100 : f32 to vector<16x24xf32>
    %269 = arith.select %21, %267, %268 : vector<16x24xi1>, vector<16x24xf32>
    %cst_101 = arith.constant dense<0xFF800000> : vector<16xf32>
    %270 = vector.multi_reduction <maximumf>, %269, %cst_101 [1] : vector<16x24xf32> to vector<16xf32>
    %271 = vector.shape_cast %270 : vector<16xf32> to vector<16x1xf32>
    %272 = vector.broadcast %271 : vector<16x1xf32> to vector<16x24xf32>
    %273 = arith.subf %269, %272 : vector<16x24xf32>
    %274 = math.exp %273 : vector<16x24xf32>
    %cst_102 = arith.constant dense<0.000000e+00> : vector<16xf32>
    %275 = vector.multi_reduction <add>, %274, %cst_102 [1] : vector<16x24xf32> to vector<16xf32>
    %276 = vector.shape_cast %275 : vector<16xf32> to vector<16x1xf32>
    %277 = tpu.reciprocal %276 {approx = true} : vector<16x1xf32> -> vector<16x1xf32>
    %278 = vector.broadcast %277 : vector<16x1xf32> to vector<16x24xf32>
    %279 = arith.mulf %274, %278 : vector<16x24xf32>
    %280 = arith.truncf %279 : vector<16x24xf32> to vector<16x24xbf16>
    %281 = vector.extract_strided_slice %213 {offsets = [0, 64], sizes = [24, 32], strides = [1, 1]} : vector<24x128xbf16> to vector<24x32xbf16>
    %cst_103 = arith.constant dense<0.000000e+00> : vector<16x32xf32>
    %282 = tpu.matmul %280, %281, %cst_103 {dimension_numbers = #tpu.dot_dimension_numbers<[1], [0], [0], [1], [0, 0, 1, 1], [], []>} : vector<16x24xbf16>, vector<24x32xbf16>, vector<16x32xf32> -> vector<16x32xf32>
    %283 = arith.truncf %282 : vector<16x32xf32> to vector<16x32xbf16>
    %284 = vector.extract_strided_slice %210 {offsets = [64, 0], sizes = [32, 128], strides = [1, 1]} : vector<128x128xbf16> to vector<32x128xbf16>
    %cst_104 = arith.constant dense<0.000000e+00> : vector<16x128xf32>
    %285 = tpu.matmul %283, %284, %cst_104 {dimension_numbers = #tpu.dot_dimension_numbers<[1], [0], [0], [1], [0, 0, 1, 1], [], []>} : vector<16x32xbf16>, vector<32x128xbf16>, vector<16x128xf32> -> vector<16x128xf32>
    %286 = arith.addf %262, %285 : vector<16x128xf32>
    %287 = vector.extract_strided_slice %211 {offsets = [0, 96], sizes = [16, 32], strides = [1, 1]} : vector<16x128xbf16> to vector<16x32xbf16>
    %288 = vector.extract_strided_slice %212 {offsets = [0, 96], sizes = [24, 32], strides = [1, 1]} : vector<24x128xbf16> to vector<24x32xbf16>
    %cst_105 = arith.constant dense<0.000000e+00> : vector<16x24xf32>
    %289 = tpu.matmul %287, %288, %cst_105 {dimension_numbers = #tpu.dot_dimension_numbers<[1], [1], [0], [0], [0, 0, 1, 0], [], []>} : vector<16x32xbf16>, vector<24x32xbf16>, vector<16x24xf32> -> vector<16x24xf32>
    %cst_106 = arith.constant 0.176776692 : f32
    %290 = vector.broadcast %cst_106 : f32 to vector<16x24xf32>
    %291 = arith.mulf %289, %290 : vector<16x24xf32>
    %cst_107 = arith.constant -1.000000e+09 : f32
    %292 = vector.broadcast %cst_107 : f32 to vector<16x24xf32>
    %293 = arith.select %21, %291, %292 : vector<16x24xi1>, vector<16x24xf32>
    %cst_108 = arith.constant dense<0xFF800000> : vector<16xf32>
    %294 = vector.multi_reduction <maximumf>, %293, %cst_108 [1] : vector<16x24xf32> to vector<16xf32>
    %295 = vector.shape_cast %294 : vector<16xf32> to vector<16x1xf32>
    %296 = vector.broadcast %295 : vector<16x1xf32> to vector<16x24xf32>
    %297 = arith.subf %293, %296 : vector<16x24xf32>
    %298 = math.exp %297 : vector<16x24xf32>
    %cst_109 = arith.constant dense<0.000000e+00> : vector<16xf32>
    %299 = vector.multi_reduction <add>, %298, %cst_109 [1] : vector<16x24xf32> to vector<16xf32>
    %300 = vector.shape_cast %299 : vector<16xf32> to vector<16x1xf32>
    %301 = tpu.reciprocal %300 {approx = true} : vector<16x1xf32> -> vector<16x1xf32>
    %302 = vector.broadcast %301 : vector<16x1xf32> to vector<16x24xf32>
    %303 = arith.mulf %298, %302 : vector<16x24xf32>
    %304 = arith.truncf %303 : vector<16x24xf32> to vector<16x24xbf16>
    %305 = vector.extract_strided_slice %213 {offsets = [0, 96], sizes = [24, 32], strides = [1, 1]} : vector<24x128xbf16> to vector<24x32xbf16>
    %cst_110 = arith.constant dense<0.000000e+00> : vector<16x32xf32>
    %306 = tpu.matmul %304, %305, %cst_110 {dimension_numbers = #tpu.dot_dimension_numbers<[1], [0], [0], [1], [0, 0, 1, 1], [], []>} : vector<16x24xbf16>, vector<24x32xbf16>, vector<16x32xf32> -> vector<16x32xf32>
    %307 = arith.truncf %306 : vector<16x32xf32> to vector<16x32xbf16>
    %308 = vector.extract_strided_slice %210 {offsets = [96, 0], sizes = [32, 128], strides = [1, 1]} : vector<128x128xbf16> to vector<32x128xbf16>
    %cst_111 = arith.constant dense<0.000000e+00> : vector<16x128xf32>
    %309 = tpu.matmul %307, %308, %cst_111 {dimension_numbers = #tpu.dot_dimension_numbers<[1], [0], [0], [1], [0, 0, 1, 1], [], []>} : vector<16x32xbf16>, vector<32x128xbf16>, vector<16x128xf32> -> vector<16x128xf32>
    %310 = arith.addf %286, %309 : vector<16x128xf32>
    %311 = arith.addf %165, %310 : vector<16x128xf32>
    %c0_112 = arith.constant 0 : index
    %c0_113 = arith.constant 0 : index
    %c1664 = arith.constant 1664 : index
    %312 = vector.load %arg6[%c0_112, %c0_113, %c1664] : memref<1x1x2176xf32, #tpu.memory_space<vmem>>, vector<1x1x128xf32>
    %313 = vector.shape_cast %312 : vector<1x1x128xf32> to vector<1x128xf32>
    %314 = vector.broadcast %313 : vector<1x128xf32> to vector<16x128xf32>
    %315 = arith.addf %311, %314 : vector<16x128xf32>
    %c0_114 = arith.constant 0 : index
    %c0_115 = arith.constant 0 : index
    %c512_116 = arith.constant 512 : index
    %316 = vector.load %arg6[%c0_114, %c0_115, %c512_116] : memref<1x1x2176xf32, #tpu.memory_space<vmem>>, vector<1x1x128xf32>
    %317 = vector.shape_cast %316 : vector<1x1x128xf32> to vector<1x128xf32>
    %c0_117 = arith.constant 0 : index
    %c0_118 = arith.constant 0 : index
    %c640_119 = arith.constant 640 : index
    %318 = vector.load %arg6[%c0_117, %c0_118, %c640_119] : memref<1x1x2176xf32, #tpu.memory_space<vmem>>, vector<1x1x128xf32>
    %319 = vector.shape_cast %318 : vector<1x1x128xf32> to vector<1x128xf32>
    %cst_120 = arith.constant dense<0.000000e+00> : vector<16xf32>
    %320 = vector.multi_reduction <add>, %315, %cst_120 [1] : vector<16x128xf32> to vector<16xf32>
    %321 = vector.shape_cast %320 : vector<16xf32> to vector<16x1xf32>
    %cst_121 = arith.constant 1.280000e+02 : f32
    %322 = vector.broadcast %cst_121 : f32 to vector<16x1xf32>
    %323 = arith.divf %321, %322 : vector<16x1xf32>
    %324 = vector.broadcast %323 : vector<16x1xf32> to vector<16x128xf32>
    %325 = arith.subf %315, %324 : vector<16x128xf32>
    %326 = arith.mulf %325, %325 : vector<16x128xf32>
    %cst_122 = arith.constant dense<0.000000e+00> : vector<16xf32>
    %327 = vector.multi_reduction <add>, %326, %cst_122 [1] : vector<16x128xf32> to vector<16xf32>
    %328 = vector.shape_cast %327 : vector<16xf32> to vector<16x1xf32>
    %cst_123 = arith.constant 1.280000e+02 : f32
    %329 = vector.broadcast %cst_123 : f32 to vector<16x1xf32>
    %330 = arith.divf %328, %329 : vector<16x1xf32>
    %331 = vector.broadcast %323 : vector<16x1xf32> to vector<16x128xf32>
    %332 = arith.subf %315, %331 : vector<16x128xf32>
    %cst_124 = arith.constant 9.99999974E-6 : f32
    %333 = vector.broadcast %cst_124 : f32 to vector<16x1xf32>
    %334 = arith.addf %330, %333 : vector<16x1xf32>
    %335 = math.rsqrt %334 : vector<16x1xf32>
    %336 = vector.broadcast %335 : vector<16x1xf32> to vector<16x128xf32>
    %337 = arith.mulf %332, %336 : vector<16x128xf32>
    %338 = vector.broadcast %317 : vector<1x128xf32> to vector<16x128xf32>
    %339 = arith.mulf %337, %338 : vector<16x128xf32>
    %340 = vector.broadcast %319 : vector<1x128xf32> to vector<16x128xf32>
    %341 = arith.addf %339, %340 : vector<16x128xf32>
    %342 = arith.truncf %341 : vector<16x128xf32> to vector<16x128xbf16>
    %c0_125 = arith.constant 0 : index
    %c0_126 = arith.constant 0 : index
    %c1024 = arith.constant 1024 : index
    %343 = vector.load %arg7[%c0_125, %c0_126, %c1024] : memref<1x128x1280xbf16, #tpu.memory_space<vmem>>, vector<1x128x256xbf16>
    %344 = vector.shape_cast %343 : vector<1x128x256xbf16> to vector<128x256xbf16>
    %cst_127 = arith.constant dense<0.000000e+00> : vector<16x256xf32>
    %345 = tpu.matmul %342, %344, %cst_127 {dimension_numbers = #tpu.dot_dimension_numbers<[1], [0], [0], [1], [0, 0, 1, 1], [], []>} : vector<16x128xbf16>, vector<128x256xbf16>, vector<16x256xf32> -> vector<16x256xf32>
    %c0_128 = arith.constant 0 : index
    %c0_129 = arith.constant 0 : index
    %c1792 = arith.constant 1792 : index
    %346 = vector.load %arg6[%c0_128, %c0_129, %c1792] : memref<1x1x2176xf32, #tpu.memory_space<vmem>>, vector<1x1x256xf32>
    %347 = vector.shape_cast %346 : vector<1x1x256xf32> to vector<1x256xf32>
    %348 = vector.broadcast %347 : vector<1x256xf32> to vector<16x256xf32>
    %349 = arith.addf %345, %348 : vector<16x256xf32>
    %cst_130 = arith.constant 0.000000e+00 : f32
    %350 = vector.broadcast %cst_130 : f32 to vector<16x256xf32>
    %351 = arith.maximumf %349, %350 : vector<16x256xf32>
    %352 = arith.truncf %351 : vector<16x256xf32> to vector<16x256xbf16>
    %c0_131 = arith.constant 0 : index
    %c0_132 = arith.constant 0 : index
    %c0_133 = arith.constant 0 : index
    %353 = vector.load %arg8[%c0_131, %c0_132, %c0_133] : memref<1x256x128xbf16, #tpu.memory_space<vmem>>, vector<1x256x128xbf16>
    %354 = vector.shape_cast %353 : vector<1x256x128xbf16> to vector<256x128xbf16>
    %cst_134 = arith.constant dense<0.000000e+00> : vector<16x128xf32>
    %355 = tpu.matmul %352, %354, %cst_134 {dimension_numbers = #tpu.dot_dimension_numbers<[1], [0], [0], [1], [0, 0, 1, 1], [], []>} : vector<16x256xbf16>, vector<256x128xbf16>, vector<16x128xf32> -> vector<16x128xf32>
    %c0_135 = arith.constant 0 : index
    %c0_136 = arith.constant 0 : index
    %c2048 = arith.constant 2048 : index
    %356 = vector.load %arg6[%c0_135, %c0_136, %c2048] : memref<1x1x2176xf32, #tpu.memory_space<vmem>>, vector<1x1x128xf32>
    %357 = vector.shape_cast %356 : vector<1x1x128xf32> to vector<1x128xf32>
    %358 = vector.broadcast %357 : vector<1x128xf32> to vector<16x128xf32>
    %359 = arith.addf %355, %358 : vector<16x128xf32>
    %360 = arith.addf %315, %359 : vector<16x128xf32>
    %c0_137 = arith.constant 0 : index
    %c0_138 = arith.constant 0 : index
    %361 = vector.load %arg11[%c0_137, %c0_138] : memref<16x128xf32, #tpu.memory_space<vmem>>, vector<16x128xf32>
    tpu.vector_store %arg11[%c0_137, %c0_138], %360 {strides = array<i32>} : memref<16x128xf32, #tpu.memory_space<vmem>>, vector<16x128xf32>,
    %c1_i32 = arith.constant 1 : i32
    %362 = arith.cmpi eq, %arg1, %c1_i32 : i32
    %363 = arith.extui %362 : i1 to i32
    %c0_i32_139 = arith.constant 0 : i32
    %364 = arith.cmpi ne, %363, %c0_i32_139 : i32
    scf.if %364 {
      %c0_140 = arith.constant 0 : index
      %c0_141 = arith.constant 0 : index
      %365 = vector.load %arg9[%c0_140, %c0_141] : memref<2x128xf32, #tpu.memory_space<vmem>>, vector<1x128xf32>
      %c1 = arith.constant 1 : index
      %c0_142 = arith.constant 0 : index
      %366 = vector.load %arg9[%c1, %c0_142] : memref<2x128xf32, #tpu.memory_space<vmem>>, vector<1x128xf32>
      %cst_143 = arith.constant dense<0.000000e+00> : vector<16xf32>
      %367 = vector.multi_reduction <add>, %360, %cst_143 [1] : vector<16x128xf32> to vector<16xf32>
      %368 = vector.shape_cast %367 : vector<16xf32> to vector<16x1xf32>
      %cst_144 = arith.constant 1.280000e+02 : f32
      %369 = vector.broadcast %cst_144 : f32 to vector<16x1xf32>
      %370 = arith.divf %368, %369 : vector<16x1xf32>
      %371 = vector.broadcast %370 : vector<16x1xf32> to vector<16x128xf32>
      %372 = arith.subf %360, %371 : vector<16x128xf32>
      %373 = arith.mulf %372, %372 : vector<16x128xf32>
      %cst_145 = arith.constant dense<0.000000e+00> : vector<16xf32>
      %374 = vector.multi_reduction <add>, %373, %cst_145 [1] : vector<16x128xf32> to vector<16xf32>
      %375 = vector.shape_cast %374 : vector<16xf32> to vector<16x1xf32>
      %cst_146 = arith.constant 1.280000e+02 : f32
      %376 = vector.broadcast %cst_146 : f32 to vector<16x1xf32>
      %377 = arith.divf %375, %376 : vector<16x1xf32>
      %378 = vector.broadcast %370 : vector<16x1xf32> to vector<16x128xf32>
      %379 = arith.subf %360, %378 : vector<16x128xf32>
      %cst_147 = arith.constant 9.99999974E-6 : f32
      %380 = vector.broadcast %cst_147 : f32 to vector<16x1xf32>
      %381 = arith.addf %377, %380 : vector<16x1xf32>
      %382 = math.rsqrt %381 : vector<16x1xf32>
      %383 = vector.broadcast %382 : vector<16x1xf32> to vector<16x128xf32>
      %384 = arith.mulf %379, %383 : vector<16x128xf32>
      %385 = vector.broadcast %365 : vector<1x128xf32> to vector<16x128xf32>
      %386 = arith.mulf %384, %385 : vector<16x128xf32>
      %387 = vector.broadcast %366 : vector<1x128xf32> to vector<16x128xf32>
      %388 = arith.addf %386, %387 : vector<16x128xf32>
      %c0_148 = arith.constant 0 : index
      %c0_149 = arith.constant 0 : index
      %c0_150 = arith.constant 0 : index
      %389 = vector.load %arg10[%c0_148, %c0_149, %c0_150] : memref<1x16x128xf32, #tpu.memory_space<vmem>>, vector<1x16x128xf32>
      %390 = vector.shape_cast %389 : vector<1x16x128xf32> to vector<16x128xf32>
      %391 = vector.shape_cast %388 : vector<16x128xf32> to vector<1x16x128xf32>
      tpu.vector_store %arg10[%c0_148, %c0_149, %c0_150], %391 {strides = array<i32>} : memref<1x16x128xf32, #tpu.memory_space<vmem>>, vector<1x16x128xf32>,
    } else {
    }
    return
  }
  func.func @transform_0(%arg0: i32, %arg1: i32) -> (i32, i32, i32) {
    %c0_i32 = arith.constant 0 : i32
    %c0_i32_0 = arith.constant 0 : i32
    %c0_i32_1 = arith.constant 0 : i32
    return %arg0, %c0_i32, %c0_i32_0 : i32, i32, i32
  }
  func.func @transform_1(%arg0: i32, %arg1: i32) -> (i32, i32, i32) {
    %c0_i32 = arith.constant 0 : i32
    %c0_i32_0 = arith.constant 0 : i32
    %c0_i32_1 = arith.constant 0 : i32
    return %arg0, %c0_i32, %c0_i32_0 : i32, i32, i32
  }
  func.func @transform_2(%arg0: i32, %arg1: i32) -> (i32, i32, i32) {
    %c0_i32 = arith.constant 0 : i32
    %c0_i32_0 = arith.constant 0 : i32
    %c0_i32_1 = arith.constant 0 : i32
    return %arg0, %c0_i32, %c0_i32_0 : i32, i32, i32
  }
  func.func @transform_3(%arg0: i32, %arg1: i32) -> (i32, i32, i32) {
    %c0_i32 = arith.constant 0 : i32
    %c0_i32_0 = arith.constant 0 : i32
    %c0_i32_1 = arith.constant 0 : i32
    return %arg0, %c0_i32, %c0_i32_0 : i32, i32, i32
  }
  func.func @transform_4(%arg0: i32, %arg1: i32) -> (i32, i32, i32) {
    %c0_i32 = arith.constant 0 : i32
    %c0_i32_0 = arith.constant 0 : i32
    %c0_i32_1 = arith.constant 0 : i32
    return %arg1, %c0_i32, %c0_i32_0 : i32, i32, i32
  }
  func.func @transform_5(%arg0: i32, %arg1: i32) -> (i32, i32, i32) {
    %c0_i32 = arith.constant 0 : i32
    %c0_i32_0 = arith.constant 0 : i32
    %c0_i32_1 = arith.constant 0 : i32
    return %arg1, %c0_i32, %c0_i32_0 : i32, i32, i32
  }
  func.func @transform_6(%arg0: i32, %arg1: i32) -> (i32, i32, i32) {
    %c0_i32 = arith.constant 0 : i32
    %c0_i32_0 = arith.constant 0 : i32
    %c0_i32_1 = arith.constant 0 : i32
    return %arg1, %c0_i32, %c0_i32_0 : i32, i32, i32
  }
  func.func @transform_7(%arg0: i32, %arg1: i32) -> (i32, i32) {
    %c0_i32 = arith.constant 0 : i32
    %c0_i32_0 = arith.constant 0 : i32
    %c0_i32_1 = arith.constant 0 : i32
    return %c0_i32, %c0_i32_0 : i32, i32
  }
  func.func @transform_8(%arg0: i32, %arg1: i32) -> (i32, i32, i32) {
    %c0_i32 = arith.constant 0 : i32
    %c0_i32_0 = arith.constant 0 : i32
    %c0_i32_1 = arith.constant 0 : i32
    return %arg0, %c0_i32, %c0_i32_0 : i32, i32, i32
  }
}

</mosaic_0001>

<llo_original>
// kernel: decoder_forward.1
$region0: #{decoder_forward.1}
  #allocation0 [shape = 'u32[]', space=smem, size = 0x4, offset = 0x4, fixed_abs, tag = 'smem constant byte address 0x4 - core index']
  #allocation1 [shape = 'u32[144,128]{1,0:T(1,128)}', space=vmem, size = 0x12000, scoped, tag = 'internal scratch']
  #allocation2 [shape = 'f32[16,128]{1,0:T(8,128)}', space=vmem, size = 0x2000, scoped, tag = 'scratch operand']
  %s0 = inlined_call_operand.hbm [shape: f32[2,16,128], index: 0, kind: input, shape index: {}]
  %s1 = inlined_call_operand.hbm [shape: f32[2,24,128], index: 1, kind: input, shape index: {}]
  %s2 = inlined_call_operand.vmem [shape: s32[2,1,16], index: 2, kind: input, shape index: {}]
  %s3 = inlined_call_operand.vmem [shape: s32[2,1,24], index: 3, kind: input, shape index: {}]
  %s4 = inlined_call_operand.hbm [shape: f32[2,1,2176], index: 4, kind: input, shape index: {}]
  %s5 = inlined_call_operand.hbm [shape: bf16[2,128,1280], index: 5, kind: input, shape index: {}]
  %s6 = inlined_call_operand.hbm [shape: bf16[2,256,128], index: 6, kind: input, shape index: {}]
  %s7 = inlined_call_operand.vmem [shape: f32[2,128], index: 7, kind: input, shape index: {}]
  %s8 = inlined_call_operand.hbm [shape: f32[2,16,128], index: 8, kind: output, shape index: {}]
  %s9 = sld [smem:[#allocation0]]
  $region93: #{decoder_forward.1} parent=0
    _
  %s11 = ssub.s32 1, %s9
  %s12 = scalar_select 0, %s11, %s9
  $region1: #{decoder_forward.1} parent=0
    #allocation3 [shape = 'u8[16384]{0}', space=vmem, size = 0x4000, scoped, tag = 'input window, operand 0']
    #allocation4 [shape = 's32[2]{0}', space=sflag, size = 0x8, scoped, tag = 'scoped memory for decoder_forward.1']
    #allocation5 [shape = 's32[2]{0}', space=sflag, size = 0x8, scoped, tag = 'scoped memory for decoder_forward.1']
    #allocation6 [shape = 'u8[24576]{0}', space=vmem, size = 0x6000, scoped, tag = 'input window, operand 1']
    #allocation7 [shape = 's32[2]{0}', space=sflag, size = 0x8, scoped, tag = 'scoped memory for decoder_forward.1']
    #allocation8 [shape = 'u8[17408]{0}', space=vmem, size = 0x4400, scoped, tag = 'input window, operand 4']
    #allocation9 [shape = 'u8[655360]{0}', space=vmem, size = 0xa0000, scoped, tag = 'input window, operand 5']
    #allocation10 [shape = 's32[2]{0}', space=sflag, size = 0x8, scoped, tag = 'scoped memory for decoder_forward.1']
    #allocation11 [shape = 'u8[131072]{0}', space=vmem, size = 0x20000, scoped, tag = 'input window, operand 6']
    #allocation12 [shape = 'u8[16384]{0}', space=vmem, size = 0x4000, scoped, tag = 'output window, operand 0']
    %13 = vsyncpa [#allocation4], 0
    %s14 = scalar_lea.sflag [#allocation4], 1
    %15 = vsyncpa %s14, 0
    %16 = vsyncpa [#allocation7], 0
    %s17 = scalar_lea.sflag [#allocation7], 1
    %18 = vsyncpa %s17, 0
    %19 = vsyncpa [#allocation10], 0
    %s20 = scalar_lea.sflag [#allocation10], 1
    %21 = vsyncpa %s20, 0
    %22 = vsyncpa [#allocation5], 0
    %s23 = scalar_lea.sflag [#allocation5], 1
    %24 = vsyncpa %s23, 0
    loop: start=0, step=1, limit=6
    $region2: #{decoder_forward.1} parent=1 // loop_pre_header
      _
    $region3: #{decoder_forward.1} parent=1 // loop_header
      %s26 = sphi 0, %s30
      %p27 = scmp.ge.s32.totalorder %s26, 6
      %s33 = sphi 0, %s45
      %s34 = sphi 0, %s41
      %s35 = sphi 0, %s33
      %s36 = sphi 0, %s34
      %s37 = sphi 0, %s35
      %s38 = sphi 0, %s36
      %s48 = sphi 0, %s50
      %s51 = sphi 0, %s48
      %s52 = sphi 0, %s51
      %s68 = sphi 0, %s52
      %s74 = sphi 0, %s76
      %s77 = sphi 0, %s74
      %s78 = sphi 0, %s77
      %s94 = sphi 0, %s78
      %s100 = sphi 0, %s102
      %s103 = sphi 0, %s100
      %s104 = sphi 0, %s103
      %s120 = sphi 0, %s104
      %s126 = sphi 0, %s128
      %s129 = sphi 0, %s126
      %s130 = sphi 0, %s129
      %s146 = sphi 0, %s130
      %s152 = sphi 0, %s154
      %s155 = sphi 0, %s152
      %s156 = sphi 0, %s155
      %s172 = sphi 0, %s156
      %s178 = sphi 0, %s180
      %s181 = sphi 0, %s178
      %s182 = sphi 0, %s181
      %s198 = sphi 0, %s182
      %s204 = sphi 0, %s206
      %s207 = sphi 0, %s204
      %s208 = sphi 0, %s207
      %s224 = sphi 0, %s208
      %s228 = sphi 0, %s228
      %s230 = sphi 0, %s228
      %s231 = sphi 0, %s230
      %s245 = sphi 0, %s231
      %s251 = sphi 0, %s253
      %s254 = sphi 0, %s251
      %s255 = sphi 0, %s254
      %s271 = sphi 0, %s255
    $region4: #{decoder_forward.1} parent=1 // loop_header_branch
      %29 = sbr.rel (%p27) target = $region8
    $region5: #{decoder_forward.1} parent=1 // loop_body
      %s31 = ssub.s32 %s26, 1
      %s32 = ssub.s32 %s26, 2
      %s39 = sadd.s32 1, %s34
      %p40 = scmp.ge.s32.totalorder %s39, 2
      %s41 = scalar_select %p40, 0, %s39
      %s42 = sadd.s32 1, %s33
      %s43 = scalar_select %p40, %s42, %s33
      %p44 = scmp.ge.s32.totalorder %s43, 2
      %s45 = scalar_select %p44, 0, %s43
      %s46 = ssub.s32 %s33, %s45
      %p47 = scmp.eq.s32.totalorder %s46, 0
      %s49 = sadd.s32 %s48, 1
      %s50 = scalar_select %p47, %s48, %s49
      %p53 = pneg %p47
      %p54 = scmp.eq.s32.totalorder %s26, 3
      %p55 = por %p53, %p54
      %p56 = scmp.ne.s32.totalorder %s48, %s51
      %p57 = scmp.eq.s32.totalorder %s26, 0
      %p58 = por %p56, %p57
      %p59 = scmp.ne.s32.totalorder %s48, %s51
      %p60 = scmp.eq.s32.totalorder %s31, 3
      %p61 = por %p59, %p60
      %p62 = scmp.ne.s32.totalorder %s51, %s52
      %p63 = scmp.eq.s32.totalorder %s31, 0
      %p64 = por %p62, %p63
      %p65 = scmp.ne.s32.totalorder %s51, %s52
      %p66 = scmp.eq.s32.totalorder %s32, 3
      %p67 = por %p65, %p66
      %p69 = scmp.ne.s32.totalorder %s52, %s68
      %p70 = scmp.eq.s32.totalorder %s32, 0
      %p71 = por %p69, %p70
      %s72 = ssub.s32 %s33, %s45
      %p73 = scmp.eq.s32.totalorder %s72, 0
      %s75 = sadd.s32 %s74, 1
      %s76 = scalar_select %p73, %s74, %s75
      %p79 = pneg %p73
      %p80 = scmp.eq.s32.totalorder %s26, 3
      %p81 = por %p79, %p80
      %p82 = scmp.ne.s32.totalorder %s74, %s77
      %p83 = scmp.eq.s32.totalorder %s26, 0
      %p84 = por %p82, %p83
      %p85 = scmp.ne.s32.totalorder %s74, %s77
      %p86 = scmp.eq.s32.totalorder %s31, 3
      %p87 = por %p85, %p86
      %p88 = scmp.ne.s32.totalorder %s77, %s78
      %p89 = scmp.eq.s32.totalorder %s31, 0
      %p90 = por %p88, %p89
      %p91 = scmp.ne.s32.totalorder %s77, %s78
      %p92 = scmp.eq.s32.totalorder %s32, 3
      %p93 = por %p91, %p92
      %p95 = scmp.ne.s32.totalorder %s78, %s94
      %p96 = scmp.eq.s32.totalorder %s32, 0
      %p97 = por %p95, %p96
      %s98 = ssub.s32 %s33, %s45
      %p99 = scmp.eq.s32.totalorder %s98, 0
      %s101 = sadd.s32 %s100, 1
      %s102 = scalar_select %p99, %s100, %s101
      %p105 = pneg %p99
      %p106 = scmp.eq.s32.totalorder %s26, 3
      %p107 = por %p105, %p106
      %p108 = scmp.ne.s32.totalorder %s100, %s103
      %p109 = scmp.eq.s32.totalorder %s26, 0
      %p110 = por %p108, %p109
      %p111 = scmp.ne.s32.totalorder %s100, %s103
      %p112 = scmp.eq.s32.totalorder %s31, 3
      %p113 = por %p111, %p112
      %p114 = scmp.ne.s32.totalorder %s103, %s104
      %p115 = scmp.eq.s32.totalorder %s31, 0
      %p116 = por %p114, %p115
      %p117 = scmp.ne.s32.totalorder %s103, %s104
      %p118 = scmp.eq.s32.totalorder %s32, 3
      %p119 = por %p117, %p118
      %p121 = scmp.ne.s32.totalorder %s104, %s120
      %p122 = scmp.eq.s32.totalorder %s32, 0
      %p123 = por %p121, %p122
      %s124 = ssub.s32 %s33, %s45
      %p125 = scmp.eq.s32.totalorder %s124, 0
      %s127 = sadd.s32 %s126, 1
      %s128 = scalar_select %p125, %s126, %s127
      %p131 = pneg %p125
      %p132 = scmp.eq.s32.totalorder %s26, 3
      %p133 = por %p131, %p132
      %p134 = scmp.ne.s32.totalorder %s126, %s129
      %p135 = scmp.eq.s32.totalorder %s26, 0
      %p136 = por %p134, %p135
      %p137 = scmp.ne.s32.totalorder %s126, %s129
      %p138 = scmp.eq.s32.totalorder %s31, 3
      %p139 = por %p137, %p138
      %p140 = scmp.ne.s32.totalorder %s129, %s130
      %p141 = scmp.eq.s32.totalorder %s31, 0
      %p142 = por %p140, %p141
      %p143 = scmp.ne.s32.totalorder %s129, %s130
      %p144 = scmp.eq.s32.totalorder %s32, 3
      %p145 = por %p143, %p144
      %p147 = scmp.ne.s32.totalorder %s130, %s146
      %p148 = scmp.eq.s32.totalorder %s32, 0
      %p149 = por %p147, %p148
      %s150 = ssub.s32 %s34, %s41
      %p151 = scmp.eq.s32.totalorder %s150, 0
      %s153 = sadd.s32 %s152, 1
      %s154 = scalar_select %p151, %s152, %s153
      %p157 = pneg %p151
      %p158 = scmp.eq.s32.totalorder %s26, 3
      %p159 = por %p157, %p158
      %p160 = scmp.ne.s32.totalorder %s152, %s155
      %p161 = scmp.eq.s32.totalorder %s26, 0
      %p162 = por %p160, %p161
      %p163 = scmp.ne.s32.totalorder %s152, %s155
      %p164 = scmp.eq.s32.totalorder %s31, 3
      %p165 = por %p163, %p164
      %p166 = scmp.ne.s32.totalorder %s155, %s156
      %p167 = scmp.eq.s32.totalorder %s31, 0
      %p168 = por %p166, %p167
      %p169 = scmp.ne.s32.totalorder %s155, %s156
      %p170 = scmp.eq.s32.totalorder %s32, 3
      %p171 = por %p169, %p170
      %p173 = scmp.ne.s32.totalorder %s156, %s172
      %p174 = scmp.eq.s32.totalorder %s32, 0
      %p175 = por %p173, %p174
      %s176 = ssub.s32 %s34, %s41
      %p177 = scmp.eq.s32.totalorder %s176, 0
      %s179 = sadd.s32 %s178, 1
      %s180 = scalar_select %p177, %s178, %s179
      %p183 = pneg %p177
      %p184 = scmp.eq.s32.totalorder %s26, 3
      %p185 = por %p183, %p184
      %p186 = scmp.ne.s32.totalorder %s178, %s181
      %p187 = scmp.eq.s32.totalorder %s26, 0
      %p188 = por %p186, %p187
      %p189 = scmp.ne.s32.totalorder %s178, %s181
      %p190 = scmp.eq.s32.totalorder %s31, 3
      %p191 = por %p189, %p190
      %p192 = scmp.ne.s32.totalorder %s181, %s182
      %p193 = scmp.eq.s32.totalorder %s31, 0
      %p194 = por %p192, %p193
      %p195 = scmp.ne.s32.totalorder %s181, %s182
      %p196 = scmp.eq.s32.totalorder %s32, 3
      %p197 = por %p195, %p196
      %p199 = scmp.ne.s32.totalorder %s182, %s198
      %p200 = scmp.eq.s32.totalorder %s32, 0
      %p201 = por %p199, %p200
      %s202 = ssub.s32 %s34, %s41
      %p203 = scmp.eq.s32.totalorder %s202, 0
      %s205 = sadd.s32 %s204, 1
      %s206 = scalar_select %p203, %s204, %s205
      %p209 = pneg %p203
      %p210 = scmp.eq.s32.totalorder %s26, 3
      %p211 = por %p209, %p210
      %p212 = scmp.ne.s32.totalorder %s204, %s207
      %p213 = scmp.eq.s32.totalorder %s26, 0
      %p214 = por %p212, %p213
      %p215 = scmp.ne.s32.totalorder %s204, %s207
      %p216 = scmp.eq.s32.totalorder %s31, 3
      %p217 = por %p215, %p216
      %p218 = scmp.ne.s32.totalorder %s207, %s208
      %p219 = scmp.eq.s32.totalorder %s31, 0
      %p220 = por %p218, %p219
      %p221 = scmp.ne.s32.totalorder %s207, %s208
      %p222 = scmp.eq.s32.totalorder %s32, 3
      %p223 = por %p221, %p222
      %p225 = scmp.ne.s32.totalorder %s208, %s224
      %p226 = scmp.eq.s32.totalorder %s32, 0
      %p227 = por %p225, %p226
      %s229 = sadd.s32 %s228, 1
      %p232 = scmp.eq.s32.totalorder %s26, 3
      %p233 = scmp.ne.s32.totalorder %s228, %s230
      %p234 = scmp.eq.s32.totalorder %s26, 0
      %p235 = por %p233, %p234
      %p236 = scmp.ne.s32.totalorder %s228, %s230
      %p237 = scmp.eq.s32.totalorder %s31, 3
      %p238 = por %p236, %p237
      %p239 = scmp.ne.s32.totalorder %s230, %s231
      %p240 = scmp.eq.s32.totalorder %s31, 0
      %p241 = por %p239, %p240
      %p242 = scmp.ne.s32.totalorder %s230, %s231
      %p243 = scmp.eq.s32.totalorder %s32, 3
      %p244 = por %p242, %p243
      %p246 = scmp.ne.s32.totalorder %s231, %s245
      %p247 = scmp.eq.s32.totalorder %s32, 0
      %p248 = por %p246, %p247
      %s249 = ssub.s32 %s33, %s45
      %p250 = scmp.eq.s32.totalorder %s249, 0
      %s252 = sadd.s32 %s251, 1
      %s253 = scalar_select %p250, %s251, %s252
      %p256 = pneg %p250
      %p257 = scmp.eq.s32.totalorder %s26, 3
      %p258 = por %p256, %p257
      %p259 = scmp.ne.s32.totalorder %s251, %s254
      %p260 = scmp.eq.s32.totalorder %s26, 0
      %p261 = por %p259, %p260
      %p262 = scmp.ne.s32.totalorder %s251, %s254
      %p263 = scmp.eq.s32.totalorder %s31, 3
      %p264 = por %p262, %p263
      %p265 = scmp.ne.s32.totalorder %s254, %s255
      %p266 = scmp.eq.s32.totalorder %s31, 0
      %p267 = por %p265, %p266
      %p268 = scmp.ne.s32.totalorder %s254, %s255
      %p269 = scmp.eq.s32.totalorder %s32, 3
      %p270 = por %p268, %p269
      %p272 = scmp.ne.s32.totalorder %s255, %s271
      %p273 = scmp.eq.s32.totalorder %s32, 0
      %p274 = por %p272, %p273
      %p275 = scmp.le.s32.totalorder 1, %s26
      %p276 = scmp.lt.s32.totalorder %s26, 5
      %p277 = pnand %p275, %p276
      %p278 = pneg %p277
      // Predicated region
      $region9: #{decoder_forward.1} parent=5 // pred_check
        _
      $region10: #{decoder_forward.1} parent=5 // pred_check_branch
        %280 = sbr.rel (%p277) target = $region12
      $region11: #{decoder_forward.1} parent=5 // pred_region
        %s281 = ssub.s32 %s26, 1
        // Predicated region
        $region13: #{decoder_forward.1} parent=11 // pred_check
          %p282 = pneg %p241
        $region14: #{decoder_forward.1} parent=11 // pred_check_branch
          %284 = sbr.rel (%p282) target = $region16
        $region15: #{decoder_forward.1} parent=11 // pred_region
          _
        $region16: #{decoder_forward.1} parent=11 // pred_fallthru
          _
      $region12: #{decoder_forward.1} parent=5 // pred_fallthru
        _
      %p285 = scmp.lt.s32.totalorder %s26, 4
      // Predicated region
      $region17: #{decoder_forward.1} parent=5 // pred_check
        %p286 = pneg %p285
      $region18: #{decoder_forward.1} parent=5 // pred_check_branch
        %288 = sbr.rel (%p286) target = $region20
      $region19: #{decoder_forward.1} parent=5 // pred_region
        // Predicated region
        $region21: #{decoder_forward.1} parent=19 // pred_check
          %p289 = pneg %p58
        $region22: #{decoder_forward.1} parent=19 // pred_check_branch
          %291 = sbr.rel (%p289) target = $region24
        $region23: #{decoder_forward.1} parent=19 // pred_region
          %s292 = sand.u32 %s48, 1
          %s293 = scalar_lea.sflag [#allocation4], %s292
          %s294 = sand.u32 %s48, 1
          %s295 = smul.addr %s294, 16
          %s296 = scalar_lea.vmem [#allocation3], %s295
          %s298 = ssub.s32 256, 256
          %299 = vsyncadd %s293, %s298
          %s300 = smul.addr %s33, 2
          %s301 = smul.addr %s300, 128
          %s302 = scalar_lea.hbm %s0, %s301
          %s303 = sshll.u32 %s296, 4
          %s304 = int_to_ptr.vmem [resolvable:$true] %s303
          %309 = dma.hbm_to_vmem [thread:$0]  %s302, 256, %s304, %s293, 128, 128, 8
        $region24: #{decoder_forward.1} parent=19 // pred_fallthru
          _
        // Predicated region
        $region25: #{decoder_forward.1} parent=19 // pred_check
          %p310 = pneg %p84
        $region26: #{decoder_forward.1} parent=19 // pred_check_branch
          %312 = sbr.rel (%p310) target = $region28
        $region27: #{decoder_forward.1} parent=19 // pred_region
          %s313 = sand.u32 %s26, 1
          %s314 = scalar_lea.sflag [#allocation7], %s313
          %s315 = sand.u32 %s74, 1
          %s316 = smul.addr %s315, 24
          %s317 = scalar_lea.vmem [#allocation6], %s316
          %s319 = ssub.s32 384, 384
          %320 = vsyncadd %s314, %s319
          %s321 = smul.addr %s33, 3
          %s322 = smul.addr %s321, 128
          %s323 = scalar_lea.hbm %s1, %s322
          %s324 = sshll.u32 %s317, 4
          %s325 = int_to_ptr.vmem [resolvable:$true] %s324
          %330 = dma.hbm_to_vmem [thread:$0]  %s323, 384, %s325, %s314, 128, 128, 8
        $region28: #{decoder_forward.1} parent=19 // pred_fallthru
          _
        // Predicated region
        $region29: #{decoder_forward.1} parent=19 // pred_check
          %p331 = pneg %p110
        $region30: #{decoder_forward.1} parent=19 // pred_check_branch
          %333 = sbr.rel (%p331) target = $region32
        $region31: #{decoder_forward.1} parent=19 // pred_region
          %p334 = scmp.lt.s32.totalorder %s33, 1
          %s335 = scalar_select %p334, %s33, 1
          %s336 = scalar_lea.vmem %s2, %s335
        $region32: #{decoder_forward.1} parent=19 // pred_fallthru
          _
        // Predicated region
        $region33: #{decoder_forward.1} parent=19 // pred_check
          %p337 = pneg %p136
        $region34: #{decoder_forward.1} parent=19 // pred_check_branch
          %339 = sbr.rel (%p337) target = $region36
        $region35: #{decoder_forward.1} parent=19 // pred_region
          %p340 = scmp.lt.s32.totalorder %s33, 1
          %s341 = scalar_select %p340, %s33, 1
          %s342 = scalar_lea.vmem %s3, %s341
        $region36: #{decoder_forward.1} parent=19 // pred_fallthru
          _
        // Predicated region
        $region37: #{decoder_forward.1} parent=19 // pred_check
          %p343 = pneg %p162
        $region38: #{decoder_forward.1} parent=19 // pred_check_branch
          %345 = sbr.rel (%p343) target = $region40
        $region39: #{decoder_forward.1} parent=19 // pred_region
          %s346 = sand.u32 %s26, 1
          %s347 = scalar_lea.sflag [#allocation7], %s346
          %s348 = sand.u32 %s152, 1
          %s349 = smul.addr %s348, 17
          %s350 = scalar_lea.vmem [#allocation8], %s349
          %s352 = ssub.s32 272, 272
          %353 = vsyncadd %s347, %s352
          %s354 = smul.addr %s34, 17
          %s355 = smul.addr %s354, 16
          %s356 = scalar_lea.hbm %s4, %s355
          %s358 = sshll.u32 %s350, 4
          %s359 = int_to_ptr.vmem [resolvable:$true] %s358
          %361 = dma.hbm_to_vmem [thread:$0]  %s356, 272, %s359, %s347
        $region40: #{decoder_forward.1} parent=19 // pred_fallthru
          _
        // Predicated region
        $region41: #{decoder_forward.1} parent=19 // pred_check
          %p362 = pneg %p188
        $region42: #{decoder_forward.1} parent=19 // pred_check_branch
          %364 = sbr.rel (%p362) target = $region44
        $region43: #{decoder_forward.1} parent=19 // pred_region
          %s365 = sand.u32 %s26, 1
          %s366 = scalar_lea.sflag [#allocation10], %s365
          %s367 = sand.u32 %s178, 1
          %s368 = smul.addr %s367, 640
          %s369 = scalar_lea.vmem [#allocation9], %s368
          %s371 = ssub.s32 10240, 10240
          %372 = vsyncadd %s366, %s371
          %s373 = smul.addr %s34, 160
          %s374 = smul.addr %s373, 64
          %s375 = scalar_lea.hbm %s5, %s374
          %s376 = sshll.u32 %s369, 4
          %s377 = int_to_ptr.vmem [resolvable:$true] %s376
          %382 = dma.hbm_to_vmem [thread:$0]  %s375, 10240, %s377, %s366, 640, 640, 40
        $region44: #{decoder_forward.1} parent=19 // pred_fallthru
          _
        // Predicated region
        $region45: #{decoder_forward.1} parent=19 // pred_check
          %p383 = pneg %p214
        $region46: #{decoder_forward.1} parent=19 // pred_check_branch
          %385 = sbr.rel (%p383) target = $region48
        $region47: #{decoder_forward.1} parent=19 // pred_region
          %s386 = sand.u32 %s26, 1
          %s387 = scalar_lea.sflag [#allocation10], %s386
          %s388 = sand.u32 %s204, 1
          %s389 = smul.addr %s388, 128
          %s390 = scalar_lea.vmem [#allocation11], %s389
          %s392 = ssub.s32 2048, 2048
          %393 = vsyncadd %s387, %s392
          %s394 = smul.addr %s34, 32
          %s395 = smul.addr %s394, 64
          %s396 = scalar_lea.hbm %s6, %s395
          %s397 = sshll.u32 %s390, 4
          %s398 = int_to_ptr.vmem [resolvable:$true] %s397
          %403 = dma.hbm_to_vmem [thread:$0]  %s396, 2048, %s398, %s387, 64, 64, 4
        $region48: #{decoder_forward.1} parent=19 // pred_fallthru
          _
      $region20: #{decoder_forward.1} parent=5 // pred_fallthru
        _
      %p404 = scmp.le.s32.totalorder 1, %s26
      %p405 = scmp.lt.s32.totalorder %s26, 5
      %p406 = pnand %p404, %p405
      %p407 = pneg %p406
      // Predicated region
      $region49: #{decoder_forward.1} parent=5 // pred_check
        _
      $region50: #{decoder_forward.1} parent=5 // pred_check_branch
        %409 = sbr.rel (%p406) target = $region52
      $region51: #{decoder_forward.1} parent=5 // pred_region
        %s410 = ssub.s32 %s26, 1
        %s411 = sand.u32 %s51, 1
        %s412 = scalar_lea.sflag [#allocation4], %s411
        %s413 = sand.u32 %s51, 1
        %s414 = smul.addr %s413, 16
        %s415 = scalar_lea.vmem [#allocation3], %s414
        // Predicated region
        $region53: #{decoder_forward.1} parent=51 // pred_check
          %p416 = pneg %p64
        $region54: #{decoder_forward.1} parent=51 // pred_check_branch
          %418 = sbr.rel (%p416) target = $region56
        $region55: #{decoder_forward.1} parent=51 // pred_region
          %419 = dma.done %s412, 256
        $region56: #{decoder_forward.1} parent=51 // pred_fallthru
          _
        %s420 = sand.u32 %s31, 1
        %s421 = scalar_lea.sflag [#allocation7], %s420
        %s422 = sand.u32 %s77, 1
        %s423 = smul.addr %s422, 24
        %s424 = scalar_lea.vmem [#allocation6], %s423
        // Predicated region
        $region57: #{decoder_forward.1} parent=51 // pred_check
          %p425 = pneg %p90
        $region58: #{decoder_forward.1} parent=51 // pred_check_branch
          %427 = sbr.rel (%p425) target = $region60
        $region59: #{decoder_forward.1} parent=51 // pred_region
          %428 = dma.done %s421, 384
        $region60: #{decoder_forward.1} parent=51 // pred_fallthru
          _
        %s429 = sand.u32 %s31, 1
        %s430 = scalar_lea.sflag [#allocation7], %s429
        %s431 = sand.u32 %s155, 1
        %s432 = smul.addr %s431, 17
        %s433 = scalar_lea.vmem [#allocation8], %s432
        // Predicated region
        $region61: #{decoder_forward.1} parent=51 // pred_check
          %p434 = pneg %p168
        $region62: #{decoder_forward.1} parent=51 // pred_check_branch
          %436 = sbr.rel (%p434) target = $region64
        $region63: #{decoder_forward.1} parent=51 // pred_region
          %437 = dma.done %s430, 272
        $region64: #{decoder_forward.1} parent=51 // pred_fallthru
          _
        %s438 = sand.u32 %s31, 1
        %s439 = scalar_lea.sflag [#allocation10], %s438
        %s440 = sand.u32 %s181, 1
        %s441 = smul.addr %s440, 640
        %s442 = scalar_lea.vmem [#allocation9], %s441
        // Predicated region
        $region65: #{decoder_forward.1} parent=51 // pred_check
          %p443 = pneg %p194
        $region66: #{decoder_forward.1} parent=51 // pred_check_branch
          %445 = sbr.rel (%p443) target = $region68
        $region67: #{decoder_forward.1} parent=51 // pred_region
          %446 = dma.done %s439, 10240
        $region68: #{decoder_forward.1} parent=51 // pred_fallthru
          _
        %s447 = sand.u32 %s31, 1
        %s448 = scalar_lea.sflag [#allocation10], %s447
        %s449 = sand.u32 %s207, 1
        %s450 = smul.addr %s449, 128
        %s451 = scalar_lea.vmem [#allocation11], %s450
        // Predicated region
        $region69: #{decoder_forward.1} parent=51 // pred_check
          %p452 = pneg %p220
        $region70: #{decoder_forward.1} parent=51 // pred_check_branch
          %454 = sbr.rel (%p452) target = $region72
        $region71: #{decoder_forward.1} parent=51 // pred_region
          %455 = dma.done %s448, 2048
        $region72: #{decoder_forward.1} parent=51 // pred_fallthru
          _
        %s456 = sand.u32 %s51, 1
        %s457 = scalar_lea.sflag [#allocation4], %s456
        %s458 = sand.u32 %s51, 1
        %s459 = smul.addr %s458, 16
        %s460 = scalar_lea.vmem [#allocation3], %s459
        %p461 = pneg %p64
        %p462 = pneg %p61
        %s463 = sand.u32 %s31, 1
        %s464 = scalar_lea.sflag [#allocation7], %s463
        %s465 = sand.u32 %s77, 1
        %s466 = smul.addr %s465, 24
        %s467 = scalar_lea.vmem [#allocation6], %s466
        %p468 = pneg %p90
        %p469 = pneg %p87
        %p470 = scmp.lt.s32.totalorder %s35, 1
        %s471 = scalar_select %p470, %s35, 1
        %s472 = scalar_lea.vmem %s2, %s471
        %p473 = pneg %p116
        %p474 = pneg %p113
        %p475 = scmp.lt.s32.totalorder %s35, 1
        %s476 = scalar_select %p475, %s35, 1
        %s477 = scalar_lea.vmem %s3, %s476
        %p478 = pneg %p142
        %p479 = pneg %p139
        %s480 = sand.u32 %s31, 1
        %s481 = scalar_lea.sflag [#allocation7], %s480
        %s482 = sand.u32 %s155, 1
        %s483 = smul.addr %s482, 17
        %s484 = scalar_lea.vmem [#allocation8], %s483
        %p485 = pneg %p168
        %p486 = pneg %p165
        %s487 = sand.u32 %s31, 1
        %s488 = scalar_lea.sflag [#allocation10], %s487
        %s489 = sand.u32 %s181, 1
        %s490 = smul.addr %s489, 640
        %s491 = scalar_lea.vmem [#allocation9], %s490
        %p492 = pneg %p194
        %p493 = pneg %p191
        %s494 = sand.u32 %s31, 1
        %s495 = scalar_lea.sflag [#allocation10], %s494
        %s496 = sand.u32 %s207, 1
        %s497 = smul.addr %s496, 128
        %s498 = scalar_lea.vmem [#allocation11], %s497
        %p499 = pneg %p220
        %p500 = pneg %p217
        %p501 = pneg %p241
        %p502 = pneg %p238
        %p503 = pneg %p267
        %p504 = pneg %p264
        %s505 = sand.u32 %s254, 1
        %s506 = scalar_lea.sflag [#allocation5], %s505
        %s507 = sand.u32 %s254, 1
        %s508 = smul.addr %s507, 16
        %s509 = scalar_lea.vmem [#allocation12], %s508
        %p510 = scmp.lt.s32.totalorder %s35, 1
        %s511 = scalar_select %p510, %s35, 1
        %s512 = scalar_lea.vmem %s2, %s511
        %p513 = scmp.lt.s32.totalorder %s35, 1
        %s514 = scalar_select %p513, %s35, 1
        %s515 = scalar_lea.vmem %s3, %s514
        %p517 = scmp.eq.s32.totalorder %s36, 0
        // Predicated region
        $region73: #{decoder_forward.1} parent=51 // pred_check
          %p518 = pneg %p517
        $region74: #{decoder_forward.1} parent=51 // pred_check_branch
          %520 = sbr.rel (%p518) target = $region76
        $region75: #{decoder_forward.1} parent=51 // pred_region
          %v521 = vld [vmem:[%s415] sm:$0xff]
          %v522 = vld [vmem:[%s415 + $0x8] sm:$0xff]
          %523 = vst [vmem:[#allocation2] sm:$0xff] %v521
          %524 = vst [vmem:[#allocation2 + $0x8] sm:$0xff] %v522
        $region76: #{decoder_forward.1} parent=51 // pred_fallthru
          _
        %v525 = vld [vmem:[#allocation2] sm:$0xff]
        %v526 = vld [vmem:[#allocation2 + $0x8] sm:$0xff]
        %v527 = vld [vmem:[%s424] sm:$0xff]
        %v528 = vld [vmem:[%s424 + $0x8] sm:$0xff]
        %v529 = vld [vmem:[%s424 + $0x10] sm:$0xff]
        %v530 = vpack.c.bf16 %v528, %v527
        %v531 = vpack.c.bf16 %v529, %v529
        %v532 = vld [vmem:[%s512] sm:$0x1]
        %vm533 = vcmp.gt.s32.totalorder %v532, 0
        %v534 = vld [vmem:[%s515] sm:$0x1]
        %vm535 = vcmp.gt.s32.totalorder %v534, 0
        %v536 = vlaneseq
        %v537 = vshrl.u32 %v536, 7
        %v538 = vadd.s32 %v537, 8
        %v539 = vlaneseq
        %v540 = vand.u32 %v539, 127
        %vm541 = vcmp.le.s32.totalorder %v540, %v537
        %vm542 = vcmp.le.s32.totalorder %v540, %v538
        %v543 = vsel %vm533, 1, 0
        %v544 = vlaneseq
        %v545 = vshrl.u32 %v544, 7
        %v546 = vsub.s32 0, %v545
        %v547 = vrot.slane %v543, %v546
        %vm548 = vcmp.eq.s32.totalorder %v547, 1
        %vm549 = vmand %vm541, %vm548
        %vm550 = vmand %vm542, %vm548
        %v551 = vsel %vm535, 1, 0
        %v552 = vlaneseq
        %v553 = vshrl.u32 %v552, 7
        %v554 = vsub.s32 0, %v553
        %v555 = vrot.slane %v551, %v554
        %vm556 = vcmp.eq.s32.totalorder %v555, 1
        %v557 = vld [vmem:[%s433] sm:$0x1]
        %v558 = vld [vmem:[%s433 + $0x1] sm:$0x1]
        %559 = vadd.xlane.f32.xlu0 %v525
        %v560 = vpop.xlane.xlu0 %559
        %561 = vadd.xlane.f32.xlu0 %v526
        %v562 = vpop.xlane.xlu0 %561
        %v563 = vrcp.pop 128.0
        %v564 = vmul.f32 %v560, %v563
        %v565 = vmul.f32 %v562, %v563
        %v566 = vsub.f32 %v525, %v564
        %v567 = vsub.f32 %v526, %v565
        %v568 = vmul.f32 %v566, %v566
        %v569 = vmul.f32 %v567, %v567
        %570 = vadd.xlane.f32.xlu0 %v568
        %v571 = vpop.xlane.xlu0 %570
        %572 = vadd.xlane.f32.xlu0 %v569
        %v573 = vpop.xlane.xlu0 %572
        %v574 = vmul.f32 %v571, %v563
        %v575 = vmul.f32 %v573, %v563
        %v576 = vadd.f32 %v574, 1e-05
        %v577 = vadd.f32 %v575, 1e-05
        %v578 = vrsqrt.pop %v576
        %v579 = vrsqrt.pop %v577
        %v580 = vmul.f32 %v566, %v578
        %v581 = vmul.f32 %v567, %v579
        %v583 = vlaneseq
        %v584 = vshrl.u32 %v583, 7
        %v585 = vsub.s32 0, %v584
        %v586 = vrot.slane %v557, %v585
        %v588 = vmul.f32 %v580, %v586
        %v589 = vmul.f32 %v581, %v586
        %v591 = vlaneseq
        %v592 = vshrl.u32 %v591, 7
        %v593 = vsub.s32 0, %v592
        %v594 = vrot.slane %v558, %v593
        %v596 = vadd.f32 %v588, %v594
        %v597 = vadd.f32 %v589, %v594
        %v598 = vpack.c.bf16 %v597, %v596
        %v599 = vld [vmem:[%s442] sm:$0xff]
        %v600 = vld [vmem:[%s442 + $0x8] sm:$0xf]
        %v601 = vld [vmem:[%s442 + $0x28] sm:$0xff]
        %v602 = vld [vmem:[%s442 + $0x30] sm:$0xf]
        %v603 = vld [vmem:[%s442 + $0x50] sm:$0xff]
        %v604 = vld [vmem:[%s442 + $0x58] sm:$0xf]
        %v605 = vld [vmem:[%s442 + $0x78] sm:$0xff]
        %v606 = vld [vmem:[%s442 + $0x80] sm:$0xf]
        %v607 = vld [vmem:[%s442 + $0xa0] sm:$0xff]
        %v608 = vld [vmem:[%s442 + $0xa8] sm:$0xf]
        %v609 = vld [vmem:[%s442 + $0xc8] sm:$0xff]
        %v610 = vld [vmem:[%s442 + $0xd0] sm:$0xf]
        %v611 = vld [vmem:[%s442 + $0xf0] sm:$0xff]
        %v612 = vld [vmem:[%s442 + $0xf8] sm:$0xf]
        %v613 = vld [vmem:[%s442 + $0x118] sm:$0xff]
        %v614 = vld [vmem:[%s442 + $0x120] sm:$0xf]
        %v615 = vld [vmem:[%s442 + $0x140] sm:$0xff]
        %v616 = vld [vmem:[%s442 + $0x148] sm:$0xf]
        %v617 = vld [vmem:[%s442 + $0x168] sm:$0xff]
        %v618 = vld [vmem:[%s442 + $0x170] sm:$0xf]
        %v619 = vld [vmem:[%s442 + $0x190] sm:$0xff]
        %v620 = vld [vmem:[%s442 + $0x198] sm:$0xf]
        %v621 = vld [vmem:[%s442 + $0x1b8] sm:$0xff]
        %v622 = vld [vmem:[%s442 + $0x1c0] sm:$0xf]
        %v623 = vld [vmem:[%s442 + $0x1e0] sm:$0xff]
        %v624 = vld [vmem:[%s442 + $0x1e8] sm:$0xf]
        %v625 = vld [vmem:[%s442 + $0x208] sm:$0xff]
        %v626 = vld [vmem:[%s442 + $0x210] sm:$0xf]
        %v627 = vld [vmem:[%s442 + $0x230] sm:$0xff]
        %v628 = vld [vmem:[%s442 + $0x238] sm:$0xf]
        %v629 = vld [vmem:[%s442 + $0x258] sm:$0xff]
        %v630 = vld [vmem:[%s442 + $0x260] sm:$0xf]
        %v631 = vld [vmem:[%s433 + $0x6] sm:$0x7]
        %v633 = vlaneseq
        %v634 = vshrl.u32 %v633, 7
        %v635 = vsub.s32 0, %v634
        %v636 = vrot.slane %v631, %v635
        %v637 = vlaneseq
        %v638 = vshrl.u32 %v637, 7
        %v639 = vsub.s32 1, %v638
        %v640 = vrot.slane %v631, %v639
        %v641 = vlaneseq
        %v642 = vshrl.u32 %v641, 7
        %v643 = vsub.s32 2, %v642
        %v644 = vrot.slane %v631, %v643
        %v680 = vunpack.c.l.b16 %v599
        %v681 = vunpack.c.h.b16 %v599
        %v682 = vunpack.c.l.b16 %v600
        %v683 = vunpack.c.l.b16 %v601
        %v684 = vunpack.c.h.b16 %v601
        %v685 = vunpack.c.l.b16 %v602
        %v686 = vunpack.c.l.b16 %v603
        %v687 = vunpack.c.h.b16 %v603
        %v688 = vunpack.c.l.b16 %v604
        %v689 = vunpack.c.l.b16 %v605
        %v690 = vunpack.c.h.b16 %v605
        %v691 = vunpack.c.l.b16 %v606
        %v692 = vunpack.c.l.b16 %v607
        %v693 = vunpack.c.h.b16 %v607
        %v694 = vunpack.c.l.b16 %v608
        %v695 = vunpack.c.l.b16 %v609
        %v696 = vunpack.c.h.b16 %v609
        %v697 = vunpack.c.l.b16 %v610
        %v698 = vunpack.c.l.b16 %v611
        %v699 = vunpack.c.h.b16 %v611
        %v700 = vunpack.c.l.b16 %v612
        %v701 = vunpack.c.l.b16 %v613
        %v702 = vunpack.c.h.b16 %v613
        %v703 = vunpack.c.l.b16 %v614
        %v704 = vunpack.c.l.b16 %v615
        %v705 = vunpack.c.h.b16 %v615
        %v706 = vunpack.c.l.b16 %v616
        %v707 = vunpack.c.l.b16 %v617
        %v708 = vunpack.c.h.b16 %v617
        %v709 = vunpack.c.l.b16 %v618
        %v710 = vunpack.c.l.b16 %v619
        %v711 = vunpack.c.h.b16 %v619
        %v712 = vunpack.c.l.b16 %v620
        %v713 = vunpack.c.l.b16 %v621
        %v714 = vunpack.c.h.b16 %v621
        %v715 = vunpack.c.l.b16 %v622
        %v716 = vunpack.c.l.b16 %v623
        %v717 = vunpack.c.h.b16 %v623
        %v718 = vunpack.c.l.b16 %v624
        %v719 = vunpack.c.l.b16 %v625
        %v720 = vunpack.c.h.b16 %v625
        %v721 = vunpack.c.l.b16 %v626
        %v722 = vunpack.c.l.b16 %v627
        %v723 = vunpack.c.h.b16 %v627
        %v724 = vunpack.c.l.b16 %v628
        %v725 = vunpack.c.l.b16 %v629
        %v726 = vunpack.c.h.b16 %v629
        %v727 = vunpack.c.l.b16 %v630
        %v728 = vpack.c.b16 %v683, %v680
        %v729 = vpack.c.b16 %v684, %v681
        %v730 = vpack.c.b16 %v685, %v682
        %v731 = vpack.c.b16 %v689, %v686
        %v732 = vpack.c.b16 %v690, %v687
        %v733 = vpack.c.b16 %v691, %v688
        %v734 = vpack.c.b16 %v695, %v692
        %v735 = vpack.c.b16 %v696, %v693
        %v736 = vpack.c.b16 %v697, %v694
        %v737 = vpack.c.b16 %v701, %v698
        %v738 = vpack.c.b16 %v702, %v699
        %v739 = vpack.c.b16 %v703, %v700
        %v740 = vpack.c.b16 %v707, %v704
        %v741 = vpack.c.b16 %v708, %v705
        %v742 = vpack.c.b16 %v709, %v706
        %v743 = vpack.c.b16 %v713, %v710
        %v744 = vpack.c.b16 %v714, %v711
        %v745 = vpack.c.b16 %v715, %v712
        %v746 = vpack.c.b16 %v719, %v716
        %v747 = vpack.c.b16 %v720, %v717
        %v748 = vpack.c.b16 %v721, %v718
        %v749 = vpack.c.b16 %v725, %v722
        %v750 = vpack.c.b16 %v726, %v723
        %v751 = vpack.c.b16 %v727, %v724
        %776 = vmatprep.subr.bf16.mxu0 %v729
        %777 = vmatpush1.bf16.msra.mxu0 %v728
        %778 = vmatprep.subr.bf16.mxu0 %v732
        %779 = vmatpush1.bf16.msra.mxu0 %v731
        %780 = vmatprep.subr.bf16.mxu0 %v735
        %781 = vmatpush1.bf16.msra.mxu0 %v734
        %782 = vmatprep.subr.bf16.mxu0 %v738
        %783 = vmatpush1.bf16.msra.mxu0 %v737
        %784 = vmatprep.subr.bf16.mxu0 %v741
        %785 = vmatpush1.bf16.msra.mxu0 %v740
        %786 = vmatprep.subr.bf16.mxu0 %v744
        %787 = vmatpush1.bf16.msra.mxu0 %v743
        %788 = vmatprep.subr.bf16.mxu0 %v747
        %789 = vmatpush1.bf16.msra.mxu0 %v746
        %790 = vmatprep.subr.bf16.mxu0 %v750
        %791 = vmatpush1.bf16.msra.mxu0 %v749
        %792 = vmatprep.subr.bf16.mxu0 0
        %793 = vmatpush1.bf16.msra.mxu0 0
        %794 = vmatprep.subr.bf16.mxu0 0
        %795 = vmatpush1.bf16.msra.mxu0 0
        %796 = vmatprep.subr.bf16.mxu0 0
        %797 = vmatpush1.bf16.msra.mxu0 0
        %798 = vmatprep.subr.bf16.mxu0 0
        %799 = vmatpush1.bf16.msra.mxu0 0
        %800 = vmatprep.subr.bf16.mxu0 0
        %801 = vmatpush1.bf16.msra.mxu0 0
        %802 = vmatprep.subr.bf16.mxu0 0
        %803 = vmatpush1.bf16.msra.mxu0 0
        %804 = vmatprep.subr.bf16.mxu0 0
        %805 = vmatpush1.bf16.msra.mxu0 0
        %806 = vmatprep.subr.bf16.mxu0 0
        %807 = vmatpush1.bf16.msra.mxu0 0
        %808 = vmatprep.mubr.bf16.mxu0 0
        %809 = vmatmul.mubr.bf16.gmra.mrb[0].mxu0 %v598
        %v810 = vpop.f32.mrb[0].mxu0
        %v811 = vadd.f32 %v636, %v810
        %v812 = vpop.f32.mrb[0].mxu0
        %v813 = vadd.f32 %v640, %v812
        %v814 = vpop.f32.mrb[0].mxu0
        %v815 = vadd.f32 %v636, %v814
        %v816 = vpop.f32.mrb[0].mxu0
        %v817 = vadd.f32 %v640, %v816
        %818 = vdwg.mxu0
        %819 = vmatprep.subr.bf16.mxu0 0
        %820 = vmatpush1.bf16.msra.mxu0 %v730
        %821 = vmatprep.subr.bf16.mxu0 0
        %822 = vmatpush1.bf16.msra.mxu0 %v733
        %823 = vmatprep.subr.bf16.mxu0 0
        %824 = vmatpush1.bf16.msra.mxu0 %v736
        %825 = vmatprep.subr.bf16.mxu0 0
        %826 = vmatpush1.bf16.msra.mxu0 %v739
        %827 = vmatprep.subr.bf16.mxu0 0
        %828 = vmatpush1.bf16.msra.mxu0 %v742
        %829 = vmatprep.subr.bf16.mxu0 0
        %830 = vmatpush1.bf16.msra.mxu0 %v745
        %831 = vmatprep.subr.bf16.mxu0 0
        %832 = vmatpush1.bf16.msra.mxu0 %v748
        %833 = vmatprep.subr.bf16.mxu0 0
        %834 = vmatpush1.bf16.msra.mxu0 %v751
        %835 = vmatprep.subr.bf16.mxu0 0
        %836 = vmatpush1.bf16.msra.mxu0 0
        %837 = vmatprep.subr.bf16.mxu0 0
        %838 = vmatpush1.bf16.msra.mxu0 0
        %839 = vmatprep.subr.bf16.mxu0 0
        %840 = vmatpush1.bf16.msra.mxu0 0
        %841 = vmatprep.subr.bf16.mxu0 0
        %842 = vmatpush1.bf16.msra.mxu0 0
        %843 = vmatprep.subr.bf16.mxu0 0
        %844 = vmatpush1.bf16.msra.mxu0 0
        %845 = vmatprep.subr.bf16.mxu0 0
        %846 = vmatpush1.bf16.msra.mxu0 0
        %847 = vmatprep.subr.bf16.mxu0 0
        %848 = vmatpush1.bf16.msra.mxu0 0
        %849 = vmatprep.subr.bf16.mxu0 0
        %850 = vmatpush1.bf16.msra.mxu0 0
        %851 = vmatprep.mubr.bf16.mxu0 0
        %852 = vmatmul.mubr.bf16.gmra.mrb[0].mxu0 %v598
        %v853 = vpop.f32.mrb[0].mxu0
        %v854 = vadd.f32 %v644, %v853
        %v855 = vpop.f32.mrb[0].mxu0
        %v856 = vpop.f32.mrb[0].mxu0
        %v857 = vadd.f32 %v644, %v856
        %v858 = vpop.f32.mrb[0].mxu0
        %859 = vdwg.mxu0
        %v860 = vld [vmem:[%s442 + $0xc] sm:$0xf]
        %v861 = vld [vmem:[%s442 + $0x34] sm:$0xf]
        %v862 = vld [vmem:[%s442 + $0x5c] sm:$0xf]
        %v863 = vld [vmem:[%s442 + $0x84] sm:$0xf]
        %v864 = vld [vmem:[%s442 + $0xac] sm:$0xf]
        %v865 = vld [vmem:[%s442 + $0xd4] sm:$0xf]
        %v866 = vld [vmem:[%s442 + $0xfc] sm:$0xf]
        %v867 = vld [vmem:[%s442 + $0x124] sm:$0xf]
        %v868 = vld [vmem:[%s442 + $0x14c] sm:$0xf]
        %v869 = vld [vmem:[%s442 + $0x174] sm:$0xf]
        %v870 = vld [vmem:[%s442 + $0x19c] sm:$0xf]
        %v871 = vld [vmem:[%s442 + $0x1c4] sm:$0xf]
        %v872 = vld [vmem:[%s442 + $0x1ec] sm:$0xf]
        %v873 = vld [vmem:[%s442 + $0x214] sm:$0xf]
        %v874 = vld [vmem:[%s442 + $0x23c] sm:$0xf]
        %v875 = vld [vmem:[%s442 + $0x264] sm:$0xf]
        %v876 = vpack.c.bf16 %v815, %v811
        %v877 = vpack.c.bf16 %v817, %v813
        %v878 = vpack.c.bf16 %v857, %v854
        %vm879 = vcmask 261120
        %v881 = vsel %vm879, %v876, 0
        %v884 = vsel %vm879, %v877, 0
        %886 = vmatprep.subr.bf16.mxu0 0
        %887 = vmatpush1.bf16.xpose.msra.mxu0 %v884
        %888 = vmatprep.subr.bf16.mxu0 0
        %889 = vmatpush1.bf16.xpose.msra.mxu0 0
        %890 = vmatprep.subr.bf16.mxu0 0
        %891 = vmatpush1.bf16.xpose.msra.mxu0 0
        %892 = vmatprep.subr.bf16.mxu0 0
        %893 = vmatpush1.bf16.xpose.msra.mxu0 0
        %894 = vmatprep.subr.bf16.mxu0 0
        %895 = vmatpush1.bf16.xpose.msra.mxu0 0
        %896 = vmatprep.subr.bf16.mxu0 0
        %897 = vmatpush1.bf16.xpose.msra.mxu0 0
        %898 = vmatprep.subr.bf16.mxu0 0
        %899 = vmatpush1.bf16.xpose.msra.mxu0 0
        %900 = vmatprep.subr.bf16.mxu0 0
        %901 = vmatpush1.bf16.xpose.msra.mxu0 0
        %902 = vmatprep.subr.bf16.mxu0 0
        %903 = vmatpush1.bf16.xpose.msra.mxu0 0
        %904 = vmatprep.subr.bf16.mxu0 0
        %905 = vmatpush1.bf16.xpose.msra.mxu0 0
        %906 = vmatprep.subr.bf16.mxu0 0
        %907 = vmatpush1.bf16.xpose.msra.mxu0 0
        %908 = vmatprep.subr.bf16.mxu0 0
        %909 = vmatpush1.bf16.xpose.msra.mxu0 0
        %910 = vmatprep.subr.bf16.mxu0 0
        %911 = vmatpush1.bf16.xpose.msra.mxu0 0
        %912 = vmatprep.subr.bf16.mxu0 0
        %913 = vmatpush1.bf16.xpose.msra.mxu0 0
        %914 = vmatprep.subr.bf16.mxu0 0
        %915 = vmatpush1.bf16.xpose.msra.mxu0 0
        %916 = vmatprep.subr.bf16.mxu0 0
        %917 = vmatpush1.bf16.xpose.msra.mxu0 0
        %918 = vmatprep.mubr.bf16.mxu0 0
        %919 = vmatmul.mubr.bf16.gmra.mrb[0].mxu0 %v881
        %v920 = vpop.f32.mrb[0].mxu0
        %v921 = vadd.f32 0.0, %v920
        %v922 = vpop.f32.mrb[0].mxu0
        %v923 = vpop.f32.mrb[0].mxu0
        %v924 = vadd.f32 0.0, %v923
        %v925 = vpop.f32.mrb[0].mxu0
        %926 = vdwg.mxu0
        %v927 = vmul.f32 %v921, 0.17677669
        %v928 = vmul.f32 %v924, 0.17677669
        %v929 = vsel %vm549, %v927, -1e+09
        %v930 = vsel %vm550, %v928, -1e+09
        %vm931 = vcmask 130048
        %v932 = vsel %vm931, %v929, -inf
        %933 = vmax.xlane.f32.xlu0 %v932
        %v934 = vpop.xlane.xlu0 %933
        %v935 = vsel %vm931, %v930, -inf
        %936 = vmax.xlane.f32.xlu0 %v935
        %v937 = vpop.xlane.xlu0 %936
        %v938 = vsub.f32 %v929, %v934
        %v939 = vsub.f32 %v930, %v937
        %v940 = vmul.f32 %v938, 1.442695
        %v941 = vpow.pop %v940
        %v942 = vmul.f32 %v939, 1.442695
        %v943 = vpow.pop %v942
        %v944 = vsel %vm931, %v941, 0.0
        %945 = vadd.xlane.f32.xlu0 %v944
        %v946 = vpop.xlane.xlu0 %945
        %v947 = vsel %vm931, %v943, 0.0
        %948 = vadd.xlane.f32.xlu0 %v947
        %v949 = vpop.xlane.xlu0 %948
        %v950 = vrcp.pop %v946
        %v951 = vrcp.pop %v949
        %v952 = vmul.f32 %v941, %v950
        %v953 = vmul.f32 %v943, %v951
        %v954 = vpack.c.bf16 %v953, %v952
        %v956 = vsel %vm931, %v954, 0
        %958 = vmatprep.subr.bf16.mxu0 0
        %959 = vmatpush1.bf16.msra.mxu0 %v878
        %960 = vmatprep.subr.bf16.mxu0 0
        %961 = vmatpush1.bf16.msra.mxu0 0
        %962 = vmatprep.subr.bf16.mxu0 0
        %963 = vmatpush1.bf16.msra.mxu0 0
        %964 = vmatprep.subr.bf16.mxu0 0
        %965 = vmatpush1.bf16.msra.mxu0 0
        %966 = vmatprep.subr.bf16.mxu0 0
        %967 = vmatpush1.bf16.msra.mxu0 0
        %968 = vmatprep.subr.bf16.mxu0 0
        %969 = vmatpush1.bf16.msra.mxu0 0
        %970 = vmatprep.subr.bf16.mxu0 0
        %971 = vmatpush1.bf16.msra.mxu0 0
        %972 = vmatprep.subr.bf16.mxu0 0
        %973 = vmatpush1.bf16.msra.mxu0 0
        %974 = vmatprep.subr.bf16.mxu0 0
        %975 = vmatpush1.bf16.msra.mxu0 0
        %976 = vmatprep.subr.bf16.mxu0 0
        %977 = vmatpush1.bf16.msra.mxu0 0
        %978 = vmatprep.subr.bf16.mxu0 0
        %979 = vmatpush1.bf16.msra.mxu0 0
        %980 = vmatprep.subr.bf16.mxu0 0
        %981 = vmatpush1.bf16.msra.mxu0 0
        %982 = vmatprep.subr.bf16.mxu0 0
        %983 = vmatpush1.bf16.msra.mxu0 0
        %984 = vmatprep.subr.bf16.mxu0 0
        %985 = vmatpush1.bf16.msra.mxu0 0
        %986 = vmatprep.subr.bf16.mxu0 0
        %987 = vmatpush1.bf16.msra.mxu0 0
        %988 = vmatprep.subr.bf16.mxu0 0
        %989 = vmatpush1.bf16.msra.mxu0 0
        %990 = vmatprep.mubr.bf16.mxu0 0
        %991 = vmatmul.mubr.bf16.gmra.mrb[0].mxu0 %v956
        %v992 = vpop.f32.mrb[0].mxu0
        %v993 = vadd.f32 0.0, %v992
        %v994 = vpop.f32.mrb[0].mxu0
        %v995 = vpop.f32.mrb[0].mxu0
        %v996 = vadd.f32 0.0, %v995
        %v997 = vpop.f32.mrb[0].mxu0
        %998 = vdwg.mxu0
        %v999 = vpack.c.bf16 %v996, %v993
        %1001 = vrot.lane.b32.xlu0 %v876, 96
        %v1002 = vpop.permute.xlu0 %1001
        %1004 = vrot.lane.b32.xlu0 %v877, 96
        %v1005 = vpop.permute.xlu0 %1004
        %v1007 = vsel %vm879, %v1002, 0
        %v1010 = vsel %vm879, %v1005, 0
        %1012 = vmatprep.subr.bf16.mxu0 0
        %1013 = vmatpush1.bf16.xpose.msra.mxu0 %v1010
        %1014 = vmatprep.subr.bf16.mxu0 0
        %1015 = vmatpush1.bf16.xpose.msra.mxu0 0
        %1016 = vmatprep.subr.bf16.mxu0 0
        %1017 = vmatpush1.bf16.xpose.msra.mxu0 0
        %1018 = vmatprep.subr.bf16.mxu0 0
        %1019 = vmatpush1.bf16.xpose.msra.mxu0 0
        %1020 = vmatprep.subr.bf16.mxu0 0
        %1021 = vmatpush1.bf16.xpose.msra.mxu0 0
        %1022 = vmatprep.subr.bf16.mxu0 0
        %1023 = vmatpush1.bf16.xpose.msra.mxu0 0
        %1024 = vmatprep.subr.bf16.mxu0 0
        %1025 = vmatpush1.bf16.xpose.msra.mxu0 0
        %1026 = vmatprep.subr.bf16.mxu0 0
        %1027 = vmatpush1.bf16.xpose.msra.mxu0 0
        %1028 = vmatprep.subr.bf16.mxu0 0
        %1029 = vmatpush1.bf16.xpose.msra.mxu0 0
        %1030 = vmatprep.subr.bf16.mxu0 0
        %1031 = vmatpush1.bf16.xpose.msra.mxu0 0
        %1032 = vmatprep.subr.bf16.mxu0 0
        %1033 = vmatpush1.bf16.xpose.msra.mxu0 0
        %1034 = vmatprep.subr.bf16.mxu0 0
        %1035 = vmatpush1.bf16.xpose.msra.mxu0 0
        %1036 = vmatprep.subr.bf16.mxu0 0
        %1037 = vmatpush1.bf16.xpose.msra.mxu0 0
        %1038 = vmatprep.subr.bf16.mxu0 0
        %1039 = vmatpush1.bf16.xpose.msra.mxu0 0
        %1040 = vmatprep.subr.bf16.mxu0 0
        %1041 = vmatpush1.bf16.xpose.msra.mxu0 0
        %1042 = vmatprep.subr.bf16.mxu0 0
        %1043 = vmatpush1.bf16.xpose.msra.mxu0 0
        %1044 = vmatprep.mubr.bf16.mxu0 0
        %1045 = vmatmul.mubr.bf16.gmra.mrb[0].mxu0 %v1007
        %v1046 = vpop.f32.mrb[0].mxu0
        %v1047 = vadd.f32 0.0, %v1046
        %v1048 = vpop.f32.mrb[0].mxu0
        %v1049 = vpop.f32.mrb[0].mxu0
        %v1050 = vadd.f32 0.0, %v1049
        %v1051 = vpop.f32.mrb[0].mxu0
        %1052 = vdwg.mxu0
        %v1053 = vmul.f32 %v1047, 0.17677669
        %v1054 = vmul.f32 %v1050, 0.17677669
        %v1055 = vsel %vm549, %v1053, -1e+09
        %v1056 = vsel %vm550, %v1054, -1e+09
        %v1057 = vsel %vm931, %v1055, -inf
        %1058 = vmax.xlane.f32.xlu0 %v1057
        %v1059 = vpop.xlane.xlu0 %1058
        %v1060 = vsel %vm931, %v1056, -inf
        %1061 = vmax.xlane.f32.xlu0 %v1060
        %v1062 = vpop.xlane.xlu0 %1061
        %v1063 = vsub.f32 %v1055, %v1059
        %v1064 = vsub.f32 %v1056, %v1062
        %v1065 = vmul.f32 %v1063, 1.442695
        %v1066 = vpow.pop %v1065
        %v1067 = vmul.f32 %v1064, 1.442695
        %v1068 = vpow.pop %v1067
        %v1069 = vsel %vm931, %v1066, 0.0
        %1070 = vadd.xlane.f32.xlu0 %v1069
        %v1071 = vpop.xlane.xlu0 %1070
        %v1072 = vsel %vm931, %v1068, 0.0
        %1073 = vadd.xlane.f32.xlu0 %v1072
        %v1074 = vpop.xlane.xlu0 %1073
        %v1075 = vrcp.pop %v1071
        %v1076 = vrcp.pop %v1074
        %v1077 = vmul.f32 %v1066, %v1075
        %v1078 = vmul.f32 %v1068, %v1076
        %v1079 = vpack.c.bf16 %v1078, %v1077
        %1081 = vrot.lane.b32.xlu0 %v878, 96
        %v1082 = vpop.permute.xlu0 %1081
        %v1085 = vsel %vm931, %v1079, 0
        %1087 = vmatprep.subr.bf16.mxu0 0
        %1088 = vmatpush1.bf16.msra.mxu0 %v1082
        %1089 = vmatprep.subr.bf16.mxu0 0
        %1090 = vmatpush1.bf16.msra.mxu0 0
        %1091 = vmatprep.subr.bf16.mxu0 0
        %1092 = vmatpush1.bf16.msra.mxu0 0
        %1093 = vmatprep.subr.bf16.mxu0 0
        %1094 = vmatpush1.bf16.msra.mxu0 0
        %1095 = vmatprep.subr.bf16.mxu0 0
        %1096 = vmatpush1.bf16.msra.mxu0 0
        %1097 = vmatprep.subr.bf16.mxu0 0
        %1098 = vmatpush1.bf16.msra.mxu0 0
        %1099 = vmatprep.subr.bf16.mxu0 0
        %1100 = vmatpush1.bf16.msra.mxu0 0
        %1101 = vmatprep.subr.bf16.mxu0 0
        %1102 = vmatpush1.bf16.msra.mxu0 0
        %1103 = vmatprep.subr.bf16.mxu0 0
        %1104 = vmatpush1.bf16.msra.mxu0 0
        %1105 = vmatprep.subr.bf16.mxu0 0
        %1106 = vmatpush1.bf16.msra.mxu0 0
        %1107 = vmatprep.subr.bf16.mxu0 0
        %1108 = vmatpush1.bf16.msra.mxu0 0
        %1109 = vmatprep.subr.bf16.mxu0 0
        %1110 = vmatpush1.bf16.msra.mxu0 0
        %1111 = vmatprep.subr.bf16.mxu0 0
        %1112 = vmatpush1.bf16.msra.mxu0 0
        %1113 = vmatprep.subr.bf16.mxu0 0
        %1114 = vmatpush1.bf16.msra.mxu0 0
        %1115 = vmatprep.subr.bf16.mxu0 0
        %1116 = vmatpush1.bf16.msra.mxu0 0
        %1117 = vmatprep.subr.bf16.mxu0 0
        %1118 = vmatpush1.bf16.msra.mxu0 0
        %1119 = vmatprep.mubr.bf16.mxu0 0
        %1120 = vmatmul.mubr.bf16.gmra.mrb[0].mxu0 %v1085
        %v1121 = vpop.f32.mrb[0].mxu0
        %v1122 = vadd.f32 0.0, %v1121
        %v1123 = vpop.f32.mrb[0].mxu0
        %v1124 = vpop.f32.mrb[0].mxu0
        %v1125 = vadd.f32 0.0, %v1124
        %v1126 = vpop.f32.mrb[0].mxu0
        %1127 = vdwg.mxu0
        %v1128 = vpack.c.bf16 %v1125, %v1122
        %v1133 = vunpack.c.l.b16 %v864
        %v1134 = vunpack.c.l.b16 %v865
        %v1135 = vunpack.c.l.b16 %v866
        %v1136 = vunpack.c.l.b16 %v867
        %v1137 = vpack.c.b16 %v1134, %v1133
        %v1138 = vpack.c.b16 %v1136, %v1135
        %v1142 = vsel %vm879, %v1128, 0
        %1144 = vmatprep.subr.bf16.mxu0 0
        %1145 = vmatpush1.bf16.msra.mxu0 %v1137
        %1146 = vmatprep.subr.bf16.mxu0 0
        %1147 = vmatpush1.bf16.msra.mxu0 %v1138
        %1148 = vmatprep.subr.bf16.mxu0 0
        %1149 = vmatpush1.bf16.msra.mxu0 0
        %1150 = vmatprep.subr.bf16.mxu0 0
        %1151 = vmatpush1.bf16.msra.mxu0 0
        %1152 = vmatprep.subr.bf16.mxu0 0
        %1153 = vmatpush1.bf16.msra.mxu0 0
        %1154 = vmatprep.subr.bf16.mxu0 0
        %1155 = vmatpush1.bf16.msra.mxu0 0
        %1156 = vmatprep.subr.bf16.mxu0 0
        %1157 = vmatpush1.bf16.msra.mxu0 0
        %1158 = vmatprep.subr.bf16.mxu0 0
        %1159 = vmatpush1.bf16.msra.mxu0 0
        %1160 = vmatprep.subr.bf16.mxu0 0
        %1161 = vmatpush1.bf16.msra.mxu0 0
        %1162 = vmatprep.subr.bf16.mxu0 0
        %1163 = vmatpush1.bf16.msra.mxu0 0
        %1164 = vmatprep.subr.bf16.mxu0 0
        %1165 = vmatpush1.bf16.msra.mxu0 0
        %1166 = vmatprep.subr.bf16.mxu0 0
        %1167 = vmatpush1.bf16.msra.mxu0 0
        %1168 = vmatprep.subr.bf16.mxu0 0
        %1169 = vmatpush1.bf16.msra.mxu0 0
        %1170 = vmatprep.subr.bf16.mxu0 0
        %1171 = vmatpush1.bf16.msra.mxu0 0
        %1172 = vmatprep.subr.bf16.mxu0 0
        %1173 = vmatpush1.bf16.msra.mxu0 0
        %1174 = vmatprep.subr.bf16.mxu0 0
        %1175 = vmatpush1.bf16.msra.mxu0 0
        %1176 = vmatprep.mubr.bf16.mxu0 0
        %1177 = vmatmul.mubr.bf16.gmra.mrb[0].mxu0 %v1142
        %v1178 = vpop.f32.mrb[0].mxu0
        %v1179 = vadd.f32 0.0, %v1178
        %v1180 = vpop.f32.mrb[0].mxu0
        %v1181 = vpop.f32.mrb[0].mxu0
        %v1182 = vadd.f32 0.0, %v1181
        %v1183 = vpop.f32.mrb[0].mxu0
        %1184 = vdwg.mxu0
        %v1189 = vunpack.c.l.b16 %v860
        %v1190 = vunpack.c.l.b16 %v861
        %v1191 = vunpack.c.l.b16 %v862
        %v1192 = vunpack.c.l.b16 %v863
        %v1193 = vpack.c.b16 %v1190, %v1189
        %v1194 = vpack.c.b16 %v1192, %v1191
        %v1198 = vsel %vm879, %v999, 0
        %1200 = vmatprep.subr.bf16.mxu0 0
        %1201 = vmatpush1.bf16.msra.mxu0 %v1193
        %1202 = vmatprep.subr.bf16.mxu0 0
        %1203 = vmatpush1.bf16.msra.mxu0 %v1194
        %1204 = vmatprep.subr.bf16.mxu0 0
        %1205 = vmatpush1.bf16.msra.mxu0 0
        %1206 = vmatprep.subr.bf16.mxu0 0
        %1207 = vmatpush1.bf16.msra.mxu0 0
        %1208 = vmatprep.subr.bf16.mxu0 0
        %1209 = vmatpush1.bf16.msra.mxu0 0
        %1210 = vmatprep.subr.bf16.mxu0 0
        %1211 = vmatpush1.bf16.msra.mxu0 0
        %1212 = vmatprep.subr.bf16.mxu0 0
        %1213 = vmatpush1.bf16.msra.mxu0 0
        %1214 = vmatprep.subr.bf16.mxu0 0
        %1215 = vmatpush1.bf16.msra.mxu0 0
        %1216 = vmatprep.subr.bf16.mxu0 0
        %1217 = vmatpush1.bf16.msra.mxu0 0
        %1218 = vmatprep.subr.bf16.mxu0 0
        %1219 = vmatpush1.bf16.msra.mxu0 0
        %1220 = vmatprep.subr.bf16.mxu0 0
        %1221 = vmatpush1.bf16.msra.mxu0 0
        %1222 = vmatprep.subr.bf16.mxu0 0
        %1223 = vmatpush1.bf16.msra.mxu0 0
        %1224 = vmatprep.subr.bf16.mxu0 0
        %1225 = vmatpush1.bf16.msra.mxu0 0
        %1226 = vmatprep.subr.bf16.mxu0 0
        %1227 = vmatpush1.bf16.msra.mxu0 0
        %1228 = vmatprep.subr.bf16.mxu0 0
        %1229 = vmatpush1.bf16.msra.mxu0 0
        %1230 = vmatprep.subr.bf16.mxu0 0
        %1231 = vmatpush1.bf16.msra.mxu0 0
        %1232 = vmatprep.mubr.bf16.mxu0 0
        %1233 = vmatmul.mubr.bf16.gmra.mrb[0].mxu0 %v1198
        %v1234 = vpop.f32.mrb[0].mxu0
        %v1235 = vadd.f32 %v1179, %v1234
        %v1236 = vpop.f32.mrb[0].mxu0
        %v1237 = vpop.f32.mrb[0].mxu0
        %v1238 = vadd.f32 %v1182, %v1237
        %v1239 = vpop.f32.mrb[0].mxu0
        %1240 = vdwg.mxu0
        %1241 = vrot.lane.b32.xlu0 %v876, 64
        %v1242 = vpop.permute.xlu0 %1241
        %1243 = vrot.lane.b32.xlu0 %v877, 64
        %v1244 = vpop.permute.xlu0 %1243
        %v1246 = vsel %vm879, %v1242, 0
        %v1249 = vsel %vm879, %v1244, 0
        %1251 = vmatprep.subr.bf16.mxu0 0
        %1252 = vmatpush1.bf16.xpose.msra.mxu0 %v1249
        %1253 = vmatprep.subr.bf16.mxu0 0
        %1254 = vmatpush1.bf16.xpose.msra.mxu0 0
        %1255 = vmatprep.subr.bf16.mxu0 0
        %1256 = vmatpush1.bf16.xpose.msra.mxu0 0
        %1257 = vmatprep.subr.bf16.mxu0 0
        %1258 = vmatpush1.bf16.xpose.msra.mxu0 0
        %1259 = vmatprep.subr.bf16.mxu0 0
        %1260 = vmatpush1.bf16.xpose.msra.mxu0 0
        %1261 = vmatprep.subr.bf16.mxu0 0
        %1262 = vmatpush1.bf16.xpose.msra.mxu0 0
        %1263 = vmatprep.subr.bf16.mxu0 0
        %1264 = vmatpush1.bf16.xpose.msra.mxu0 0
        %1265 = vmatprep.subr.bf16.mxu0 0
        %1266 = vmatpush1.bf16.xpose.msra.mxu0 0
        %1267 = vmatprep.subr.bf16.mxu0 0
        %1268 = vmatpush1.bf16.xpose.msra.mxu0 0
        %1269 = vmatprep.subr.bf16.mxu0 0
        %1270 = vmatpush1.bf16.xpose.msra.mxu0 0
        %1271 = vmatprep.subr.bf16.mxu0 0
        %1272 = vmatpush1.bf16.xpose.msra.mxu0 0
        %1273 = vmatprep.subr.bf16.mxu0 0
        %1274 = vmatpush1.bf16.xpose.msra.mxu0 0
        %1275 = vmatprep.subr.bf16.mxu0 0
        %1276 = vmatpush1.bf16.xpose.msra.mxu0 0
        %1277 = vmatprep.subr.bf16.mxu0 0
        %1278 = vmatpush1.bf16.xpose.msra.mxu0 0
        %1279 = vmatprep.subr.bf16.mxu0 0
        %1280 = vmatpush1.bf16.xpose.msra.mxu0 0
        %1281 = vmatprep.subr.bf16.mxu0 0
        %1282 = vmatpush1.bf16.xpose.msra.mxu0 0
        %1283 = vmatprep.mubr.bf16.mxu0 0
        %1284 = vmatmul.mubr.bf16.gmra.mrb[0].mxu0 %v1246
        %v1285 = vpop.f32.mrb[0].mxu0
        %v1286 = vadd.f32 0.0, %v1285
        %v1287 = vpop.f32.mrb[0].mxu0
        %v1288 = vpop.f32.mrb[0].mxu0
        %v1289 = vadd.f32 0.0, %v1288
        %v1290 = vpop.f32.mrb[0].mxu0
        %1291 = vdwg.mxu0
        %v1292 = vmul.f32 %v1286, 0.17677669
        %v1293 = vmul.f32 %v1289, 0.17677669
        %v1294 = vsel %vm549, %v1292, -1e+09
        %v1295 = vsel %vm550, %v1293, -1e+09
        %v1296 = vsel %vm931, %v1294, -inf
        %1297 = vmax.xlane.f32.xlu0 %v1296
        %v1298 = vpop.xlane.xlu0 %1297
        %v1299 = vsel %vm931, %v1295, -inf
        %1300 = vmax.xlane.f32.xlu0 %v1299
        %v1301 = vpop.xlane.xlu0 %1300
        %v1302 = vsub.f32 %v1294, %v1298
        %v1303 = vsub.f32 %v1295, %v1301
        %v1304 = vmul.f32 %v1302, 1.442695
        %v1305 = vpow.pop %v1304
        %v1306 = vmul.f32 %v1303, 1.442695
        %v1307 = vpow.pop %v1306
        %v1308 = vsel %vm931, %v1305, 0.0
        %1309 = vadd.xlane.f32.xlu0 %v1308
        %v1310 = vpop.xlane.xlu0 %1309
        %v1311 = vsel %vm931, %v1307, 0.0
        %1312 = vadd.xlane.f32.xlu0 %v1311
        %v1313 = vpop.xlane.xlu0 %1312
        %v1314 = vrcp.pop %v1310
        %v1315 = vrcp.pop %v1313
        %v1316 = vmul.f32 %v1305, %v1314
        %v1317 = vmul.f32 %v1307, %v1315
        %v1318 = vpack.c.bf16 %v1317, %v1316
        %1319 = vrot.lane.b32.xlu0 %v878, 64
        %v1320 = vpop.permute.xlu0 %1319
        %v1323 = vsel %vm931, %v1318, 0
        %1325 = vmatprep.subr.bf16.mxu0 0
        %1326 = vmatpush1.bf16.msra.mxu0 %v1320
        %1327 = vmatprep.subr.bf16.mxu0 0
        %1328 = vmatpush1.bf16.msra.mxu0 0
        %1329 = vmatprep.subr.bf16.mxu0 0
        %1330 = vmatpush1.bf16.msra.mxu0 0
        %1331 = vmatprep.subr.bf16.mxu0 0
        %1332 = vmatpush1.bf16.msra.mxu0 0
        %1333 = vmatprep.subr.bf16.mxu0 0
        %1334 = vmatpush1.bf16.msra.mxu0 0
        %1335 = vmatprep.subr.bf16.mxu0 0
        %1336 = vmatpush1.bf16.msra.mxu0 0
        %1337 = vmatprep.subr.bf16.mxu0 0
        %1338 = vmatpush1.bf16.msra.mxu0 0
        %1339 = vmatprep.subr.bf16.mxu0 0
        %1340 = vmatpush1.bf16.msra.mxu0 0
        %1341 = vmatprep.subr.bf16.mxu0 0
        %1342 = vmatpush1.bf16.msra.mxu0 0
        %1343 = vmatprep.subr.bf16.mxu0 0
        %1344 = vmatpush1.bf16.msra.mxu0 0
        %1345 = vmatprep.subr.bf16.mxu0 0
        %1346 = vmatpush1.bf16.msra.mxu0 0
        %1347 = vmatprep.subr.bf16.mxu0 0
        %1348 = vmatpush1.bf16.msra.mxu0 0
        %1349 = vmatprep.subr.bf16.mxu0 0
        %1350 = vmatpush1.bf16.msra.mxu0 0
        %1351 = vmatprep.subr.bf16.mxu0 0
        %1352 = vmatpush1.bf16.msra.mxu0 0
        %1353 = vmatprep.subr.bf16.mxu0 0
        %1354 = vmatpush1.bf16.msra.mxu0 0
        %1355 = vmatprep.subr.bf16.mxu0 0
        %1356 = vmatpush1.bf16.msra.mxu0 0
        %1357 = vmatprep.mubr.bf16.mxu0 0
        %1358 = vmatmul.mubr.bf16.gmra.mrb[0].mxu0 %v1323
        %v1359 = vpop.f32.mrb[0].mxu0
        %v1360 = vadd.f32 0.0, %v1359
        %v1361 = vpop.f32.mrb[0].mxu0
        %v1362 = vpop.f32.mrb[0].mxu0
        %v1363 = vadd.f32 0.0, %v1362
        %v1364 = vpop.f32.mrb[0].mxu0
        %1365 = vdwg.mxu0
        %v1366 = vpack.c.bf16 %v1363, %v1360
        %v1371 = vunpack.c.l.b16 %v868
        %v1372 = vunpack.c.l.b16 %v869
        %v1373 = vunpack.c.l.b16 %v870
        %v1374 = vunpack.c.l.b16 %v871
        %v1375 = vpack.c.b16 %v1372, %v1371
        %v1376 = vpack.c.b16 %v1374, %v1373
        %v1380 = vsel %vm879, %v1366, 0
        %1382 = vmatprep.subr.bf16.mxu0 0
        %1383 = vmatpush1.bf16.msra.mxu0 %v1375
        %1384 = vmatprep.subr.bf16.mxu0 0
        %1385 = vmatpush1.bf16.msra.mxu0 %v1376
        %1386 = vmatprep.subr.bf16.mxu0 0
        %1387 = vmatpush1.bf16.msra.mxu0 0
        %1388 = vmatprep.subr.bf16.mxu0 0
        %1389 = vmatpush1.bf16.msra.mxu0 0
        %1390 = vmatprep.subr.bf16.mxu0 0
        %1391 = vmatpush1.bf16.msra.mxu0 0
        %1392 = vmatprep.subr.bf16.mxu0 0
        %1393 = vmatpush1.bf16.msra.mxu0 0
        %1394 = vmatprep.subr.bf16.mxu0 0
        %1395 = vmatpush1.bf16.msra.mxu0 0
        %1396 = vmatprep.subr.bf16.mxu0 0
        %1397 = vmatpush1.bf16.msra.mxu0 0
        %1398 = vmatprep.subr.bf16.mxu0 0
        %1399 = vmatpush1.bf16.msra.mxu0 0
        %1400 = vmatprep.subr.bf16.mxu0 0
        %1401 = vmatpush1.bf16.msra.mxu0 0
        %1402 = vmatprep.subr.bf16.mxu0 0
        %1403 = vmatpush1.bf16.msra.mxu0 0
        %1404 = vmatprep.subr.bf16.mxu0 0
        %1405 = vmatpush1.bf16.msra.mxu0 0
        %1406 = vmatprep.subr.bf16.mxu0 0
        %1407 = vmatpush1.bf16.msra.mxu0 0
        %1408 = vmatprep.subr.bf16.mxu0 0
        %1409 = vmatpush1.bf16.msra.mxu0 0
        %1410 = vmatprep.subr.bf16.mxu0 0
        %1411 = vmatpush1.bf16.msra.mxu0 0
        %1412 = vmatprep.subr.bf16.mxu0 0
        %1413 = vmatpush1.bf16.msra.mxu0 0
        %1414 = vmatprep.mubr.bf16.mxu0 0
        %1415 = vmatmul.mubr.bf16.gmra.mrb[0].mxu0 %v1380
        %v1416 = vpop.f32.mrb[0].mxu0
        %v1417 = vadd.f32 0.0, %v1416
        %v1418 = vpop.f32.mrb[0].mxu0
        %v1419 = vpop.f32.mrb[0].mxu0
        %v1420 = vadd.f32 0.0, %v1419
        %v1421 = vpop.f32.mrb[0].mxu0
        %1422 = vdwg.mxu0
        %v1423 = vadd.f32 %v1235, %v1417
        %v1424 = vadd.f32 %v1238, %v1420
        %1425 = vrot.lane.b32.xlu0 %v876, 32
        %v1426 = vpop.permute.xlu0 %1425
        %1427 = vrot.lane.b32.xlu0 %v877, 32
        %v1428 = vpop.permute.xlu0 %1427
        %v1430 = vsel %vm879, %v1426, 0
        %v1433 = vsel %vm879, %v1428, 0
        %1435 = vmatprep.subr.bf16.mxu0 0
        %1436 = vmatpush1.bf16.xpose.msra.mxu0 %v1433
        %1437 = vmatprep.subr.bf16.mxu0 0
        %1438 = vmatpush1.bf16.xpose.msra.mxu0 0
        %1439 = vmatprep.subr.bf16.mxu0 0
        %1440 = vmatpush1.bf16.xpose.msra.mxu0 0
        %1441 = vmatprep.subr.bf16.mxu0 0
        %1442 = vmatpush1.bf16.xpose.msra.mxu0 0
        %1443 = vmatprep.subr.bf16.mxu0 0
        %1444 = vmatpush1.bf16.xpose.msra.mxu0 0
        %1445 = vmatprep.subr.bf16.mxu0 0
        %1446 = vmatpush1.bf16.xpose.msra.mxu0 0
        %1447 = vmatprep.subr.bf16.mxu0 0
        %1448 = vmatpush1.bf16.xpose.msra.mxu0 0
        %1449 = vmatprep.subr.bf16.mxu0 0
        %1450 = vmatpush1.bf16.xpose.msra.mxu0 0
        %1451 = vmatprep.subr.bf16.mxu0 0
        %1452 = vmatpush1.bf16.xpose.msra.mxu0 0
        %1453 = vmatprep.subr.bf16.mxu0 0
        %1454 = vmatpush1.bf16.xpose.msra.mxu0 0
        %1455 = vmatprep.subr.bf16.mxu0 0
        %1456 = vmatpush1.bf16.xpose.msra.mxu0 0
        %1457 = vmatprep.subr.bf16.mxu0 0
        %1458 = vmatpush1.bf16.xpose.msra.mxu0 0
        %1459 = vmatprep.subr.bf16.mxu0 0
        %1460 = vmatpush1.bf16.xpose.msra.mxu0 0
        %1461 = vmatprep.subr.bf16.mxu0 0
        %1462 = vmatpush1.bf16.xpose.msra.mxu0 0
        %1463 = vmatprep.subr.bf16.mxu0 0
        %1464 = vmatpush1.bf16.xpose.msra.mxu0 0
        %1465 = vmatprep.subr.bf16.mxu0 0
        %1466 = vmatpush1.bf16.xpose.msra.mxu0 0
        %1467 = vmatprep.mubr.bf16.mxu0 0
        %1468 = vmatmul.mubr.bf16.gmra.mrb[0].mxu0 %v1430
        %v1469 = vpop.f32.mrb[0].mxu0
        %v1470 = vadd.f32 0.0, %v1469
        %v1471 = vpop.f32.mrb[0].mxu0
        %v1472 = vpop.f32.mrb[0].mxu0
        %v1473 = vadd.f32 0.0, %v1472
        %v1474 = vpop.f32.mrb[0].mxu0
        %1475 = vdwg.mxu0
        %v1476 = vmul.f32 %v1470, 0.17677669
        %v1477 = vmul.f32 %v1473, 0.17677669
        %v1478 = vsel %vm549, %v1476, -1e+09
        %v1479 = vsel %vm550, %v1477, -1e+09
        %v1480 = vsel %vm931, %v1478, -inf
        %1481 = vmax.xlane.f32.xlu0 %v1480
        %v1482 = vpop.xlane.xlu0 %1481
        %v1483 = vsel %vm931, %v1479, -inf
        %1484 = vmax.xlane.f32.xlu0 %v1483
        %v1485 = vpop.xlane.xlu0 %1484
        %v1486 = vsub.f32 %v1478, %v1482
        %v1487 = vsub.f32 %v1479, %v1485
        %v1488 = vmul.f32 %v1486, 1.442695
        %v1489 = vpow.pop %v1488
        %v1490 = vmul.f32 %v1487, 1.442695
        %v1491 = vpow.pop %v1490
        %v1492 = vsel %vm931, %v1489, 0.0
        %1493 = vadd.xlane.f32.xlu0 %v1492
        %v1494 = vpop.xlane.xlu0 %1493
        %v1495 = vsel %vm931, %v1491, 0.0
        %1496 = vadd.xlane.f32.xlu0 %v1495
        %v1497 = vpop.xlane.xlu0 %1496
        %v1498 = vrcp.pop %v1494
        %v1499 = vrcp.pop %v1497
        %v1500 = vmul.f32 %v1489, %v1498
        %v1501 = vmul.f32 %v1491, %v1499
        %v1502 = vpack.c.bf16 %v1501, %v1500
        %1503 = vrot.lane.b32.xlu0 %v878, 32
        %v1504 = vpop.permute.xlu0 %1503
        %v1507 = vsel %vm931, %v1502, 0
        %1509 = vmatprep.subr.bf16.mxu0 0
        %1510 = vmatpush1.bf16.msra.mxu0 %v1504
        %1511 = vmatprep.subr.bf16.mxu0 0
        %1512 = vmatpush1.bf16.msra.mxu0 0
        %1513 = vmatprep.subr.bf16.mxu0 0
        %1514 = vmatpush1.bf16.msra.mxu0 0
        %1515 = vmatprep.subr.bf16.mxu0 0
        %1516 = vmatpush1.bf16.msra.mxu0 0
        %1517 = vmatprep.subr.bf16.mxu0 0
        %1518 = vmatpush1.bf16.msra.mxu0 0
        %1519 = vmatprep.subr.bf16.mxu0 0
        %1520 = vmatpush1.bf16.msra.mxu0 0
        %1521 = vmatprep.subr.bf16.mxu0 0
        %1522 = vmatpush1.bf16.msra.mxu0 0
        %1523 = vmatprep.subr.bf16.mxu0 0
        %1524 = vmatpush1.bf16.msra.mxu0 0
        %1525 = vmatprep.subr.bf16.mxu0 0
        %1526 = vmatpush1.bf16.msra.mxu0 0
        %1527 = vmatprep.subr.bf16.mxu0 0
        %1528 = vmatpush1.bf16.msra.mxu0 0
        %1529 = vmatprep.subr.bf16.mxu0 0
        %1530 = vmatpush1.bf16.msra.mxu0 0
        %1531 = vmatprep.subr.bf16.mxu0 0
        %1532 = vmatpush1.bf16.msra.mxu0 0
        %1533 = vmatprep.subr.bf16.mxu0 0
        %1534 = vmatpush1.bf16.msra.mxu0 0
        %1535 = vmatprep.subr.bf16.mxu0 0
        %1536 = vmatpush1.bf16.msra.mxu0 0
        %1537 = vmatprep.subr.bf16.mxu0 0
        %1538 = vmatpush1.bf16.msra.mxu0 0
        %1539 = vmatprep.subr.bf16.mxu0 0
        %1540 = vmatpush1.bf16.msra.mxu0 0
        %1541 = vmatprep.mubr.bf16.mxu0 0
        %1542 = vmatmul.mubr.bf16.gmra.mrb[0].mxu0 %v1507
        %v1543 = vpop.f32.mrb[0].mxu0
        %v1544 = vadd.f32 0.0, %v1543
        %v1545 = vpop.f32.mrb[0].mxu0
        %v1546 = vpop.f32.mrb[0].mxu0
        %v1547 = vadd.f32 0.0, %v1546
        %v1548 = vpop.f32.mrb[0].mxu0
        %1549 = vdwg.mxu0
        %v1550 = vpack.c.bf16 %v1547, %v1544
        %v1555 = vunpack.c.l.b16 %v872
        %v1556 = vunpack.c.l.b16 %v873
        %v1557 = vunpack.c.l.b16 %v874
        %v1558 = vunpack.c.l.b16 %v875
        %v1559 = vpack.c.b16 %v1556, %v1555
        %v1560 = vpack.c.b16 %v1558, %v1557
        %v1564 = vsel %vm879, %v1550, 0
        %1566 = vmatprep.subr.bf16.mxu0 0
        %1567 = vmatpush1.bf16.msra.mxu0 %v1559
        %1568 = vmatprep.subr.bf16.mxu0 0
        %1569 = vmatpush1.bf16.msra.mxu0 %v1560
        %1570 = vmatprep.subr.bf16.mxu0 0
        %1571 = vmatpush1.bf16.msra.mxu0 0
        %1572 = vmatprep.subr.bf16.mxu0 0
        %1573 = vmatpush1.bf16.msra.mxu0 0
        %1574 = vmatprep.subr.bf16.mxu0 0
        %1575 = vmatpush1.bf16.msra.mxu0 0
        %1576 = vmatprep.subr.bf16.mxu0 0
        %1577 = vmatpush1.bf16.msra.mxu0 0
        %1578 = vmatprep.subr.bf16.mxu0 0
        %1579 = vmatpush1.bf16.msra.mxu0 0
        %1580 = vmatprep.subr.bf16.mxu0 0
        %1581 = vmatpush1.bf16.msra.mxu0 0
        %1582 = vmatprep.subr.bf16.mxu0 0
        %1583 = vmatpush1.bf16.msra.mxu0 0
        %1584 = vmatprep.subr.bf16.mxu0 0
        %1585 = vmatpush1.bf16.msra.mxu0 0
        %1586 = vmatprep.subr.bf16.mxu0 0
        %1587 = vmatpush1.bf16.msra.mxu0 0
        %1588 = vmatprep.subr.bf16.mxu0 0
        %1589 = vmatpush1.bf16.msra.mxu0 0
        %1590 = vmatprep.subr.bf16.mxu0 0
        %1591 = vmatpush1.bf16.msra.mxu0 0
        %1592 = vmatprep.subr.bf16.mxu0 0
        %1593 = vmatpush1.bf16.msra.mxu0 0
        %1594 = vmatprep.subr.bf16.mxu0 0
        %1595 = vmatpush1.bf16.msra.mxu0 0
        %1596 = vmatprep.subr.bf16.mxu0 0
        %1597 = vmatpush1.bf16.msra.mxu0 0
        %1598 = vmatprep.mubr.bf16.mxu0 0
        %1599 = vmatmul.mubr.bf16.gmra.mrb[0].mxu0 %v1564
        %v1600 = vpop.f32.mrb[0].mxu0
        %v1601 = vadd.f32 0.0, %v1600
        %v1602 = vpop.f32.mrb[0].mxu0
        %v1603 = vpop.f32.mrb[0].mxu0
        %v1604 = vadd.f32 0.0, %v1603
        %v1605 = vpop.f32.mrb[0].mxu0
        %1606 = vdwg.mxu0
        %v1607 = vadd.f32 %v1423, %v1601
        %v1608 = vadd.f32 %v1424, %v1604
        %v1609 = vadd.f32 %v525, %v1607
        %v1610 = vadd.f32 %v526, %v1608
        %v1611 = vld [vmem:[%s433 + $0x9] sm:$0x1]
        %v1613 = vlaneseq
        %v1614 = vshrl.u32 %v1613, 7
        %v1615 = vsub.s32 0, %v1614
        %v1616 = vrot.slane %v1611, %v1615
        %v1618 = vadd.f32 %v1609, %v1616
        %v1619 = vadd.f32 %v1610, %v1616
        %v1620 = vld [vmem:[%s433 + $0x2] sm:$0x1]
        %v1621 = vld [vmem:[%s433 + $0x3] sm:$0x1]
        %1622 = vadd.xlane.f32.xlu0 %v1618
        %v1623 = vpop.xlane.xlu0 %1622
        %1624 = vadd.xlane.f32.xlu0 %v1619
        %v1625 = vpop.xlane.xlu0 %1624
        %v1626 = vmul.f32 %v1623, %v563
        %v1627 = vmul.f32 %v1625, %v563
        %v1628 = vsub.f32 %v1618, %v1626
        %v1629 = vsub.f32 %v1619, %v1627
        %v1630 = vmul.f32 %v1628, %v1628
        %v1631 = vmul.f32 %v1629, %v1629
        %1632 = vadd.xlane.f32.xlu0 %v1630
        %v1633 = vpop.xlane.xlu0 %1632
        %1634 = vadd.xlane.f32.xlu0 %v1631
        %v1635 = vpop.xlane.xlu0 %1634
        %v1636 = vmul.f32 %v1633, %v563
        %v1637 = vmul.f32 %v1635, %v563
        %v1638 = vadd.f32 %v1636, 1e-05
        %v1639 = vadd.f32 %v1637, 1e-05
        %v1640 = vrsqrt.pop %v1638
        %v1641 = vrsqrt.pop %v1639
        %v1642 = vmul.f32 %v1628, %v1640
        %v1643 = vmul.f32 %v1629, %v1641
        %v1645 = vlaneseq
        %v1646 = vshrl.u32 %v1645, 7
        %v1647 = vsub.s32 0, %v1646
        %v1648 = vrot.slane %v1620, %v1647
        %v1650 = vmul.f32 %v1642, %v1648
        %v1651 = vmul.f32 %v1643, %v1648
        %v1653 = vlaneseq
        %v1654 = vshrl.u32 %v1653, 7
        %v1655 = vsub.s32 0, %v1654
        %v1656 = vrot.slane %v1621, %v1655
        %v1658 = vadd.f32 %v1650, %v1656
        %v1659 = vadd.f32 %v1651, %v1656
        %v1660 = vpack.c.bf16 %v1659, %v1658
        %v1661 = vld [vmem:[%s442 + $0x10] sm:$0xf]
        %v1662 = vld [vmem:[%s442 + $0x38] sm:$0xf]
        %v1663 = vld [vmem:[%s442 + $0x60] sm:$0xf]
        %v1664 = vld [vmem:[%s442 + $0x88] sm:$0xf]
        %v1665 = vld [vmem:[%s442 + $0xb0] sm:$0xf]
        %v1666 = vld [vmem:[%s442 + $0xd8] sm:$0xf]
        %v1667 = vld [vmem:[%s442 + $0x100] sm:$0xf]
        %v1668 = vld [vmem:[%s442 + $0x128] sm:$0xf]
        %v1669 = vld [vmem:[%s442 + $0x150] sm:$0xf]
        %v1670 = vld [vmem:[%s442 + $0x178] sm:$0xf]
        %v1671 = vld [vmem:[%s442 + $0x1a0] sm:$0xf]
        %v1672 = vld [vmem:[%s442 + $0x1c8] sm:$0xf]
        %v1673 = vld [vmem:[%s442 + $0x1f0] sm:$0xf]
        %v1674 = vld [vmem:[%s442 + $0x218] sm:$0xf]
        %v1675 = vld [vmem:[%s442 + $0x240] sm:$0xf]
        %v1676 = vld [vmem:[%s442 + $0x268] sm:$0xf]
        %v1677 = vld [vmem:[%s433 + $0xa] sm:$0x1]
        %v1679 = vlaneseq
        %v1680 = vshrl.u32 %v1679, 7
        %v1681 = vsub.s32 0, %v1680
        %v1682 = vrot.slane %v1677, %v1681
        %v1700 = vunpack.c.l.b16 %v1661
        %v1701 = vunpack.c.l.b16 %v1662
        %v1702 = vunpack.c.l.b16 %v1663
        %v1703 = vunpack.c.l.b16 %v1664
        %v1704 = vunpack.c.l.b16 %v1665
        %v1705 = vunpack.c.l.b16 %v1666
        %v1706 = vunpack.c.l.b16 %v1667
        %v1707 = vunpack.c.l.b16 %v1668
        %v1708 = vunpack.c.l.b16 %v1669
        %v1709 = vunpack.c.l.b16 %v1670
        %v1710 = vunpack.c.l.b16 %v1671
        %v1711 = vunpack.c.l.b16 %v1672
        %v1712 = vunpack.c.l.b16 %v1673
        %v1713 = vunpack.c.l.b16 %v1674
        %v1714 = vunpack.c.l.b16 %v1675
        %v1715 = vunpack.c.l.b16 %v1676
        %v1716 = vpack.c.b16 %v1701, %v1700
        %v1717 = vpack.c.b16 %v1703, %v1702
        %v1718 = vpack.c.b16 %v1705, %v1704
        %v1719 = vpack.c.b16 %v1707, %v1706
        %v1720 = vpack.c.b16 %v1709, %v1708
        %v1721 = vpack.c.b16 %v1711, %v1710
        %v1722 = vpack.c.b16 %v1713, %v1712
        %v1723 = vpack.c.b16 %v1715, %v1714
        %1732 = vmatprep.subr.bf16.mxu0 0
        %1733 = vmatpush1.bf16.msra.mxu0 %v1716
        %1734 = vmatprep.subr.bf16.mxu0 0
        %1735 = vmatpush1.bf16.msra.mxu0 %v1717
        %1736 = vmatprep.subr.bf16.mxu0 0
        %1737 = vmatpush1.bf16.msra.mxu0 %v1718
        %1738 = vmatprep.subr.bf16.mxu0 0
        %1739 = vmatpush1.bf16.msra.mxu0 %v1719
        %1740 = vmatprep.subr.bf16.mxu0 0
        %1741 = vmatpush1.bf16.msra.mxu0 %v1720
        %1742 = vmatprep.subr.bf16.mxu0 0
        %1743 = vmatpush1.bf16.msra.mxu0 %v1721
        %1744 = vmatprep.subr.bf16.mxu0 0
        %1745 = vmatpush1.bf16.msra.mxu0 %v1722
        %1746 = vmatprep.subr.bf16.mxu0 0
        %1747 = vmatpush1.bf16.msra.mxu0 %v1723
        %1748 = vmatprep.subr.bf16.mxu0 0
        %1749 = vmatpush1.bf16.msra.mxu0 0
        %1750 = vmatprep.subr.bf16.mxu0 0
        %1751 = vmatpush1.bf16.msra.mxu0 0
        %1752 = vmatprep.subr.bf16.mxu0 0
        %1753 = vmatpush1.bf16.msra.mxu0 0
        %1754 = vmatprep.subr.bf16.mxu0 0
        %1755 = vmatpush1.bf16.msra.mxu0 0
        %1756 = vmatprep.subr.bf16.mxu0 0
        %1757 = vmatpush1.bf16.msra.mxu0 0
        %1758 = vmatprep.subr.bf16.mxu0 0
        %1759 = vmatpush1.bf16.msra.mxu0 0
        %1760 = vmatprep.subr.bf16.mxu0 0
        %1761 = vmatpush1.bf16.msra.mxu0 0
        %1762 = vmatprep.subr.bf16.mxu0 0
        %1763 = vmatpush1.bf16.msra.mxu0 0
        %1764 = vmatprep.mubr.bf16.mxu0 0
        %1765 = vmatmul.mubr.bf16.gmra.mrb[0].mxu0 %v1660
        %v1766 = vpop.f32.mrb[0].mxu0
        %v1767 = vadd.f32 %v1682, %v1766
        %v1768 = vpop.f32.mrb[0].mxu0
        %v1769 = vpop.f32.mrb[0].mxu0
        %v1770 = vadd.f32 %v1682, %v1769
        %v1771 = vpop.f32.mrb[0].mxu0
        %1772 = vdwg.mxu0
        %v1773 = vld [vmem:[%s442 + $0x14] sm:$0xff]
        %v1774 = vld [vmem:[%s442 + $0x3c] sm:$0xff]
        %v1775 = vld [vmem:[%s442 + $0x64] sm:$0xff]
        %v1776 = vld [vmem:[%s442 + $0x8c] sm:$0xff]
        %v1777 = vld [vmem:[%s442 + $0xb4] sm:$0xff]
        %v1778 = vld [vmem:[%s442 + $0xdc] sm:$0xff]
        %v1779 = vld [vmem:[%s442 + $0x104] sm:$0xff]
        %v1780 = vld [vmem:[%s442 + $0x12c] sm:$0xff]
        %v1781 = vld [vmem:[%s442 + $0x154] sm:$0xff]
        %v1782 = vld [vmem:[%s442 + $0x17c] sm:$0xff]
        %v1783 = vld [vmem:[%s442 + $0x1a4] sm:$0xff]
        %v1784 = vld [vmem:[%s442 + $0x1cc] sm:$0xff]
        %v1785 = vld [vmem:[%s442 + $0x1f4] sm:$0xff]
        %v1786 = vld [vmem:[%s442 + $0x21c] sm:$0xff]
        %v1787 = vld [vmem:[%s442 + $0x244] sm:$0xff]
        %v1788 = vld [vmem:[%s442 + $0x26c] sm:$0xff]
        %v1789 = vld [vmem:[%s433 + $0xb] sm:$0x3]
        %v1791 = vlaneseq
        %v1792 = vshrl.u32 %v1791, 7
        %v1793 = vsub.s32 0, %v1792
        %v1794 = vrot.slane %v1789, %v1793
        %v1795 = vlaneseq
        %v1796 = vshrl.u32 %v1795, 7
        %v1797 = vsub.s32 1, %v1796
        %v1798 = vrot.slane %v1789, %v1797
        %v1817 = vunpack.c.l.b16 %v1773
        %v1818 = vunpack.c.h.b16 %v1773
        %v1819 = vunpack.c.l.b16 %v1774
        %v1820 = vunpack.c.h.b16 %v1774
        %v1821 = vunpack.c.l.b16 %v1775
        %v1822 = vunpack.c.h.b16 %v1775
        %v1823 = vunpack.c.l.b16 %v1776
        %v1824 = vunpack.c.h.b16 %v1776
        %v1825 = vunpack.c.l.b16 %v1777
        %v1826 = vunpack.c.h.b16 %v1777
        %v1827 = vunpack.c.l.b16 %v1778
        %v1828 = vunpack.c.h.b16 %v1778
        %v1829 = vunpack.c.l.b16 %v1779
        %v1830 = vunpack.c.h.b16 %v1779
        %v1831 = vunpack.c.l.b16 %v1780
        %v1832 = vunpack.c.h.b16 %v1780
        %v1833 = vunpack.c.l.b16 %v1781
        %v1834 = vunpack.c.h.b16 %v1781
        %v1835 = vunpack.c.l.b16 %v1782
        %v1836 = vunpack.c.h.b16 %v1782
        %v1837 = vunpack.c.l.b16 %v1783
        %v1838 = vunpack.c.h.b16 %v1783
        %v1839 = vunpack.c.l.b16 %v1784
        %v1840 = vunpack.c.h.b16 %v1784
        %v1841 = vunpack.c.l.b16 %v1785
        %v1842 = vunpack.c.h.b16 %v1785
        %v1843 = vunpack.c.l.b16 %v1786
        %v1844 = vunpack.c.h.b16 %v1786
        %v1845 = vunpack.c.l.b16 %v1787
        %v1846 = vunpack.c.h.b16 %v1787
        %v1847 = vunpack.c.l.b16 %v1788
        %v1848 = vunpack.c.h.b16 %v1788
        %v1849 = vpack.c.b16 %v1819, %v1817
        %v1850 = vpack.c.b16 %v1820, %v1818
        %v1851 = vpack.c.b16 %v1823, %v1821
        %v1852 = vpack.c.b16 %v1824, %v1822
        %v1853 = vpack.c.b16 %v1827, %v1825
        %v1854 = vpack.c.b16 %v1828, %v1826
        %v1855 = vpack.c.b16 %v1831, %v1829
        %v1856 = vpack.c.b16 %v1832, %v1830
        %v1857 = vpack.c.b16 %v1835, %v1833
        %v1858 = vpack.c.b16 %v1836, %v1834
        %v1859 = vpack.c.b16 %v1839, %v1837
        %v1860 = vpack.c.b16 %v1840, %v1838
        %v1861 = vpack.c.b16 %v1843, %v1841
        %v1862 = vpack.c.b16 %v1844, %v1842
        %v1863 = vpack.c.b16 %v1847, %v1845
        %v1864 = vpack.c.b16 %v1848, %v1846
        %1881 = vmatprep.subr.bf16.mxu0 %v1850
        %1882 = vmatpush1.bf16.msra.mxu0 %v1849
        %1883 = vmatprep.subr.bf16.mxu0 %v1852
        %1884 = vmatpush1.bf16.msra.mxu0 %v1851
        %1885 = vmatprep.subr.bf16.mxu0 %v1854
        %1886 = vmatpush1.bf16.msra.mxu0 %v1853
        %1887 = vmatprep.subr.bf16.mxu0 %v1856
        %1888 = vmatpush1.bf16.msra.mxu0 %v1855
        %1889 = vmatprep.subr.bf16.mxu0 %v1858
        %1890 = vmatpush1.bf16.msra.mxu0 %v1857
        %1891 = vmatprep.subr.bf16.mxu0 %v1860
        %1892 = vmatpush1.bf16.msra.mxu0 %v1859
        %1893 = vmatprep.subr.bf16.mxu0 %v1862
        %1894 = vmatpush1.bf16.msra.mxu0 %v1861
        %1895 = vmatprep.subr.bf16.mxu0 %v1864
        %1896 = vmatpush1.bf16.msra.mxu0 %v1863
        %1897 = vmatprep.subr.bf16.mxu0 0
        %1898 = vmatpush1.bf16.msra.mxu0 0
        %1899 = vmatprep.subr.bf16.mxu0 0
        %1900 = vmatpush1.bf16.msra.mxu0 0
        %1901 = vmatprep.subr.bf16.mxu0 0
        %1902 = vmatpush1.bf16.msra.mxu0 0
        %1903 = vmatprep.subr.bf16.mxu0 0
        %1904 = vmatpush1.bf16.msra.mxu0 0
        %1905 = vmatprep.subr.bf16.mxu0 0
        %1906 = vmatpush1.bf16.msra.mxu0 0
        %1907 = vmatprep.subr.bf16.mxu0 0
        %1908 = vmatpush1.bf16.msra.mxu0 0
        %1909 = vmatprep.subr.bf16.mxu0 0
        %1910 = vmatpush1.bf16.msra.mxu0 0
        %1911 = vmatprep.subr.bf16.mxu0 0
        %1912 = vmatpush1.bf16.msra.mxu0 0
        %1913 = vmatprep.mubr.bf16.mxu0 0
        %1914 = vmatmul.mubr.bf16.gmra.mrb[0].mxu0 %v530
        %v1915 = vpop.f32.mrb[0].mxu0
        %v1916 = vadd.f32 %v1794, %v1915
        %v1917 = vpop.f32.mrb[0].mxu0
        %v1918 = vadd.f32 %v1798, %v1917
        %v1919 = vpop.f32.mrb[0].mxu0
        %v1920 = vadd.f32 %v1794, %v1919
        %v1921 = vpop.f32.mrb[0].mxu0
        %v1922 = vadd.f32 %v1798, %v1921
        %1923 = vmatprep.mubr.bf16.mxu0 0
        %1924 = vmatmul.mubr.bf16.gmra.mrb[0].mxu0 %v531
        %v1925 = vpop.f32.mrb[0].mxu0
        %v1926 = vadd.f32 %v1794, %v1925
        %v1927 = vpop.f32.mrb[0].mxu0
        %v1928 = vadd.f32 %v1798, %v1927
        %v1929 = vpop.f32.mrb[0].mxu0
        %v1930 = vpop.f32.mrb[0].mxu0
        %1931 = vdwg.mxu0
        %v1932 = vld [vmem:[%s442 + $0x1c] sm:$0xf]
        %v1933 = vld [vmem:[%s442 + $0x44] sm:$0xf]
        %v1934 = vld [vmem:[%s442 + $0x6c] sm:$0xf]
        %v1935 = vld [vmem:[%s442 + $0x94] sm:$0xf]
        %v1936 = vld [vmem:[%s442 + $0xbc] sm:$0xf]
        %v1937 = vld [vmem:[%s442 + $0xe4] sm:$0xf]
        %v1938 = vld [vmem:[%s442 + $0x10c] sm:$0xf]
        %v1939 = vld [vmem:[%s442 + $0x134] sm:$0xf]
        %v1940 = vld [vmem:[%s442 + $0x15c] sm:$0xf]
        %v1941 = vld [vmem:[%s442 + $0x184] sm:$0xf]
        %v1942 = vld [vmem:[%s442 + $0x1ac] sm:$0xf]
        %v1943 = vld [vmem:[%s442 + $0x1d4] sm:$0xf]
        %v1944 = vld [vmem:[%s442 + $0x1fc] sm:$0xf]
        %v1945 = vld [vmem:[%s442 + $0x224] sm:$0xf]
        %v1946 = vld [vmem:[%s442 + $0x24c] sm:$0xf]
        %v1947 = vld [vmem:[%s442 + $0x274] sm:$0xf]
        %v1948 = vpack.c.bf16 %v1770, %v1767
        %v1949 = vpack.c.bf16 %v1920, %v1916
        %v1950 = vpack.c.bf16 %v1926, %v1926
        %v1951 = vpack.c.bf16 %v1922, %v1918
        %v1952 = vpack.c.bf16 %v1928, %v1928
        %v1954 = vsel %vm879, %v1948, 0
        %v1957 = vsel %vm879, %v1949, 0
        %v1960 = vsel %vm879, %v1950, 0
        %1962 = vmatprep.subr.bf16.mxu0 0
        %1963 = vmatpush1.bf16.xpose.msra.mxu0 %v1957
        %1964 = vmatprep.subr.bf16.mxu0 0
        %1965 = vmatpush1.bf16.xpose.msra.mxu0 %v1960
        %1966 = vmatprep.subr.bf16.mxu0 0
        %1967 = vmatpush1.bf16.xpose.msra.mxu0 0
        %1968 = vmatprep.subr.bf16.mxu0 0
        %1969 = vmatpush1.bf16.xpose.msra.mxu0 0
        %1970 = vmatprep.subr.bf16.mxu0 0
        %1971 = vmatpush1.bf16.xpose.msra.mxu0 0
        %1972 = vmatprep.subr.bf16.mxu0 0
        %1973 = vmatpush1.bf16.xpose.msra.mxu0 0
        %1974 = vmatprep.subr.bf16.mxu0 0
        %1975 = vmatpush1.bf16.xpose.msra.mxu0 0
        %1976 = vmatprep.subr.bf16.mxu0 0
        %1977 = vmatpush1.bf16.xpose.msra.mxu0 0
        %1978 = vmatprep.subr.bf16.mxu0 0
        %1979 = vmatpush1.bf16.xpose.msra.mxu0 0
        %1980 = vmatprep.subr.bf16.mxu0 0
        %1981 = vmatpush1.bf16.xpose.msra.mxu0 0
        %1982 = vmatprep.subr.bf16.mxu0 0
        %1983 = vmatpush1.bf16.xpose.msra.mxu0 0
        %1984 = vmatprep.subr.bf16.mxu0 0
        %1985 = vmatpush1.bf16.xpose.msra.mxu0 0
        %1986 = vmatprep.subr.bf16.mxu0 0
        %1987 = vmatpush1.bf16.xpose.msra.mxu0 0
        %1988 = vmatprep.subr.bf16.mxu0 0
        %1989 = vmatpush1.bf16.xpose.msra.mxu0 0
        %1990 = vmatprep.subr.bf16.mxu0 0
        %1991 = vmatpush1.bf16.xpose.msra.mxu0 0
        %1992 = vmatprep.subr.bf16.mxu0 0
        %1993 = vmatpush1.bf16.xpose.msra.mxu0 0
        %1994 = vmatprep.mubr.bf16.mxu0 0
        %1995 = vmatmul.mubr.bf16.gmra.mrb[0].mxu0 %v1954
        %v1996 = vpop.f32.mrb[0].mxu0
        %v1997 = vadd.f32 0.0, %v1996
        %v1998 = vpop.f32.mrb[0].mxu0
        %v1999 = vpop.f32.mrb[0].mxu0
        %v2000 = vadd.f32 0.0, %v1999
        %v2001 = vpop.f32.mrb[0].mxu0
        %2002 = vdwg.mxu0
        %v2003 = vmul.f32 %v1997, 0.17677669
        %v2004 = vmul.f32 %v2000, 0.17677669
        %v2005 = vsel %vm556, %v2003, -1e+09
        %v2006 = vsel %vm556, %v2004, -1e+09
        %vm2007 = vcmask 195584
        %v2008 = vsel %vm2007, %v2005, -inf
        %2009 = vmax.xlane.f32.xlu0 %v2008
        %v2010 = vpop.xlane.xlu0 %2009
        %v2011 = vsel %vm2007, %v2006, -inf
        %2012 = vmax.xlane.f32.xlu0 %v2011
        %v2013 = vpop.xlane.xlu0 %2012
        %v2014 = vsub.f32 %v2005, %v2010
        %v2015 = vsub.f32 %v2006, %v2013
        %v2016 = vmul.f32 %v2014, 1.442695
        %v2017 = vpow.pop %v2016
        %v2018 = vmul.f32 %v2015, 1.442695
        %v2019 = vpow.pop %v2018
        %v2020 = vsel %vm2007, %v2017, 0.0
        %2021 = vadd.xlane.f32.xlu0 %v2020
        %v2022 = vpop.xlane.xlu0 %2021
        %v2023 = vsel %vm2007, %v2019, 0.0
        %2024 = vadd.xlane.f32.xlu0 %v2023
        %v2025 = vpop.xlane.xlu0 %2024
        %v2026 = vrcp.pop %v2022
        %v2027 = vrcp.pop %v2025
        %v2028 = vmul.f32 %v2017, %v2026
        %v2029 = vmul.f32 %v2019, %v2027
        %v2030 = vpack.c.bf16 %v2029, %v2028
        %v2032 = vsel %vm2007, %v2030, 0
        %vm2034 = vcmask 1043456
        %v2036 = vsel %vm2034, %v1952, 0
        %2038 = vmatprep.subr.bf16.mxu0 0
        %2039 = vmatpush1.bf16.msra.mxu0 %v1951
        %2040 = vmatprep.subr.bf16.mxu0 0
        %2041 = vmatpush1.bf16.msra.mxu0 %v2036
        %2042 = vmatprep.subr.bf16.mxu0 0
        %2043 = vmatpush1.bf16.msra.mxu0 0
        %2044 = vmatprep.subr.bf16.mxu0 0
        %2045 = vmatpush1.bf16.msra.mxu0 0
        %2046 = vmatprep.subr.bf16.mxu0 0
        %2047 = vmatpush1.bf16.msra.mxu0 0
        %2048 = vmatprep.subr.bf16.mxu0 0
        %2049 = vmatpush1.bf16.msra.mxu0 0
        %2050 = vmatprep.subr.bf16.mxu0 0
        %2051 = vmatpush1.bf16.msra.mxu0 0
        %2052 = vmatprep.subr.bf16.mxu0 0
        %2053 = vmatpush1.bf16.msra.mxu0 0
        %2054 = vmatprep.subr.bf16.mxu0 0
        %2055 = vmatpush1.bf16.msra.mxu0 0
        %2056 = vmatprep.subr.bf16.mxu0 0
        %2057 = vmatpush1.bf16.msra.mxu0 0
        %2058 = vmatprep.subr.bf16.mxu0 0
        %2059 = vmatpush1.bf16.msra.mxu0 0
        %2060 = vmatprep.subr.bf16.mxu0 0
        %2061 = vmatpush1.bf16.msra.mxu0 0
        %2062 = vmatprep.subr.bf16.mxu0 0
        %2063 = vmatpush1.bf16.msra.mxu0 0
        %2064 = vmatprep.subr.bf16.mxu0 0
        %2065 = vmatpush1.bf16.msra.mxu0 0
        %2066 = vmatprep.subr.bf16.mxu0 0
        %2067 = vmatpush1.bf16.msra.mxu0 0
        %2068 = vmatprep.subr.bf16.mxu0 0
        %2069 = vmatpush1.bf16.msra.mxu0 0
        %2070 = vmatprep.mubr.bf16.mxu0 0
        %2071 = vmatmul.mubr.bf16.gmra.mrb[0].mxu0 %v2032
        %v2072 = vpop.f32.mrb[0].mxu0
        %v2073 = vadd.f32 0.0, %v2072
        %v2074 = vpop.f32.mrb[0].mxu0
        %v2075 = vpop.f32.mrb[0].mxu0
        %v2076 = vadd.f32 0.0, %v2075
        %v2077 = vpop.f32.mrb[0].mxu0
        %2078 = vdwg.mxu0
        %v2079 = vpack.c.bf16 %v2076, %v2073
        %2081 = vrot.lane.b32.xlu0 %v1948, 96
        %v2082 = vpop.permute.xlu0 %2081
        %2085 = vrot.lane.b32.xlu0 %v1949, 96
        %v2086 = vpop.permute.xlu0 %2085
        %2087 = vrot.lane.b32.xlu0 %v1950, 96
        %v2088 = vpop.permute.xlu0 %2087
        %v2090 = vsel %vm879, %v2082, 0
        %v2093 = vsel %vm879, %v2086, 0
        %v2096 = vsel %vm879, %v2088, 0
        %2098 = vmatprep.subr.bf16.mxu0 0
        %2099 = vmatpush1.bf16.xpose.msra.mxu0 %v2093
        %2100 = vmatprep.subr.bf16.mxu0 0
        %2101 = vmatpush1.bf16.xpose.msra.mxu0 %v2096
        %2102 = vmatprep.subr.bf16.mxu0 0
        %2103 = vmatpush1.bf16.xpose.msra.mxu0 0
        %2104 = vmatprep.subr.bf16.mxu0 0
        %2105 = vmatpush1.bf16.xpose.msra.mxu0 0
        %2106 = vmatprep.subr.bf16.mxu0 0
        %2107 = vmatpush1.bf16.xpose.msra.mxu0 0
        %2108 = vmatprep.subr.bf16.mxu0 0
        %2109 = vmatpush1.bf16.xpose.msra.mxu0 0
        %2110 = vmatprep.subr.bf16.mxu0 0
        %2111 = vmatpush1.bf16.xpose.msra.mxu0 0
        %2112 = vmatprep.subr.bf16.mxu0 0
        %2113 = vmatpush1.bf16.xpose.msra.mxu0 0
        %2114 = vmatprep.subr.bf16.mxu0 0
        %2115 = vmatpush1.bf16.xpose.msra.mxu0 0
        %2116 = vmatprep.subr.bf16.mxu0 0
        %2117 = vmatpush1.bf16.xpose.msra.mxu0 0
        %2118 = vmatprep.subr.bf16.mxu0 0
        %2119 = vmatpush1.bf16.xpose.msra.mxu0 0
        %2120 = vmatprep.subr.bf16.mxu0 0
        %2121 = vmatpush1.bf16.xpose.msra.mxu0 0
        %2122 = vmatprep.subr.bf16.mxu0 0
        %2123 = vmatpush1.bf16.xpose.msra.mxu0 0
        %2124 = vmatprep.subr.bf16.mxu0 0
        %2125 = vmatpush1.bf16.xpose.msra.mxu0 0
        %2126 = vmatprep.subr.bf16.mxu0 0
        %2127 = vmatpush1.bf16.xpose.msra.mxu0 0
        %2128 = vmatprep.subr.bf16.mxu0 0
        %2129 = vmatpush1.bf16.xpose.msra.mxu0 0
        %2130 = vmatprep.mubr.bf16.mxu0 0
        %2131 = vmatmul.mubr.bf16.gmra.mrb[0].mxu0 %v2090
        %v2132 = vpop.f32.mrb[0].mxu0
        %v2133 = vadd.f32 0.0, %v2132
        %v2134 = vpop.f32.mrb[0].mxu0
        %v2135 = vpop.f32.mrb[0].mxu0
        %v2136 = vadd.f32 0.0, %v2135
        %v2137 = vpop.f32.mrb[0].mxu0
        %2138 = vdwg.mxu0
        %v2139 = vmul.f32 %v2133, 0.17677669
        %v2140 = vmul.f32 %v2136, 0.17677669
        %v2141 = vsel %vm556, %v2139, -1e+09
        %v2142 = vsel %vm556, %v2140, -1e+09
        %v2143 = vsel %vm2007, %v2141, -inf
        %2144 = vmax.xlane.f32.xlu0 %v2143
        %v2145 = vpop.xlane.xlu0 %2144
        %v2146 = vsel %vm2007, %v2142, -inf
        %2147 = vmax.xlane.f32.xlu0 %v2146
        %v2148 = vpop.xlane.xlu0 %2147
        %v2149 = vsub.f32 %v2141, %v2145
        %v2150 = vsub.f32 %v2142, %v2148
        %v2151 = vmul.f32 %v2149, 1.442695
        %v2152 = vpow.pop %v2151
        %v2153 = vmul.f32 %v2150, 1.442695
        %v2154 = vpow.pop %v2153
        %v2155 = vsel %vm2007, %v2152, 0.0
        %2156 = vadd.xlane.f32.xlu0 %v2155
        %v2157 = vpop.xlane.xlu0 %2156
        %v2158 = vsel %vm2007, %v2154, 0.0
        %2159 = vadd.xlane.f32.xlu0 %v2158
        %v2160 = vpop.xlane.xlu0 %2159
        %v2161 = vrcp.pop %v2157
        %v2162 = vrcp.pop %v2160
        %v2163 = vmul.f32 %v2152, %v2161
        %v2164 = vmul.f32 %v2154, %v2162
        %v2165 = vpack.c.bf16 %v2164, %v2163
        %2168 = vrot.lane.b32.xlu0 %v1951, 96
        %v2169 = vpop.permute.xlu0 %2168
        %2170 = vrot.lane.b32.xlu0 %v1952, 96
        %v2171 = vpop.permute.xlu0 %2170
        %v2174 = vsel %vm2007, %v2165, 0
        %v2177 = vsel %vm2034, %v2171, 0
        %2179 = vmatprep.subr.bf16.mxu0 0
        %2180 = vmatpush1.bf16.msra.mxu0 %v2169
        %2181 = vmatprep.subr.bf16.mxu0 0
        %2182 = vmatpush1.bf16.msra.mxu0 %v2177
        %2183 = vmatprep.subr.bf16.mxu0 0
        %2184 = vmatpush1.bf16.msra.mxu0 0
        %2185 = vmatprep.subr.bf16.mxu0 0
        %2186 = vmatpush1.bf16.msra.mxu0 0
        %2187 = vmatprep.subr.bf16.mxu0 0
        %2188 = vmatpush1.bf16.msra.mxu0 0
        %2189 = vmatprep.subr.bf16.mxu0 0
        %2190 = vmatpush1.bf16.msra.mxu0 0
        %2191 = vmatprep.subr.bf16.mxu0 0
        %2192 = vmatpush1.bf16.msra.mxu0 0
        %2193 = vmatprep.subr.bf16.mxu0 0
        %2194 = vmatpush1.bf16.msra.mxu0 0
        %2195 = vmatprep.subr.bf16.mxu0 0
        %2196 = vmatpush1.bf16.msra.mxu0 0
        %2197 = vmatprep.subr.bf16.mxu0 0
        %2198 = vmatpush1.bf16.msra.mxu0 0
        %2199 = vmatprep.subr.bf16.mxu0 0
        %2200 = vmatpush1.bf16.msra.mxu0 0
        %2201 = vmatprep.subr.bf16.mxu0 0
        %2202 = vmatpush1.bf16.msra.mxu0 0
        %2203 = vmatprep.subr.bf16.mxu0 0
        %2204 = vmatpush1.bf16.msra.mxu0 0
        %2205 = vmatprep.subr.bf16.mxu0 0
        %2206 = vmatpush1.bf16.msra.mxu0 0
        %2207 = vmatprep.subr.bf16.mxu0 0
        %2208 = vmatpush1.bf16.msra.mxu0 0
        %2209 = vmatprep.subr.bf16.mxu0 0
        %2210 = vmatpush1.bf16.msra.mxu0 0
        %2211 = vmatprep.mubr.bf16.mxu0 0
        %2212 = vmatmul.mubr.bf16.gmra.mrb[0].mxu0 %v2174
        %v2213 = vpop.f32.mrb[0].mxu0
        %v2214 = vadd.f32 0.0, %v2213
        %v2215 = vpop.f32.mrb[0].mxu0
        %v2216 = vpop.f32.mrb[0].mxu0
        %v2217 = vadd.f32 0.0, %v2216
        %v2218 = vpop.f32.mrb[0].mxu0
        %2219 = vdwg.mxu0
        %v2220 = vpack.c.bf16 %v2217, %v2214
        %v2225 = vunpack.c.l.b16 %v1936
        %v2226 = vunpack.c.l.b16 %v1937
        %v2227 = vunpack.c.l.b16 %v1938
        %v2228 = vunpack.c.l.b16 %v1939
        %v2229 = vpack.c.b16 %v2226, %v2225
        %v2230 = vpack.c.b16 %v2228, %v2227
        %v2234 = vsel %vm879, %v2220, 0
        %2236 = vmatprep.subr.bf16.mxu0 0
        %2237 = vmatpush1.bf16.msra.mxu0 %v2229
        %2238 = vmatprep.subr.bf16.mxu0 0
        %2239 = vmatpush1.bf16.msra.mxu0 %v2230
        %2240 = vmatprep.subr.bf16.mxu0 0
        %2241 = vmatpush1.bf16.msra.mxu0 0
        %2242 = vmatprep.subr.bf16.mxu0 0
        %2243 = vmatpush1.bf16.msra.mxu0 0
        %2244 = vmatprep.subr.bf16.mxu0 0
        %2245 = vmatpush1.bf16.msra.mxu0 0
        %2246 = vmatprep.subr.bf16.mxu0 0
        %2247 = vmatpush1.bf16.msra.mxu0 0
        %2248 = vmatprep.subr.bf16.mxu0 0
        %2249 = vmatpush1.bf16.msra.mxu0 0
        %2250 = vmatprep.subr.bf16.mxu0 0
        %2251 = vmatpush1.bf16.msra.mxu0 0
        %2252 = vmatprep.subr.bf16.mxu0 0
        %2253 = vmatpush1.bf16.msra.mxu0 0
        %2254 = vmatprep.subr.bf16.mxu0 0
        %2255 = vmatpush1.bf16.msra.mxu0 0
        %2256 = vmatprep.subr.bf16.mxu0 0
        %2257 = vmatpush1.bf16.msra.mxu0 0
        %2258 = vmatprep.subr.bf16.mxu0 0
        %2259 = vmatpush1.bf16.msra.mxu0 0
        %2260 = vmatprep.subr.bf16.mxu0 0
        %2261 = vmatpush1.bf16.msra.mxu0 0
        %2262 = vmatprep.subr.bf16.mxu0 0
        %2263 = vmatpush1.bf16.msra.mxu0 0
        %2264 = vmatprep.subr.bf16.mxu0 0
        %2265 = vmatpush1.bf16.msra.mxu0 0
        %2266 = vmatprep.subr.bf16.mxu0 0
        %2267 = vmatpush1.bf16.msra.mxu0 0
        %2268 = vmatprep.mubr.bf16.mxu0 0
        %2269 = vmatmul.mubr.bf16.gmra.mrb[0].mxu0 %v2234
        %v2270 = vpop.f32.mrb[0].mxu0
        %v2271 = vadd.f32 0.0, %v2270
        %v2272 = vpop.f32.mrb[0].mxu0
        %v2273 = vpop.f32.mrb[0].mxu0
        %v2274 = vadd.f32 0.0, %v2273
        %v2275 = vpop.f32.mrb[0].mxu0
        %2276 = vdwg.mxu0
        %v2281 = vunpack.c.l.b16 %v1932
        %v2282 = vunpack.c.l.b16 %v1933
        %v2283 = vunpack.c.l.b16 %v1934
        %v2284 = vunpack.c.l.b16 %v1935
        %v2285 = vpack.c.b16 %v2282, %v2281
        %v2286 = vpack.c.b16 %v2284, %v2283
        %v2290 = vsel %vm879, %v2079, 0
        %2292 = vmatprep.subr.bf16.mxu0 0
        %2293 = vmatpush1.bf16.msra.mxu0 %v2285
        %2294 = vmatprep.subr.bf16.mxu0 0
        %2295 = vmatpush1.bf16.msra.mxu0 %v2286
        %2296 = vmatprep.subr.bf16.mxu0 0
        %2297 = vmatpush1.bf16.msra.mxu0 0
        %2298 = vmatprep.subr.bf16.mxu0 0
        %2299 = vmatpush1.bf16.msra.mxu0 0
        %2300 = vmatprep.subr.bf16.mxu0 0
        %2301 = vmatpush1.bf16.msra.mxu0 0
        %2302 = vmatprep.subr.bf16.mxu0 0
        %2303 = vmatpush1.bf16.msra.mxu0 0
        %2304 = vmatprep.subr.bf16.mxu0 0
        %2305 = vmatpush1.bf16.msra.mxu0 0
        %2306 = vmatprep.subr.bf16.mxu0 0
        %2307 = vmatpush1.bf16.msra.mxu0 0
        %2308 = vmatprep.subr.bf16.mxu0 0
        %2309 = vmatpush1.bf16.msra.mxu0 0
        %2310 = vmatprep.subr.bf16.mxu0 0
        %2311 = vmatpush1.bf16.msra.mxu0 0
        %2312 = vmatprep.subr.bf16.mxu0 0
        %2313 = vmatpush1.bf16.msra.mxu0 0
        %2314 = vmatprep.subr.bf16.mxu0 0
        %2315 = vmatpush1.bf16.msra.mxu0 0
        %2316 = vmatprep.subr.bf16.mxu0 0
        %2317 = vmatpush1.bf16.msra.mxu0 0
        %2318 = vmatprep.subr.bf16.mxu0 0
        %2319 = vmatpush1.bf16.msra.mxu0 0
        %2320 = vmatprep.subr.bf16.mxu0 0
        %2321 = vmatpush1.bf16.msra.mxu0 0
        %2322 = vmatprep.subr.bf16.mxu0 0
        %2323 = vmatpush1.bf16.msra.mxu0 0
        %2324 = vmatprep.mubr.bf16.mxu0 0
        %2325 = vmatmul.mubr.bf16.gmra.mrb[0].mxu0 %v2290
        %v2326 = vpop.f32.mrb[0].mxu0
        %v2327 = vadd.f32 %v2271, %v2326
        %v2328 = vpop.f32.mrb[0].mxu0
        %v2329 = vpop.f32.mrb[0].mxu0
        %v2330 = vadd.f32 %v2274, %v2329
        %v2331 = vpop.f32.mrb[0].mxu0
        %2332 = vdwg.mxu0
        %2333 = vrot.lane.b32.xlu0 %v1948, 64
        %v2334 = vpop.permute.xlu0 %2333
        %2335 = vrot.lane.b32.xlu0 %v1949, 64
        %v2336 = vpop.permute.xlu0 %2335
        %2337 = vrot.lane.b32.xlu0 %v1950, 64
        %v2338 = vpop.permute.xlu0 %2337
        %v2340 = vsel %vm879, %v2334, 0
        %v2343 = vsel %vm879, %v2336, 0
        %v2346 = vsel %vm879, %v2338, 0
        %2348 = vmatprep.subr.bf16.mxu0 0
        %2349 = vmatpush1.bf16.xpose.msra.mxu0 %v2343
        %2350 = vmatprep.subr.bf16.mxu0 0
        %2351 = vmatpush1.bf16.xpose.msra.mxu0 %v2346
        %2352 = vmatprep.subr.bf16.mxu0 0
        %2353 = vmatpush1.bf16.xpose.msra.mxu0 0
        %2354 = vmatprep.subr.bf16.mxu0 0
        %2355 = vmatpush1.bf16.xpose.msra.mxu0 0
        %2356 = vmatprep.subr.bf16.mxu0 0
        %2357 = vmatpush1.bf16.xpose.msra.mxu0 0
        %2358 = vmatprep.subr.bf16.mxu0 0
        %2359 = vmatpush1.bf16.xpose.msra.mxu0 0
        %2360 = vmatprep.subr.bf16.mxu0 0
        %2361 = vmatpush1.bf16.xpose.msra.mxu0 0
        %2362 = vmatprep.subr.bf16.mxu0 0
        %2363 = vmatpush1.bf16.xpose.msra.mxu0 0
        %2364 = vmatprep.subr.bf16.mxu0 0
        %2365 = vmatpush1.bf16.xpose.msra.mxu0 0
        %2366 = vmatprep.subr.bf16.mxu0 0
        %2367 = vmatpush1.bf16.xpose.msra.mxu0 0
        %2368 = vmatprep.subr.bf16.mxu0 0
        %2369 = vmatpush1.bf16.xpose.msra.mxu0 0
        %2370 = vmatprep.subr.bf16.mxu0 0
        %2371 = vmatpush1.bf16.xpose.msra.mxu0 0
        %2372 = vmatprep.subr.bf16.mxu0 0
        %2373 = vmatpush1.bf16.xpose.msra.mxu0 0
        %2374 = vmatprep.subr.bf16.mxu0 0
        %2375 = vmatpush1.bf16.xpose.msra.mxu0 0
        %2376 = vmatprep.subr.bf16.mxu0 0
        %2377 = vmatpush1.bf16.xpose.msra.mxu0 0
        %2378 = vmatprep.subr.bf16.mxu0 0
        %2379 = vmatpush1.bf16.xpose.msra.mxu0 0
        %2380 = vmatprep.mubr.bf16.mxu0 0
        %2381 = vmatmul.mubr.bf16.gmra.mrb[0].mxu0 %v2340
        %v2382 = vpop.f32.mrb[0].mxu0
        %v2383 = vadd.f32 0.0, %v2382
        %v2384 = vpop.f32.mrb[0].mxu0
        %v2385 = vpop.f32.mrb[0].mxu0
        %v2386 = vadd.f32 0.0, %v2385
        %v2387 = vpop.f32.mrb[0].mxu0
        %2388 = vdwg.mxu0
        %v2389 = vmul.f32 %v2383, 0.17677669
        %v2390 = vmul.f32 %v2386, 0.17677669
        %v2391 = vsel %vm556, %v2389, -1e+09
        %v2392 = vsel %vm556, %v2390, -1e+09
        %v2393 = vsel %vm2007, %v2391, -inf
        %2394 = vmax.xlane.f32.xlu0 %v2393
        %v2395 = vpop.xlane.xlu0 %2394
        %v2396 = vsel %vm2007, %v2392, -inf
        %2397 = vmax.xlane.f32.xlu0 %v2396
        %v2398 = vpop.xlane.xlu0 %2397
        %v2399 = vsub.f32 %v2391, %v2395
        %v2400 = vsub.f32 %v2392, %v2398
        %v2401 = vmul.f32 %v2399, 1.442695
        %v2402 = vpow.pop %v2401
        %v2403 = vmul.f32 %v2400, 1.442695
        %v2404 = vpow.pop %v2403
        %v2405 = vsel %vm2007, %v2402, 0.0
        %2406 = vadd.xlane.f32.xlu0 %v2405
        %v2407 = vpop.xlane.xlu0 %2406
        %v2408 = vsel %vm2007, %v2404, 0.0
        %2409 = vadd.xlane.f32.xlu0 %v2408
        %v2410 = vpop.xlane.xlu0 %2409
        %v2411 = vrcp.pop %v2407
        %v2412 = vrcp.pop %v2410
        %v2413 = vmul.f32 %v2402, %v2411
        %v2414 = vmul.f32 %v2404, %v2412
        %v2415 = vpack.c.bf16 %v2414, %v2413
        %2416 = vrot.lane.b32.xlu0 %v1951, 64
        %v2417 = vpop.permute.xlu0 %2416
        %2418 = vrot.lane.b32.xlu0 %v1952, 64
        %v2419 = vpop.permute.xlu0 %2418
        %v2422 = vsel %vm2007, %v2415, 0
        %v2425 = vsel %vm2034, %v2419, 0
        %2427 = vmatprep.subr.bf16.mxu0 0
        %2428 = vmatpush1.bf16.msra.mxu0 %v2417
        %2429 = vmatprep.subr.bf16.mxu0 0
        %2430 = vmatpush1.bf16.msra.mxu0 %v2425
        %2431 = vmatprep.subr.bf16.mxu0 0
        %2432 = vmatpush1.bf16.msra.mxu0 0
        %2433 = vmatprep.subr.bf16.mxu0 0
        %2434 = vmatpush1.bf16.msra.mxu0 0
        %2435 = vmatprep.subr.bf16.mxu0 0
        %2436 = vmatpush1.bf16.msra.mxu0 0
        %2437 = vmatprep.subr.bf16.mxu0 0
        %2438 = vmatpush1.bf16.msra.mxu0 0
        %2439 = vmatprep.subr.bf16.mxu0 0
        %2440 = vmatpush1.bf16.msra.mxu0 0
        %2441 = vmatprep.subr.bf16.mxu0 0
        %2442 = vmatpush1.bf16.msra.mxu0 0
        %2443 = vmatprep.subr.bf16.mxu0 0
        %2444 = vmatpush1.bf16.msra.mxu0 0
        %2445 = vmatprep.subr.bf16.mxu0 0
        %2446 = vmatpush1.bf16.msra.mxu0 0
        %2447 = vmatprep.subr.bf16.mxu0 0
        %2448 = vmatpush1.bf16.msra.mxu0 0
        %2449 = vmatprep.subr.bf16.mxu0 0
        %2450 = vmatpush1.bf16.msra.mxu0 0
        %2451 = vmatprep.subr.bf16.mxu0 0
        %2452 = vmatpush1.bf16.msra.mxu0 0
        %2453 = vmatprep.subr.bf16.mxu0 0
        %2454 = vmatpush1.bf16.msra.mxu0 0
        %2455 = vmatprep.subr.bf16.mxu0 0
        %2456 = vmatpush1.bf16.msra.mxu0 0
        %2457 = vmatprep.subr.bf16.mxu0 0
        %2458 = vmatpush1.bf16.msra.mxu0 0
        %2459 = vmatprep.mubr.bf16.mxu0 0
        %2460 = vmatmul.mubr.bf16.gmra.mrb[0].mxu0 %v2422
        %v2461 = vpop.f32.mrb[0].mxu0
        %v2462 = vadd.f32 0.0, %v2461
        %v2463 = vpop.f32.mrb[0].mxu0
        %v2464 = vpop.f32.mrb[0].mxu0
        %v2465 = vadd.f32 0.0, %v2464
        %v2466 = vpop.f32.mrb[0].mxu0
        %2467 = vdwg.mxu0
        %v2468 = vpack.c.bf16 %v2465, %v2462
        %v2473 = vunpack.c.l.b16 %v1940
        %v2474 = vunpack.c.l.b16 %v1941
        %v2475 = vunpack.c.l.b16 %v1942
        %v2476 = vunpack.c.l.b16 %v1943
        %v2477 = vpack.c.b16 %v2474, %v2473
        %v2478 = vpack.c.b16 %v2476, %v2475
        %v2482 = vsel %vm879, %v2468, 0
        %2484 = vmatprep.subr.bf16.mxu0 0
        %2485 = vmatpush1.bf16.msra.mxu0 %v2477
        %2486 = vmatprep.subr.bf16.mxu0 0
        %2487 = vmatpush1.bf16.msra.mxu0 %v2478
        %2488 = vmatprep.subr.bf16.mxu0 0
        %2489 = vmatpush1.bf16.msra.mxu0 0
        %2490 = vmatprep.subr.bf16.mxu0 0
        %2491 = vmatpush1.bf16.msra.mxu0 0
        %2492 = vmatprep.subr.bf16.mxu0 0
        %2493 = vmatpush1.bf16.msra.mxu0 0
        %2494 = vmatprep.subr.bf16.mxu0 0
        %2495 = vmatpush1.bf16.msra.mxu0 0
        %2496 = vmatprep.subr.bf16.mxu0 0
        %2497 = vmatpush1.bf16.msra.mxu0 0
        %2498 = vmatprep.subr.bf16.mxu0 0
        %2499 = vmatpush1.bf16.msra.mxu0 0
        %2500 = vmatprep.subr.bf16.mxu0 0
        %2501 = vmatpush1.bf16.msra.mxu0 0
        %2502 = vmatprep.subr.bf16.mxu0 0
        %2503 = vmatpush1.bf16.msra.mxu0 0
        %2504 = vmatprep.subr.bf16.mxu0 0
        %2505 = vmatpush1.bf16.msra.mxu0 0
        %2506 = vmatprep.subr.bf16.mxu0 0
        %2507 = vmatpush1.bf16.msra.mxu0 0
        %2508 = vmatprep.subr.bf16.mxu0 0
        %2509 = vmatpush1.bf16.msra.mxu0 0
        %2510 = vmatprep.subr.bf16.mxu0 0
        %2511 = vmatpush1.bf16.msra.mxu0 0
        %2512 = vmatprep.subr.bf16.mxu0 0
        %2513 = vmatpush1.bf16.msra.mxu0 0
        %2514 = vmatprep.subr.bf16.mxu0 0
        %2515 = vmatpush1.bf16.msra.mxu0 0
        %2516 = vmatprep.mubr.bf16.mxu0 0
        %2517 = vmatmul.mubr.bf16.gmra.mrb[0].mxu0 %v2482
        %v2518 = vpop.f32.mrb[0].mxu0
        %v2519 = vadd.f32 0.0, %v2518
        %v2520 = vpop.f32.mrb[0].mxu0
        %v2521 = vpop.f32.mrb[0].mxu0
        %v2522 = vadd.f32 0.0, %v2521
        %v2523 = vpop.f32.mrb[0].mxu0
        %2524 = vdwg.mxu0
        %v2525 = vadd.f32 %v2327, %v2519
        %v2526 = vadd.f32 %v2330, %v2522
        %2527 = vrot.lane.b32.xlu0 %v1948, 32
        %v2528 = vpop.permute.xlu0 %2527
        %2529 = vrot.lane.b32.xlu0 %v1949, 32
        %v2530 = vpop.permute.xlu0 %2529
        %2531 = vrot.lane.b32.xlu0 %v1950, 32
        %v2532 = vpop.permute.xlu0 %2531
        %v2534 = vsel %vm879, %v2528, 0
        %v2537 = vsel %vm879, %v2530, 0
        %v2540 = vsel %vm879, %v2532, 0
        %2542 = vmatprep.subr.bf16.mxu0 0
        %2543 = vmatpush1.bf16.xpose.msra.mxu0 %v2537
        %2544 = vmatprep.subr.bf16.mxu0 0
        %2545 = vmatpush1.bf16.xpose.msra.mxu0 %v2540
        %2546 = vmatprep.subr.bf16.mxu0 0
        %2547 = vmatpush1.bf16.xpose.msra.mxu0 0
        %2548 = vmatprep.subr.bf16.mxu0 0
        %2549 = vmatpush1.bf16.xpose.msra.mxu0 0
        %2550 = vmatprep.subr.bf16.mxu0 0
        %2551 = vmatpush1.bf16.xpose.msra.mxu0 0
        %2552 = vmatprep.subr.bf16.mxu0 0
        %2553 = vmatpush1.bf16.xpose.msra.mxu0 0
        %2554 = vmatprep.subr.bf16.mxu0 0
        %2555 = vmatpush1.bf16.xpose.msra.mxu0 0
        %2556 = vmatprep.subr.bf16.mxu0 0
        %2557 = vmatpush1.bf16.xpose.msra.mxu0 0
        %2558 = vmatprep.subr.bf16.mxu0 0
        %2559 = vmatpush1.bf16.xpose.msra.mxu0 0
        %2560 = vmatprep.subr.bf16.mxu0 0
        %2561 = vmatpush1.bf16.xpose.msra.mxu0 0
        %2562 = vmatprep.subr.bf16.mxu0 0
        %2563 = vmatpush1.bf16.xpose.msra.mxu0 0
        %2564 = vmatprep.subr.bf16.mxu0 0
        %2565 = vmatpush1.bf16.xpose.msra.mxu0 0
        %2566 = vmatprep.subr.bf16.mxu0 0
        %2567 = vmatpush1.bf16.xpose.msra.mxu0 0
        %2568 = vmatprep.subr.bf16.mxu0 0
        %2569 = vmatpush1.bf16.xpose.msra.mxu0 0
        %2570 = vmatprep.subr.bf16.mxu0 0
        %2571 = vmatpush1.bf16.xpose.msra.mxu0 0
        %2572 = vmatprep.subr.bf16.mxu0 0
        %2573 = vmatpush1.bf16.xpose.msra.mxu0 0
        %2574 = vmatprep.mubr.bf16.mxu0 0
        %2575 = vmatmul.mubr.bf16.gmra.mrb[0].mxu0 %v2534
        %v2576 = vpop.f32.mrb[0].mxu0
        %v2577 = vadd.f32 0.0, %v2576
        %v2578 = vpop.f32.mrb[0].mxu0
        %v2579 = vpop.f32.mrb[0].mxu0
        %v2580 = vadd.f32 0.0, %v2579
        %v2581 = vpop.f32.mrb[0].mxu0
        %2582 = vdwg.mxu0
        %v2583 = vmul.f32 %v2577, 0.17677669
        %v2584 = vmul.f32 %v2580, 0.17677669
        %v2585 = vsel %vm556, %v2583, -1e+09
        %v2586 = vsel %vm556, %v2584, -1e+09
        %v2587 = vsel %vm2007, %v2585, -inf
        %2588 = vmax.xlane.f32.xlu0 %v2587
        %v2589 = vpop.xlane.xlu0 %2588
        %v2590 = vsel %vm2007, %v2586, -inf
        %2591 = vmax.xlane.f32.xlu0 %v2590
        %v2592 = vpop.xlane.xlu0 %2591
        %v2593 = vsub.f32 %v2585, %v2589
        %v2594 = vsub.f32 %v2586, %v2592
        %v2595 = vmul.f32 %v2593, 1.442695
        %v2596 = vpow.pop %v2595
        %v2597 = vmul.f32 %v2594, 1.442695
        %v2598 = vpow.pop %v2597
        %v2599 = vsel %vm2007, %v2596, 0.0
        %2600 = vadd.xlane.f32.xlu0 %v2599
        %v2601 = vpop.xlane.xlu0 %2600
        %v2602 = vsel %vm2007, %v2598, 0.0
        %2603 = vadd.xlane.f32.xlu0 %v2602
        %v2604 = vpop.xlane.xlu0 %2603
        %v2605 = vrcp.pop %v2601
        %v2606 = vrcp.pop %v2604
        %v2607 = vmul.f32 %v2596, %v2605
        %v2608 = vmul.f32 %v2598, %v2606
        %v2609 = vpack.c.bf16 %v2608, %v2607
        %2610 = vrot.lane.b32.xlu0 %v1951, 32
        %v2611 = vpop.permute.xlu0 %2610
        %2612 = vrot.lane.b32.xlu0 %v1952, 32
        %v2613 = vpop.permute.xlu0 %2612
        %v2616 = vsel %vm2007, %v2609, 0
        %v2619 = vsel %vm2034, %v2613, 0
        %2621 = vmatprep.subr.bf16.mxu0 0
        %2622 = vmatpush1.bf16.msra.mxu0 %v2611
        %2623 = vmatprep.subr.bf16.mxu0 0
        %2624 = vmatpush1.bf16.msra.mxu0 %v2619
        %2625 = vmatprep.subr.bf16.mxu0 0
        %2626 = vmatpush1.bf16.msra.mxu0 0
        %2627 = vmatprep.subr.bf16.mxu0 0
        %2628 = vmatpush1.bf16.msra.mxu0 0
        %2629 = vmatprep.subr.bf16.mxu0 0
        %2630 = vmatpush1.bf16.msra.mxu0 0
        %2631 = vmatprep.subr.bf16.mxu0 0
        %2632 = vmatpush1.bf16.msra.mxu0 0
        %2633 = vmatprep.subr.bf16.mxu0 0
        %2634 = vmatpush1.bf16.msra.mxu0 0
        %2635 = vmatprep.subr.bf16.mxu0 0
        %2636 = vmatpush1.bf16.msra.mxu0 0
        %2637 = vmatprep.subr.bf16.mxu0 0
        %2638 = vmatpush1.bf16.msra.mxu0 0
        %2639 = vmatprep.subr.bf16.mxu0 0
        %2640 = vmatpush1.bf16.msra.mxu0 0
        %2641 = vmatprep.subr.bf16.mxu0 0
        %2642 = vmatpush1.bf16.msra.mxu0 0
        %2643 = vmatprep.subr.bf16.mxu0 0
        %2644 = vmatpush1.bf16.msra.mxu0 0
        %2645 = vmatprep.subr.bf16.mxu0 0
        %2646 = vmatpush1.bf16.msra.mxu0 0
        %2647 = vmatprep.subr.bf16.mxu0 0
        %2648 = vmatpush1.bf16.msra.mxu0 0
        %2649 = vmatprep.subr.bf16.mxu0 0
        %2650 = vmatpush1.bf16.msra.mxu0 0
        %2651 = vmatprep.subr.bf16.mxu0 0
        %2652 = vmatpush1.bf16.msra.mxu0 0
        %2653 = vmatprep.mubr.bf16.mxu0 0
        %2654 = vmatmul.mubr.bf16.gmra.mrb[0].mxu0 %v2616
        %v2655 = vpop.f32.mrb[0].mxu0
        %v2656 = vadd.f32 0.0, %v2655
        %v2657 = vpop.f32.mrb[0].mxu0
        %v2658 = vpop.f32.mrb[0].mxu0
        %v2659 = vadd.f32 0.0, %v2658
        %v2660 = vpop.f32.mrb[0].mxu0
        %2661 = vdwg.mxu0
        %v2662 = vpack.c.bf16 %v2659, %v2656
        %v2667 = vunpack.c.l.b16 %v1944
        %v2668 = vunpack.c.l.b16 %v1945
        %v2669 = vunpack.c.l.b16 %v1946
        %v2670 = vunpack.c.l.b16 %v1947
        %v2671 = vpack.c.b16 %v2668, %v2667
        %v2672 = vpack.c.b16 %v2670, %v2669
        %v2676 = vsel %vm879, %v2662, 0
        %2678 = vmatprep.subr.bf16.mxu0 0
        %2679 = vmatpush1.bf16.msra.mxu0 %v2671
        %2680 = vmatprep.subr.bf16.mxu0 0
        %2681 = vmatpush1.bf16.msra.mxu0 %v2672
        %2682 = vmatprep.subr.bf16.mxu0 0
        %2683 = vmatpush1.bf16.msra.mxu0 0
        %2684 = vmatprep.subr.bf16.mxu0 0
        %2685 = vmatpush1.bf16.msra.mxu0 0
        %2686 = vmatprep.subr.bf16.mxu0 0
        %2687 = vmatpush1.bf16.msra.mxu0 0
        %2688 = vmatprep.subr.bf16.mxu0 0
        %2689 = vmatpush1.bf16.msra.mxu0 0
        %2690 = vmatprep.subr.bf16.mxu0 0
        %2691 = vmatpush1.bf16.msra.mxu0 0
        %2692 = vmatprep.subr.bf16.mxu0 0
        %2693 = vmatpush1.bf16.msra.mxu0 0
        %2694 = vmatprep.subr.bf16.mxu0 0
        %2695 = vmatpush1.bf16.msra.mxu0 0
        %2696 = vmatprep.subr.bf16.mxu0 0
        %2697 = vmatpush1.bf16.msra.mxu0 0
        %2698 = vmatprep.subr.bf16.mxu0 0
        %2699 = vmatpush1.bf16.msra.mxu0 0
        %2700 = vmatprep.subr.bf16.mxu0 0
        %2701 = vmatpush1.bf16.msra.mxu0 0
        %2702 = vmatprep.subr.bf16.mxu0 0
        %2703 = vmatpush1.bf16.msra.mxu0 0
        %2704 = vmatprep.subr.bf16.mxu0 0
        %2705 = vmatpush1.bf16.msra.mxu0 0
        %2706 = vmatprep.subr.bf16.mxu0 0
        %2707 = vmatpush1.bf16.msra.mxu0 0
        %2708 = vmatprep.subr.bf16.mxu0 0
        %2709 = vmatpush1.bf16.msra.mxu0 0
        %2710 = vmatprep.mubr.bf16.mxu0 0
        %2711 = vmatmul.mubr.bf16.gmra.mrb[0].mxu0 %v2676
        %v2712 = vpop.f32.mrb[0].mxu0
        %v2713 = vadd.f32 0.0, %v2712
        %v2714 = vpop.f32.mrb[0].mxu0
        %v2715 = vpop.f32.mrb[0].mxu0
        %v2716 = vadd.f32 0.0, %v2715
        %v2717 = vpop.f32.mrb[0].mxu0
        %2718 = vdwg.mxu0
        %v2719 = vadd.f32 %v2525, %v2713
        %v2720 = vadd.f32 %v2526, %v2716
        %v2721 = vadd.f32 %v1618, %v2719
        %v2722 = vadd.f32 %v1619, %v2720
        %v2723 = vld [vmem:[%s433 + $0xd] sm:$0x1]
        %v2725 = vlaneseq
        %v2726 = vshrl.u32 %v2725, 7
        %v2727 = vsub.s32 0, %v2726
        %v2728 = vrot.slane %v2723, %v2727
        %v2730 = vadd.f32 %v2721, %v2728
        %v2731 = vadd.f32 %v2722, %v2728
        %v2732 = vld [vmem:[%s433 + $0x4] sm:$0x1]
        %v2733 = vld [vmem:[%s433 + $0x5] sm:$0x1]
        %2734 = vadd.xlane.f32.xlu0 %v2730
        %v2735 = vpop.xlane.xlu0 %2734
        %2736 = vadd.xlane.f32.xlu0 %v2731
        %v2737 = vpop.xlane.xlu0 %2736
        %v2738 = vmul.f32 %v2735, %v563
        %v2739 = vmul.f32 %v2737, %v563
        %v2740 = vsub.f32 %v2730, %v2738
        %v2741 = vsub.f32 %v2731, %v2739
        %v2742 = vmul.f32 %v2740, %v2740
        %v2743 = vmul.f32 %v2741, %v2741
        %2744 = vadd.xlane.f32.xlu0 %v2742
        %v2745 = vpop.xlane.xlu0 %2744
        %2746 = vadd.xlane.f32.xlu0 %v2743
        %v2747 = vpop.xlane.xlu0 %2746
        %v2748 = vmul.f32 %v2745, %v563
        %v2749 = vmul.f32 %v2747, %v563
        %v2750 = vadd.f32 %v2748, 1e-05
        %v2751 = vadd.f32 %v2749, 1e-05
        %v2752 = vrsqrt.pop %v2750
        %v2753 = vrsqrt.pop %v2751
        %v2754 = vmul.f32 %v2740, %v2752
        %v2755 = vmul.f32 %v2741, %v2753
        %v2757 = vlaneseq
        %v2758 = vshrl.u32 %v2757, 7
        %v2759 = vsub.s32 0, %v2758
        %v2760 = vrot.slane %v2732, %v2759
        %v2762 = vmul.f32 %v2754, %v2760
        %v2763 = vmul.f32 %v2755, %v2760
        %v2765 = vlaneseq
        %v2766 = vshrl.u32 %v2765, 7
        %v2767 = vsub.s32 0, %v2766
        %v2768 = vrot.slane %v2733, %v2767
        %v2770 = vadd.f32 %v2762, %v2768
        %v2771 = vadd.f32 %v2763, %v2768
        %v2772 = vpack.c.bf16 %v2771, %v2770
        %v2773 = vld [vmem:[%s442 + $0x20] sm:$0xff]
        %v2774 = vld [vmem:[%s442 + $0x48] sm:$0xff]
        %v2775 = vld [vmem:[%s442 + $0x70] sm:$0xff]
        %v2776 = vld [vmem:[%s442 + $0x98] sm:$0xff]
        %v2777 = vld [vmem:[%s442 + $0xc0] sm:$0xff]
        %v2778 = vld [vmem:[%s442 + $0xe8] sm:$0xff]
        %v2779 = vld [vmem:[%s442 + $0x110] sm:$0xff]
        %v2780 = vld [vmem:[%s442 + $0x138] sm:$0xff]
        %v2781 = vld [vmem:[%s442 + $0x160] sm:$0xff]
        %v2782 = vld [vmem:[%s442 + $0x188] sm:$0xff]
        %v2783 = vld [vmem:[%s442 + $0x1b0] sm:$0xff]
        %v2784 = vld [vmem:[%s442 + $0x1d8] sm:$0xff]
        %v2785 = vld [vmem:[%s442 + $0x200] sm:$0xff]
        %v2786 = vld [vmem:[%s442 + $0x228] sm:$0xff]
        %v2787 = vld [vmem:[%s442 + $0x250] sm:$0xff]
        %v2788 = vld [vmem:[%s442 + $0x278] sm:$0xff]
        %v2789 = vld [vmem:[%s433 + $0xe] sm:$0x3]
        %v2791 = vlaneseq
        %v2792 = vshrl.u32 %v2791, 7
        %v2793 = vsub.s32 0, %v2792
        %v2794 = vrot.slane %v2789, %v2793
        %v2795 = vlaneseq
        %v2796 = vshrl.u32 %v2795, 7
        %v2797 = vsub.s32 1, %v2796
        %v2798 = vrot.slane %v2789, %v2797
        %v2817 = vunpack.c.l.b16 %v2773
        %v2818 = vunpack.c.h.b16 %v2773
        %v2819 = vunpack.c.l.b16 %v2774
        %v2820 = vunpack.c.h.b16 %v2774
        %v2821 = vunpack.c.l.b16 %v2775
        %v2822 = vunpack.c.h.b16 %v2775
        %v2823 = vunpack.c.l.b16 %v2776
        %v2824 = vunpack.c.h.b16 %v2776
        %v2825 = vunpack.c.l.b16 %v2777
        %v2826 = vunpack.c.h.b16 %v2777
        %v2827 = vunpack.c.l.b16 %v2778
        %v2828 = vunpack.c.h.b16 %v2778
        %v2829 = vunpack.c.l.b16 %v2779
        %v2830 = vunpack.c.h.b16 %v2779
        %v2831 = vunpack.c.l.b16 %v2780
        %v2832 = vunpack.c.h.b16 %v2780
        %v2833 = vunpack.c.l.b16 %v2781
        %v2834 = vunpack.c.h.b16 %v2781
        %v2835 = vunpack.c.l.b16 %v2782
        %v2836 = vunpack.c.h.b16 %v2782
        %v2837 = vunpack.c.l.b16 %v2783
        %v2838 = vunpack.c.h.b16 %v2783
        %v2839 = vunpack.c.l.b16 %v2784
        %v2840 = vunpack.c.h.b16 %v2784
        %v2841 = vunpack.c.l.b16 %v2785
        %v2842 = vunpack.c.h.b16 %v2785
        %v2843 = vunpack.c.l.b16 %v2786
        %v2844 = vunpack.c.h.b16 %v2786
        %v2845 = vunpack.c.l.b16 %v2787
        %v2846 = vunpack.c.h.b16 %v2787
        %v2847 = vunpack.c.l.b16 %v2788
        %v2848 = vunpack.c.h.b16 %v2788
        %v2849 = vpack.c.b16 %v2819, %v2817
        %v2850 = vpack.c.b16 %v2820, %v2818
        %v2851 = vpack.c.b16 %v2823, %v2821
        %v2852 = vpack.c.b16 %v2824, %v2822
        %v2853 = vpack.c.b16 %v2827, %v2825
        %v2854 = vpack.c.b16 %v2828, %v2826
        %v2855 = vpack.c.b16 %v2831, %v2829
        %v2856 = vpack.c.b16 %v2832, %v2830
        %v2857 = vpack.c.b16 %v2835, %v2833
        %v2858 = vpack.c.b16 %v2836, %v2834
        %v2859 = vpack.c.b16 %v2839, %v2837
        %v2860 = vpack.c.b16 %v2840, %v2838
        %v2861 = vpack.c.b16 %v2843, %v2841
        %v2862 = vpack.c.b16 %v2844, %v2842
        %v2863 = vpack.c.b16 %v2847, %v2845
        %v2864 = vpack.c.b16 %v2848, %v2846
        %2881 = vmatprep.subr.bf16.mxu0 %v2850
        %2882 = vmatpush1.bf16.msra.mxu0 %v2849
        %2883 = vmatprep.subr.bf16.mxu0 %v2852
        %2884 = vmatpush1.bf16.msra.mxu0 %v2851
        %2885 = vmatprep.subr.bf16.mxu0 %v2854
        %2886 = vmatpush1.bf16.msra.mxu0 %v2853
        %2887 = vmatprep.subr.bf16.mxu0 %v2856
        %2888 = vmatpush1.bf16.msra.mxu0 %v2855
        %2889 = vmatprep.subr.bf16.mxu0 %v2858
        %2890 = vmatpush1.bf16.msra.mxu0 %v2857
        %2891 = vmatprep.subr.bf16.mxu0 %v2860
        %2892 = vmatpush1.bf16.msra.mxu0 %v2859
        %2893 = vmatprep.subr.bf16.mxu0 %v2862
        %2894 = vmatpush1.bf16.msra.mxu0 %v2861
        %2895 = vmatprep.subr.bf16.mxu0 %v2864
        %2896 = vmatpush1.bf16.msra.mxu0 %v2863
        %2897 = vmatprep.subr.bf16.mxu0 0
        %2898 = vmatpush1.bf16.msra.mxu0 0
        %2899 = vmatprep.subr.bf16.mxu0 0
        %2900 = vmatpush1.bf16.msra.mxu0 0
        %2901 = vmatprep.subr.bf16.mxu0 0
        %2902 = vmatpush1.bf16.msra.mxu0 0
        %2903 = vmatprep.subr.bf16.mxu0 0
        %2904 = vmatpush1.bf16.msra.mxu0 0
        %2905 = vmatprep.subr.bf16.mxu0 0
        %2906 = vmatpush1.bf16.msra.mxu0 0
        %2907 = vmatprep.subr.bf16.mxu0 0
        %2908 = vmatpush1.bf16.msra.mxu0 0
        %2909 = vmatprep.subr.bf16.mxu0 0
        %2910 = vmatpush1.bf16.msra.mxu0 0
        %2911 = vmatprep.subr.bf16.mxu0 0
        %2912 = vmatpush1.bf16.msra.mxu0 0
        %2913 = vmatprep.mubr.bf16.mxu0 0
        %2914 = vmatmul.mubr.bf16.gmra.mrb[0].mxu0 %v2772
        %v2915 = vpop.f32.mrb[0].mxu0
        %v2916 = vadd.f32 %v2794, %v2915
        %v2917 = vpop.f32.mrb[0].mxu0
        %v2918 = vadd.f32 %v2798, %v2917
        %v2919 = vpop.f32.mrb[0].mxu0
        %v2920 = vadd.f32 %v2794, %v2919
        %v2921 = vpop.f32.mrb[0].mxu0
        %v2922 = vadd.f32 %v2798, %v2921
        %2923 = vdwg.mxu0
        %v2924 = vmax.f32 %v2916, 0.0
        %v2925 = vmax.f32 %v2918, 0.0
        %v2926 = vmax.f32 %v2920, 0.0
        %v2927 = vmax.f32 %v2922, 0.0
        %v2928 = vpack.c.bf16 %v2926, %v2924
        %v2929 = vpack.c.bf16 %v2927, %v2925
        %v2930 = vld [vmem:[%s451] sm:$0xf]
        %v2931 = vld [vmem:[%s451 + $0x4] sm:$0xf]
        %v2932 = vld [vmem:[%s451 + $0x8] sm:$0xf]
        %v2933 = vld [vmem:[%s451 + $0xc] sm:$0xf]
        %v2934 = vld [vmem:[%s451 + $0x10] sm:$0xf]
        %v2935 = vld [vmem:[%s451 + $0x14] sm:$0xf]
        %v2936 = vld [vmem:[%s451 + $0x18] sm:$0xf]
        %v2937 = vld [vmem:[%s451 + $0x1c] sm:$0xf]
        %v2938 = vld [vmem:[%s451 + $0x20] sm:$0xf]
        %v2939 = vld [vmem:[%s451 + $0x24] sm:$0xf]
        %v2940 = vld [vmem:[%s451 + $0x28] sm:$0xf]
        %v2941 = vld [vmem:[%s451 + $0x2c] sm:$0xf]
        %v2942 = vld [vmem:[%s451 + $0x30] sm:$0xf]
        %v2943 = vld [vmem:[%s451 + $0x34] sm:$0xf]
        %v2944 = vld [vmem:[%s451 + $0x38] sm:$0xf]
        %v2945 = vld [vmem:[%s451 + $0x3c] sm:$0xf]
        %v2946 = vld [vmem:[%s451 + $0x40] sm:$0xf]
        %v2947 = vld [vmem:[%s451 + $0x44] sm:$0xf]
        %v2948 = vld [vmem:[%s451 + $0x48] sm:$0xf]
        %v2949 = vld [vmem:[%s451 + $0x4c] sm:$0xf]
        %v2950 = vld [vmem:[%s451 + $0x50] sm:$0xf]
        %v2951 = vld [vmem:[%s451 + $0x54] sm:$0xf]
        %v2952 = vld [vmem:[%s451 + $0x58] sm:$0xf]
        %v2953 = vld [vmem:[%s451 + $0x5c] sm:$0xf]
        %v2954 = vld [vmem:[%s451 + $0x60] sm:$0xf]
        %v2955 = vld [vmem:[%s451 + $0x64] sm:$0xf]
        %v2956 = vld [vmem:[%s451 + $0x68] sm:$0xf]
        %v2957 = vld [vmem:[%s451 + $0x6c] sm:$0xf]
        %v2958 = vld [vmem:[%s451 + $0x70] sm:$0xf]
        %v2959 = vld [vmem:[%s451 + $0x74] sm:$0xf]
        %v2960 = vld [vmem:[%s451 + $0x78] sm:$0xf]
        %v2961 = vld [vmem:[%s451 + $0x7c] sm:$0xf]
        %v2962 = vld [vmem:[%s433 + $0x10] sm:$0x1]
        %v2964 = vlaneseq
        %v2965 = vshrl.u32 %v2964, 7
        %v2966 = vsub.s32 0, %v2965
        %v2967 = vrot.slane %v2962, %v2966
        %v3001 = vunpack.c.l.b16 %v2930
        %v3002 = vunpack.c.l.b16 %v2931
        %v3003 = vunpack.c.l.b16 %v2932
        %v3004 = vunpack.c.l.b16 %v2933
        %v3005 = vunpack.c.l.b16 %v2934
        %v3006 = vunpack.c.l.b16 %v2935
        %v3007 = vunpack.c.l.b16 %v2936
        %v3008 = vunpack.c.l.b16 %v2937
        %v3009 = vunpack.c.l.b16 %v2938
        %v3010 = vunpack.c.l.b16 %v2939
        %v3011 = vunpack.c.l.b16 %v2940
        %v3012 = vunpack.c.l.b16 %v2941
        %v3013 = vunpack.c.l.b16 %v2942
        %v3014 = vunpack.c.l.b16 %v2943
        %v3015 = vunpack.c.l.b16 %v2944
        %v3016 = vunpack.c.l.b16 %v2945
        %v3017 = vunpack.c.l.b16 %v2946
        %v3018 = vunpack.c.l.b16 %v2947
        %v3019 = vunpack.c.l.b16 %v2948
        %v3020 = vunpack.c.l.b16 %v2949
        %v3021 = vunpack.c.l.b16 %v2950
        %v3022 = vunpack.c.l.b16 %v2951
        %v3023 = vunpack.c.l.b16 %v2952
        %v3024 = vunpack.c.l.b16 %v2953
        %v3025 = vunpack.c.l.b16 %v2954
        %v3026 = vunpack.c.l.b16 %v2955
        %v3027 = vunpack.c.l.b16 %v2956
        %v3028 = vunpack.c.l.b16 %v2957
        %v3029 = vunpack.c.l.b16 %v2958
        %v3030 = vunpack.c.l.b16 %v2959
        %v3031 = vunpack.c.l.b16 %v2960
        %v3032 = vunpack.c.l.b16 %v2961
        %v3033 = vpack.c.b16 %v3002, %v3001
        %v3034 = vpack.c.b16 %v3004, %v3003
        %v3035 = vpack.c.b16 %v3006, %v3005
        %v3036 = vpack.c.b16 %v3008, %v3007
        %v3037 = vpack.c.b16 %v3010, %v3009
        %v3038 = vpack.c.b16 %v3012, %v3011
        %v3039 = vpack.c.b16 %v3014, %v3013
        %v3040 = vpack.c.b16 %v3016, %v3015
        %v3041 = vpack.c.b16 %v3018, %v3017
        %v3042 = vpack.c.b16 %v3020, %v3019
        %v3043 = vpack.c.b16 %v3022, %v3021
        %v3044 = vpack.c.b16 %v3024, %v3023
        %v3045 = vpack.c.b16 %v3026, %v3025
        %v3046 = vpack.c.b16 %v3028, %v3027
        %v3047 = vpack.c.b16 %v3030, %v3029
        %v3048 = vpack.c.b16 %v3032, %v3031
        %3065 = vmatprep.subr.bf16.mxu0 0
        %3066 = vmatpush1.bf16.msra.mxu0 %v3033
        %3067 = vmatprep.subr.bf16.mxu0 0
        %3068 = vmatpush1.bf16.msra.mxu0 %v3034
        %3069 = vmatprep.subr.bf16.mxu0 0
        %3070 = vmatpush1.bf16.msra.mxu0 %v3035
        %3071 = vmatprep.subr.bf16.mxu0 0
        %3072 = vmatpush1.bf16.msra.mxu0 %v3036
        %3073 = vmatprep.subr.bf16.mxu0 0
        %3074 = vmatpush1.bf16.msra.mxu0 %v3037
        %3075 = vmatprep.subr.bf16.mxu0 0
        %3076 = vmatpush1.bf16.msra.mxu0 %v3038
        %3077 = vmatprep.subr.bf16.mxu0 0
        %3078 = vmatpush1.bf16.msra.mxu0 %v3039
        %3079 = vmatprep.subr.bf16.mxu0 0
        %3080 = vmatpush1.bf16.msra.mxu0 %v3040
        %3081 = vmatprep.subr.bf16.mxu0 0
        %3082 = vmatpush1.bf16.msra.mxu0 %v3041
        %3083 = vmatprep.subr.bf16.mxu0 0
        %3084 = vmatpush1.bf16.msra.mxu0 %v3042
        %3085 = vmatprep.subr.bf16.mxu0 0
        %3086 = vmatpush1.bf16.msra.mxu0 %v3043
        %3087 = vmatprep.subr.bf16.mxu0 0
        %3088 = vmatpush1.bf16.msra.mxu0 %v3044
        %3089 = vmatprep.subr.bf16.mxu0 0
        %3090 = vmatpush1.bf16.msra.mxu0 %v3045
        %3091 = vmatprep.subr.bf16.mxu0 0
        %3092 = vmatpush1.bf16.msra.mxu0 %v3046
        %3093 = vmatprep.subr.bf16.mxu0 0
        %3094 = vmatpush1.bf16.msra.mxu0 %v3047
        %3095 = vmatprep.subr.bf16.mxu0 0
        %3096 = vmatpush1.bf16.msra.mxu0 %v3048
        %3097 = vmatprep.mubr.bf16.mxu0 %v2929
        %3098 = vmatmul.mubr.bf16.gmra.mrb[0].mxu0 %v2928
        %v3099 = vpop.f32.mrb[0].mxu0
        %v3100 = vadd.f32 %v2967, %v3099
        %v3101 = vpop.f32.mrb[0].mxu0
        %v3102 = vpop.f32.mrb[0].mxu0
        %v3103 = vadd.f32 %v2967, %v3102
        %v3104 = vpop.f32.mrb[0].mxu0
        %3105 = vdwg.mxu0
        %v3106 = vadd.f32 %v2730, %v3100
        %v3107 = vadd.f32 %v2731, %v3103
        %3108 = vst [vmem:[#allocation2] sm:$0xff] %v3106
        %3109 = vst [vmem:[#allocation2 + $0x8] sm:$0xff] %v3107
        %p3110 = scmp.eq.s32.totalorder %s36, 1
        // Predicated region
        $region77: #{decoder_forward.1} parent=51 // pred_check
          %p3111 = pneg %p3110
        $region78: #{decoder_forward.1} parent=51 // pred_check_branch
          %3113 = sbr.rel (%p3111) target = $region80
        $region79: #{decoder_forward.1} parent=51 // pred_region
          %v3114 = vld [vmem:[%s7] sm:$0x1]
          %v3115 = vld [vmem:[%s7 + $0x1] sm:$0x1]
          %3116 = vadd.xlane.f32.xlu0 %v3106
          %v3117 = vpop.xlane.xlu0 %3116
          %3118 = vadd.xlane.f32.xlu0 %v3107
          %v3119 = vpop.xlane.xlu0 %3118
          %v3120 = vmul.f32 %v3117, %v563
          %v3121 = vmul.f32 %v3119, %v563
          %v3122 = vsub.f32 %v3106, %v3120
          %v3123 = vsub.f32 %v3107, %v3121
          %v3124 = vmul.f32 %v3122, %v3122
          %v3125 = vmul.f32 %v3123, %v3123
          %3126 = vadd.xlane.f32.xlu0 %v3124
          %v3127 = vpop.xlane.xlu0 %3126
          %3128 = vadd.xlane.f32.xlu0 %v3125
          %v3129 = vpop.xlane.xlu0 %3128
          %v3130 = vmul.f32 %v3127, %v563
          %v3131 = vmul.f32 %v3129, %v563
          %v3132 = vadd.f32 %v3130, 1e-05
          %v3133 = vadd.f32 %v3131, 1e-05
          %v3134 = vrsqrt.pop %v3132
          %v3135 = vrsqrt.pop %v3133
          %v3136 = vmul.f32 %v3122, %v3134
          %v3137 = vmul.f32 %v3123, %v3135
          %v3138 = vlaneseq
          %v3139 = vshrl.u32 %v3138, 7
          %v3140 = vsub.s32 0, %v3139
          %v3141 = vrot.slane %v3114, %v3140
          %v3142 = vmul.f32 %v3136, %v3141
          %v3143 = vmul.f32 %v3137, %v3141
          %v3144 = vlaneseq
          %v3145 = vshrl.u32 %v3144, 7
          %v3146 = vsub.s32 0, %v3145
          %v3147 = vrot.slane %v3115, %v3146
          %v3148 = vadd.f32 %v3142, %v3147
          %v3149 = vadd.f32 %v3143, %v3147
          %3150 = vst [vmem:[%s509] sm:$0xff] %v3148
          %3151 = vst [vmem:[%s509 + $0x8] sm:$0xff] %v3149
        $region80: #{decoder_forward.1} parent=51 // pred_fallthru
          _
        %s3152 = sand.u32 %s254, 1
        %s3153 = scalar_lea.sflag [#allocation5], %s3152
        %s3154 = sand.u32 %s254, 1
        %s3155 = smul.addr %s3154, 16
        %s3156 = scalar_lea.vmem [#allocation12], %s3155
        // Predicated region
        $region81: #{decoder_forward.1} parent=51 // pred_check
          %p3157 = pneg %p264
        $region82: #{decoder_forward.1} parent=51 // pred_check_branch
          %3159 = sbr.rel (%p3157) target = $region84
        $region83: #{decoder_forward.1} parent=51 // pred_region
          %s3161 = ssub.s32 256, 256
          %3162 = vsyncadd %s3153, %s3161
          %s3163 = smul.addr %s35, 2
          %s3164 = smul.addr %s3163, 128
          %s3165 = scalar_lea.hbm %s8, %s3164
          %s3166 = sshll.u32 %s3156, 4
          %s3167 = int_to_ptr.vmem [resolvable:$true] %s3166
          %3172 = dma.vmem_to_hbm [thread:$0]  %s3167, 256, %s3165, %s3153, 128, 128, 8
        $region84: #{decoder_forward.1} parent=51 // pred_fallthru
          _
      $region52: #{decoder_forward.1} parent=5 // pred_fallthru
        _
      %p3173 = scmp.le.s32.totalorder 2, %s26
      // Predicated region
      $region85: #{decoder_forward.1} parent=5 // pred_check
        %p3174 = pneg %p3173
      $region86: #{decoder_forward.1} parent=5 // pred_check_branch
        %3176 = sbr.rel (%p3174) target = $region88
      $region87: #{decoder_forward.1} parent=5 // pred_region
        %s3177 = ssub.s32 %s26, 2
        // Predicated region
        $region89: #{decoder_forward.1} parent=87 // pred_check
          %p3178 = pneg %p270
        $region90: #{decoder_forward.1} parent=87 // pred_check_branch
          %3180 = sbr.rel (%p3178) target = $region92
        $region91: #{decoder_forward.1} parent=87 // pred_region
          %s3181 = sand.u32 %s255, 1
          %s3182 = scalar_lea.sflag [#allocation5], %s3181
          %s3183 = sand.u32 %s255, 1
          %s3184 = smul.addr %s3183, 16
          %s3185 = scalar_lea.vmem [#allocation12], %s3184
          %3186 = dma.done %s3182, 256
        $region92: #{decoder_forward.1} parent=87 // pred_fallthru
          _
      $region88: #{decoder_forward.1} parent=5 // pred_fallthru
        _
    $region6: #{decoder_forward.1} parent=1 // loop_footer
      %s30 = sadd.s32 1, %s26
    $region7: #{decoder_forward.1} parent=1 // loop_footer_branch
      %25 = sbr.rel target = $region3
    $region8: #{decoder_forward.1} parent=1 // loop_exit
      _
    %3187 = vsyncpa [#allocation4], 1
    %s3188 = scalar_lea.sflag [#allocation4], 1
    %3189 = vsyncpa %s3188, 1
    %3190 = vsyncpa [#allocation7], 1
    %s3191 = scalar_lea.sflag [#allocation7], 1
    %3192 = vsyncpa %s3191, 1
    %3193 = vsyncpa [#allocation10], 1
    %s3194 = scalar_lea.sflag [#allocation10], 1
    %3195 = vsyncpa %s3194, 1
    %3196 = vsyncpa [#allocation5], 1
    %s3197 = scalar_lea.sflag [#allocation5], 1
    %3198 = vsyncpa %s3197, 1

</llo_original>
